<compile_context>
chip_gen: v5e
topology: v5e:2x2
jax: 0.10.0
libtpu: 0.0.40
codegen_flags: <defaults>
</compile_context>

<pallas_src>
import jax
import jax.numpy as jnp
from jax.experimental import pallas as pl
from jax.experimental.pallas import tpu as pltpu

BN_EPS = 1e-5


# ----------------------------------------------------------------------------
# Host-side builders for the static matrices (BN already folded into weights)
# ----------------------------------------------------------------------------
def _row_sel(h_out, h_in, shift, stride):
    """(h_out, h_in) 0/1: M[i, r] = 1 iff r == stride*i + shift (zero-pad via OOB)."""
    i = jnp.arange(h_out)[:, None]
    r = jnp.arange(h_in)[None, :]
    return (r == stride * i + shift).astype(jnp.float32)


def _col_sel(w_in, w_out, shift, stride):
    """(w_in, w_out) 0/1: M[r, j] = 1 iff r == stride*j + shift."""
    r = jnp.arange(w_in)[:, None]
    j = jnp.arange(w_out)[None, :]
    return (r == stride * j + shift).astype(jnp.float32)


def _up_mat(n_out, n_in):
    """(n_out, n_in) 1-D bilinear weights, align_corners=True (hat function)."""
    i = jnp.arange(n_out, dtype=jnp.float32)[:, None]
    j = jnp.arange(n_in, dtype=jnp.float32)[None, :]
    s = float(n_in - 1) / float(n_out - 1) if n_out > 1 else 0.0
    return jnp.maximum(0.0, 1.0 - jnp.abs(i * s - j))


def _sconv_mats(w2d, h_in, w_in, stride, pad):
    """Single-channel conv -> (k, h_out, h_in) weight-banded row mats + (k, w_in, w_out) 0/1 col mats."""
    k = w2d.shape[0]
    h_out = (h_in + 2 * pad - k) // stride + 1
    w_out = (w_in + 2 * pad - k) // stride + 1
    rsel = jnp.stack([_row_sel(h_out, h_in, di - pad, stride) for di in range(k)])
    rw = jnp.einsum("de,dhi->ehi", w2d, rsel)            # RW[dj] = sum_di w[di,dj]*R_di
    cs = jnp.stack([_col_sel(w_in, w_out, dj - pad, stride) for dj in range(k)])
    return rw, cs, h_out, w_out


def _down1_mats(w_c77, H, W):
    """down1 (C->1, 7x7, s2, p3): stacked large-K row matrix + 7 0/1 col mats."""
    C = w_c77.shape[0]
    H2 = (H + 6 - 7) // 2 + 1
    W2 = (W + 6 - 7) // 2 + 1
    rsel = jnp.stack([_row_sel(H2, H, di - 3, 2) for di in range(7)])     # (7, H2, H)
    rw1 = jnp.einsum("cde,dhi->echi", w_c77, rsel)                        # (dj, C, H2, H)
    rw1 = rw1.transpose(0, 2, 1, 3).reshape(7 * H2, C * H)                # (7*H2, C*H)
    cs1 = jnp.stack([_col_sel(W, W2, dj - 3, 2) for dj in range(7)])      # (7, W, W2)
    return rw1, cs1, H2, W2


def _fold_bn(p):
    inv_std = 1.0 / jnp.sqrt(p["var"] + BN_EPS)
    scale = p["gamma"] * inv_std
    bias = p["beta"] - p["mean"] * scale
    w = p["w"] * scale[:, None, None, None]
    return w, bias


def _const_map(rank):
    return lambda b, _r=rank: (0,) * _r


def _vmem_limit(need_bytes):
    return int(min(max(32 * 1024 * 1024, 2 * need_bytes), 64 * 1024 * 1024))


# ----------------------------------------------------------------------------
# Kernel 1: full attention pyramid + in-kernel global average pool
# ----------------------------------------------------------------------------
def _make_pyramid_kernel(C, H, W, H2, W2):
    f32 = jnp.float32

    def kernel(x_ref, rw1, cs1, rwd2, csd2, rwd3a, csd3a, rwd3b, csd3b,
               rwc2, csc2, rwc1, csc1, la, ra, lb, rb, lc, rc,
               b_ref, xm_ref, pool_ref):

        def sconv(xp, rw_ref, cs_ref, bias):
            k = rw_ref.shape[0]
            h_out = rw_ref.shape[1]
            w_out = cs_ref.shape[2]
            acc = jnp.zeros((h_out, w_out), f32)
            for d in range(k):                                   # all operands precomputed
                t = jnp.dot(rw_ref[d], xp, preferred_element_type=f32)
                acc = acc + jnp.dot(t, cs_ref[d], preferred_element_type=f32)
            return jnp.maximum(acc + bias, 0.0)

        def up(v, l_ref, r_ref):                                 # align_corners bilinear = 2 matmuls
            t = jnp.dot(l_ref[...], v, preferred_element_type=f32)
            return jnp.dot(t, r_ref[...], preferred_element_type=f32)

        x = x_ref[0]                                             # (C, H, W), resident in VMEM

        # AdaptiveAvgPool2d(1) for branch1, reusing the resident block (no extra HBM pass).
        psum = jnp.sum(x, axis=2)                                # (C, H)
        pool_ref[0] = jnp.sum(psum, axis=1, keepdims=True) * (1.0 / (H * W))   # (C, 1)

        # down1: 7x7 / s2 / p3 over all C channels as ONE large-K GEMM + 7 tiny col matmuls.
        xflat = x.reshape(C * H, W)                              # free NCHW reshape
        part = jnp.dot(rw1[...], xflat, preferred_element_type=f32)           # (7*H2, W)
        acc = jnp.zeros((H2, W2), f32)
        for d in range(7):
            acc = acc + jnp.dot(part[d * H2:(d + 1) * H2, :], cs1[d],
                                preferred_element_type=f32)
        x1 = jnp.maximum(acc + b_ref[0], 0.0)                    # (H/2, W/2)

        x2 = sconv(x1, rwd2, csd2, b_ref[1])                     # (H/4, W/4)  down2 5x5 s2
        x3 = sconv(x2, rwd3a, csd3a, b_ref[2])                   # (H/8, W/8)  down3 3x3 s2
        x3 = sconv(x3, rwd3b, csd3b, b_ref[3])                   # (H/8, W/8)  down3 3x3 s1

        xm = sconv(x2, rwc2, csc2, b_ref[4]) + up(x3, la, ra)    # conv2 + up(x3)   (H/4, W/4)
        xm = up(xm, lb, rb) + sconv(x1, rwc1, csc1, b_ref[5])    # up + conv1       (H/2, W/2)
        xm_ref[0] = up(xm, lc, rc)                               # final x2 upsample (H, W)

    return kernel


def pyramid_attention(x, mats, bvec, H2, W2):
    """x: (B, C, H, W). Returns (attention map (B, H, W), pooled (B, C, 1))."""
    B, C, H, W = x.shape
    kernel = _make_pyramid_kernel(C, H, W, H2, W2)
    mat_specs = [pl.BlockSpec(m.shape, _const_map(m.ndim)) for m in mats]
    mat_bytes = sum(int(m.size) * m.dtype.itemsize for m in mats)
    need = 2 * C * H * W * 4 + mat_bytes + 2 * (H * W * 4 + C * 4) + 64
    return pl.pallas_call(
        kernel,
        out_shape=(jax.ShapeDtypeStruct((B, H, W), jnp.float32),
                   jax.ShapeDtypeStruct((B, C, 1), jnp.float32)),
        grid=(B,),
        in_specs=[pl.BlockSpec((1, C, H, W), lambda b: (b, 0, 0, 0))]
                 + mat_specs
                 + [pl.BlockSpec(memory_space=pltpu.MemorySpace.SMEM)],   # 6 bias scalars only
        out_specs=(pl.BlockSpec((1, H, W), lambda b: (b, 0, 0)),
                   pl.BlockSpec((1, C, 1), lambda b: (b, 0, 0))),
        compiler_params=pltpu.CompilerParams(
            dimension_semantics=("parallel",),
            vmem_limit_bytes=_vmem_limit(need)),
    )(x, *mats, bvec)


# ----------------------------------------------------------------------------
# Kernel 2: fused  mid 1x1 ConvBnRelu (bf16 MXU)  +  (xm * mid + b1)  epilogue
# ----------------------------------------------------------------------------
def _fused_mid_kernel(x_ref, xm_ref, b1_ref, wm_ref, bm_ref, o_ref):
    xb = x_ref[0].astype(jnp.bfloat16)                           # (C, thw) bf16 operand
    mid = jnp.dot(wm_ref[...], xb, preferred_element_type=jnp.float32) + bm_ref[...]
    mid = jnp.maximum(mid, 0.0)                                  # (O, thw)
    o_ref[0] = mid * xm_ref[0] + b1_ref[0]                       # lane-dense store


def _pick_thw(HW, C, O, budget_bytes=12 << 20):
    """Largest lane-dense HW tile whose double-buffered working set fits the budget."""
    divs = [c for c in (2048, 1024, 512, 256, 128) if HW % c == 0]
    if not divs:
        return HW
    for cand in divs:
        if 2 * (C + O + 1) * cand * 4 <= budget_bytes:
            return cand
    return divs[-1]


def fused_mid_epilogue(x2d, xm2d, b1, wm_bf16, bm):
    B, C, HW = x2d.shape
    O = wm_bf16.shape[0]
    thw = _pick_thw(HW, C, O)
    need = 2 * (C + 1 + O) * thw * 4 + 2 * O * 4 + O * C * 2 + O * 4
    return pl.pallas_call(
        _fused_mid_kernel,
        out_shape=jax.ShapeDtypeStruct((B, O, HW), jnp.float32),
        grid=(B, HW // thw),
        in_specs=[
            pl.BlockSpec((1, C, thw), lambda b, m: (b, 0, m)),
            pl.BlockSpec((1, 1, thw), lambda b, m: (b, 0, m)),
            pl.BlockSpec((1, O, 1), lambda b, m: (b, 0, 0)),     # precomputed branch1
            pl.BlockSpec((O, C), lambda b, m: (0, 0)),           # folded mid weights (bf16)
            pl.BlockSpec((O, 1), lambda b, m: (0, 0)),           # folded mid bias (f32)
        ],
        out_specs=pl.BlockSpec((1, O, thw), lambda b, m: (b, 0, m)),
        compiler_params=pltpu.CompilerParams(
            dimension_semantics=("parallel", "parallel"),
            vmem_limit_bytes=_vmem_limit(need)),
    )(x2d, xm2d, b1, wm_bf16, bm)


# ----------------------------------------------------------------------------
# Module forward (eval-mode BN folded on the host)
# ----------------------------------------------------------------------------
def fpa_module2(x, params):
    B, C, H, W = x.shape
    assert H % 8 == 0 and W % 8 == 0, "FPA pyramid expects spatial dims divisible by 8"

    wm4, bm = _fold_bn(params["mid"])                    # (O, C, 1, 1), (O,)
    wb14, bb1 = _fold_bn(params["branch1"])
    O = wm4.shape[0]
    wm = wm4[:, :, 0, 0]
    wb1 = wb14[:, :, 0, 0]

    wd1, bd1 = _fold_bn(params["down1"])                 # (1, C, 7, 7)
    wd2, bd2 = _fold_bn(params["down2"])
    wd3a, bd3a = _fold_bn(params["down3a"])
    wd3b, bd3b = _fold_bn(params["down3b"])
    wc2, bc2 = _fold_bn(params["conv2"])
    wc1, bc1 = _fold_bn(params["conv1"])

    # Host-precomputed static matrices (weights folded in; built once, DMA'd once).
    rw1, cs1, H2, W2 = _down1_mats(wd1[0], H, W)
    rwd2, csd2, H4, W4 = _sconv_mats(wd2[0, 0], H2, W2, 2, 2)
    rwd3a, csd3a, H8, W8 = _sconv_mats(wd3a[0, 0], H4, W4, 2, 1)
    rwd3b, csd3b, _, _ = _sconv_mats(wd3b[0, 0], H8, W8, 1, 1)
    rwc2, csc2, _, _ = _sconv_mats(wc2[0, 0], H4, W4, 1, 2)
    rwc1, csc1, _, _ = _sconv_mats(wc1[0, 0], H2, W2, 1, 3)
    la, ra = _up_mat(H4, H8), _up_mat(W4, W8).T
    lb, rb = _up_mat(H2, H4), _up_mat(W2, W4).T
    lc, rc = _up_mat(H, H2), _up_mat(W, W2).T

    mats = (rw1, cs1, rwd2, csd2, rwd3a, csd3a, rwd3b, csd3b,
            rwc2, csc2, rwc1, csc1, la, ra, lb, rb, lc, rc)
    bvec = jnp.concatenate([bd1, bd2, bd3a, bd3b, bc2, bc1])     # (6,)

    # Kernel 1: pyramid (all intermediates on-chip) + in-kernel global pool.
    xm, pooled = pyramid_attention(x, mats, bvec, H2, W2)        # (B,H,W), (B,C,1)

    # branch1 once per batch: relu(Wb1 @ pooled + b); align_corners upsample of 1x1 = broadcast.
    b1 = jnp.maximum(jnp.einsum("oc,bcx->box", wb1, pooled)
                     + bb1[None, :, None], 0.0)                  # (B, O, 1)

    # Kernel 2: fused mid conv (bf16 MXU) + final multiply-add epilogue, lane-dense tiles.
    x2d = x.reshape(B, C, H * W)                                 # free NCHW reshape
    xm2d = xm.reshape(B, 1, H * W)
    out = fused_mid_epilogue(x2d, xm2d, b1, wm.astype(jnp.bfloat16), bm.reshape(O, 1))
    return out.reshape(B, O, H, W)


# ----------------------------------------------------------------------------
# Deterministic synthetic parameters (conv bias=False, BN in eval mode)
# ----------------------------------------------------------------------------
def init_conv_bn(key, out_ch, in_ch, k):
    kw_, kg, kb, km, kv = jax.random.split(key, 5)
    fan_in = in_ch * k * k
    return dict(
        w=jax.random.normal(kw_, (out_ch, in_ch, k, k), jnp.float32) / jnp.sqrt(fan_in),
        gamma=jax.random.uniform(kg, (out_ch,), jnp.float32, 0.5, 1.5),
        beta=jax.random.normal(kb, (out_ch,), jnp.float32) * 0.1,
        mean=jax.random.normal(km, (out_ch,), jnp.float32) * 0.1,
        var=jax.random.uniform(kv, (out_ch,), jnp.float32, 0.5, 1.5),
    )


def init_fpa_params(key, in_ch, out_ch):
    ks = jax.random.split(key, 8)
    return dict(
        branch1=init_conv_bn(ks[0], out_ch, in_ch, 1),
        mid=init_conv_bn(ks[1], out_ch, in_ch, 1),
        down1=init_conv_bn(ks[2], 1, in_ch, 7),
        down2=init_conv_bn(ks[3], 1, 1, 5),
        down3a=init_conv_bn(ks[4], 1, 1, 3),
        down3b=init_conv_bn(ks[5], 1, 1, 3),
        conv2=init_conv_bn(ks[6], 1, 1, 5),
        conv1=init_conv_bn(ks[7], 1, 1, 7),
    )


if __name__ == "__main__":
    B, IN_CH, OUT_CH, H, W = 2, 4, 8, 16, 16
    key = jax.random.PRNGKey(0)
    kx, kp = jax.random.split(key)
    x = jax.random.normal(kx, (B, IN_CH, H, W), jnp.float32)
    params = init_fpa_params(kp, IN_CH, OUT_CH)

    out = jax.jit(fpa_module2)(x, params)
    out = jax.block_until_ready(out)
    assert out.shape == (B, OUT_CH, H, W), out.shape
    assert bool(jnp.all(jnp.isfinite(out)))
    print("KERNEL_OK")
</pallas_src>

<mosaic_0001>
module attributes {stable_mosaic.version = 11 : i64} {
  func.func @kernel(%arg0: i32, %arg1: memref<1x4x16x16xf32, #tpu.memory_space<vmem>>, %arg2: memref<56x64xf32, #tpu.memory_space<vmem>>, %arg3: memref<7x16x8xf32, #tpu.memory_space<vmem>>, %arg4: memref<5x4x8xf32, #tpu.memory_space<vmem>>, %arg5: memref<5x8x4xf32, #tpu.memory_space<vmem>>, %arg6: memref<3x2x4xf32, #tpu.memory_space<vmem>>, %arg7: memref<3x4x2xf32, #tpu.memory_space<vmem>>, %arg8: memref<3x2x2xf32, #tpu.memory_space<vmem>>, %arg9: memref<3x2x2xf32, #tpu.memory_space<vmem>>, %arg10: memref<5x4x4xf32, #tpu.memory_space<vmem>>, %arg11: memref<5x4x4xf32, #tpu.memory_space<vmem>>, %arg12: memref<7x8x8xf32, #tpu.memory_space<vmem>>, %arg13: memref<7x8x8xf32, #tpu.memory_space<vmem>>, %arg14: memref<4x2xf32, #tpu.memory_space<vmem>>, %arg15: memref<2x4xf32, #tpu.memory_space<vmem>>, %arg16: memref<8x4xf32, #tpu.memory_space<vmem>>, %arg17: memref<4x8xf32, #tpu.memory_space<vmem>>, %arg18: memref<16x8xf32, #tpu.memory_space<vmem>>, %arg19: memref<8x16xf32, #tpu.memory_space<vmem>>, %arg20: memref<6xf32, #tpu.memory_space<smem>>, %arg21: memref<1x16x16xf32, #tpu.memory_space<vmem>>, %arg22: memref<1x4x1xf32, #tpu.memory_space<vmem>>) attributes {dimension_semantics = [#tpu.dimension_semantics<parallel>], iteration_bounds = array<i64: 2>, scalar_prefetch = 0 : i64, scratch_operands = 0 : i64, tpu.core_type = #tpu.core_type<tc>, window_params = [{transform_indices = @transform_0, window_bounds = array<i64: 1, 4, 16, 16>}, {pipeline_mode = #tpu.pipeline_mode<synchronous>, transform_indices = @transform_1, window_bounds = array<i64: 56, 64>}, {pipeline_mode = #tpu.pipeline_mode<synchronous>, transform_indices = @transform_2, window_bounds = array<i64: 7, 16, 8>}, {pipeline_mode = #tpu.pipeline_mode<synchronous>, transform_indices = @transform_3, window_bounds = array<i64: 5, 4, 8>}, {pipeline_mode = #tpu.pipeline_mode<synchronous>, transform_indices = @transform_4, window_bounds = array<i64: 5, 8, 4>}, {pipeline_mode = #tpu.pipeline_mode<synchronous>, transform_indices = @transform_5, window_bounds = array<i64: 3, 2, 4>}, {pipeline_mode = #tpu.pipeline_mode<synchronous>, transform_indices = @transform_6, window_bounds = array<i64: 3, 4, 2>}, {pipeline_mode = #tpu.pipeline_mode<synchronous>, transform_indices = @transform_7, window_bounds = array<i64: 3, 2, 2>}, {pipeline_mode = #tpu.pipeline_mode<synchronous>, transform_indices = @transform_8, window_bounds = array<i64: 3, 2, 2>}, {pipeline_mode = #tpu.pipeline_mode<synchronous>, transform_indices = @transform_9, window_bounds = array<i64: 5, 4, 4>}, {pipeline_mode = #tpu.pipeline_mode<synchronous>, transform_indices = @transform_10, window_bounds = array<i64: 5, 4, 4>}, {pipeline_mode = #tpu.pipeline_mode<synchronous>, transform_indices = @transform_11, window_bounds = array<i64: 7, 8, 8>}, {pipeline_mode = #tpu.pipeline_mode<synchronous>, transform_indices = @transform_12, window_bounds = array<i64: 7, 8, 8>}, {pipeline_mode = #tpu.pipeline_mode<synchronous>, transform_indices = @transform_13, window_bounds = array<i64: 4, 2>}, {pipeline_mode = #tpu.pipeline_mode<synchronous>, transform_indices = @transform_14, window_bounds = array<i64: 2, 4>}, {pipeline_mode = #tpu.pipeline_mode<synchronous>, transform_indices = @transform_15, window_bounds = array<i64: 8, 4>}, {pipeline_mode = #tpu.pipeline_mode<synchronous>, transform_indices = @transform_16, window_bounds = array<i64: 4, 8>}, {pipeline_mode = #tpu.pipeline_mode<synchronous>, transform_indices = @transform_17, window_bounds = array<i64: 16, 8>}, {pipeline_mode = #tpu.pipeline_mode<synchronous>, transform_indices = @transform_18, window_bounds = array<i64: 8, 16>}, {transform_indices = @transform_19, window_bounds = array<i64: 6>}, {transform_indices = @transform_20, window_bounds = array<i64: 1, 16, 16>}, {transform_indices = @transform_21, window_bounds = array<i64: 1, 4, 1>}]} {
    %c0 = arith.constant 0 : index
    %c0_0 = arith.constant 0 : index
    %c0_1 = arith.constant 0 : index
    %c0_2 = arith.constant 0 : index
    %0 = vector.load %arg1[%c0, %c0_0, %c0_1, %c0_2] : memref<1x4x16x16xf32, #tpu.memory_space<vmem>>, vector<1x4x16x16xf32>
    %1 = vector.shape_cast %0 : vector<1x4x16x16xf32> to vector<4x16x16xf32>
    %cst = arith.constant dense<0.000000e+00> : vector<4x16xf32>
    %2 = vector.multi_reduction <add>, %1, %cst [2] : vector<4x16x16xf32> to vector<4x16xf32>
    %cst_3 = arith.constant dense<0.000000e+00> : vector<4xf32>
    %3 = vector.multi_reduction <add>, %2, %cst_3 [1] : vector<4x16xf32> to vector<4xf32>
    %4 = vector.shape_cast %3 : vector<4xf32> to vector<4x1xf32>
    %cst_4 = arith.constant 3.906250e-03 : f32
    %5 = vector.broadcast %cst_4 : f32 to vector<4x1xf32>
    %6 = arith.mulf %4, %5 : vector<4x1xf32>
    %c0_5 = arith.constant 0 : index
    %c0_6 = arith.constant 0 : index
    %c0_7 = arith.constant 0 : index
    %7 = vector.load %arg22[%c0_5, %c0_6, %c0_7] : memref<1x4x1xf32, #tpu.memory_space<vmem>>, vector<1x4x1xf32>
    %8 = vector.shape_cast %7 : vector<1x4x1xf32> to vector<4x1xf32>
    %9 = vector.shape_cast %6 : vector<4x1xf32> to vector<1x4x1xf32>
    tpu.vector_store %arg22[%c0_5, %c0_6, %c0_7], %9 {strides = array<i32>} : memref<1x4x1xf32, #tpu.memory_space<vmem>>, vector<1x4x1xf32>,
    %10 = vector.shape_cast %1 : vector<4x16x16xf32> to vector<64x16xf32>
    %c0_8 = arith.constant 0 : index
    %c0_9 = arith.constant 0 : index
    %11 = vector.load %arg2[%c0_8, %c0_9] : memref<56x64xf32, #tpu.memory_space<vmem>>, vector<56x64xf32>
    %cst_10 = arith.constant dense<0.000000e+00> : vector<56x16xf32>
    %12 = tpu.matmul %11, %10, %cst_10 {dimension_numbers = #tpu.dot_dimension_numbers<[1], [0], [0], [1], [0, 0, 1, 1], [], []>} : vector<56x64xf32>, vector<64x16xf32>, vector<56x16xf32> -> vector<56x16xf32>
    %cst_11 = arith.constant 0.000000e+00 : f32
    %13 = vector.broadcast %cst_11 : f32 to vector<8x8xf32>
    %14 = vector.extract_strided_slice %12 {offsets = [0, 0], sizes = [8, 16], strides = [1, 1]} : vector<56x16xf32> to vector<8x16xf32>
    %c0_12 = arith.constant 0 : index
    %c0_13 = arith.constant 0 : index
    %c0_14 = arith.constant 0 : index
    %15 = vector.load %arg3[%c0_12, %c0_13, %c0_14] : memref<7x16x8xf32, #tpu.memory_space<vmem>>, vector<1x16x8xf32>
    %16 = vector.shape_cast %15 : vector<1x16x8xf32> to vector<16x8xf32>
    %cst_15 = arith.constant dense<0.000000e+00> : vector<8x8xf32>
    %17 = tpu.matmul %14, %16, %cst_15 {dimension_numbers = #tpu.dot_dimension_numbers<[1], [0], [0], [1], [0, 0, 1, 1], [], []>} : vector<8x16xf32>, vector<16x8xf32>, vector<8x8xf32> -> vector<8x8xf32>
    %18 = arith.addf %13, %17 : vector<8x8xf32>
    %19 = vector.extract_strided_slice %12 {offsets = [8, 0], sizes = [8, 16], strides = [1, 1]} : vector<56x16xf32> to vector<8x16xf32>
    %c1 = arith.constant 1 : index
    %c0_16 = arith.constant 0 : index
    %c0_17 = arith.constant 0 : index
    %20 = vector.load %arg3[%c1, %c0_16, %c0_17] : memref<7x16x8xf32, #tpu.memory_space<vmem>>, vector<1x16x8xf32>
    %21 = vector.shape_cast %20 : vector<1x16x8xf32> to vector<16x8xf32>
    %cst_18 = arith.constant dense<0.000000e+00> : vector<8x8xf32>
    %22 = tpu.matmul %19, %21, %cst_18 {dimension_numbers = #tpu.dot_dimension_numbers<[1], [0], [0], [1], [0, 0, 1, 1], [], []>} : vector<8x16xf32>, vector<16x8xf32>, vector<8x8xf32> -> vector<8x8xf32>
    %23 = arith.addf %18, %22 : vector<8x8xf32>
    %24 = vector.extract_strided_slice %12 {offsets = [16, 0], sizes = [8, 16], strides = [1, 1]} : vector<56x16xf32> to vector<8x16xf32>
    %c2 = arith.constant 2 : index
    %c0_19 = arith.constant 0 : index
    %c0_20 = arith.constant 0 : index
    %25 = vector.load %arg3[%c2, %c0_19, %c0_20] : memref<7x16x8xf32, #tpu.memory_space<vmem>>, vector<1x16x8xf32>
    %26 = vector.shape_cast %25 : vector<1x16x8xf32> to vector<16x8xf32>
    %cst_21 = arith.constant dense<0.000000e+00> : vector<8x8xf32>
    %27 = tpu.matmul %24, %26, %cst_21 {dimension_numbers = #tpu.dot_dimension_numbers<[1], [0], [0], [1], [0, 0, 1, 1], [], []>} : vector<8x16xf32>, vector<16x8xf32>, vector<8x8xf32> -> vector<8x8xf32>
    %28 = arith.addf %23, %27 : vector<8x8xf32>
    %29 = vector.extract_strided_slice %12 {offsets = [24, 0], sizes = [8, 16], strides = [1, 1]} : vector<56x16xf32> to vector<8x16xf32>
    %c3 = arith.constant 3 : index
    %c0_22 = arith.constant 0 : index
    %c0_23 = arith.constant 0 : index
    %30 = vector.load %arg3[%c3, %c0_22, %c0_23] : memref<7x16x8xf32, #tpu.memory_space<vmem>>, vector<1x16x8xf32>
    %31 = vector.shape_cast %30 : vector<1x16x8xf32> to vector<16x8xf32>
    %cst_24 = arith.constant dense<0.000000e+00> : vector<8x8xf32>
    %32 = tpu.matmul %29, %31, %cst_24 {dimension_numbers = #tpu.dot_dimension_numbers<[1], [0], [0], [1], [0, 0, 1, 1], [], []>} : vector<8x16xf32>, vector<16x8xf32>, vector<8x8xf32> -> vector<8x8xf32>
    %33 = arith.addf %28, %32 : vector<8x8xf32>
    %34 = vector.extract_strided_slice %12 {offsets = [32, 0], sizes = [8, 16], strides = [1, 1]} : vector<56x16xf32> to vector<8x16xf32>
    %c4 = arith.constant 4 : index
    %c0_25 = arith.constant 0 : index
    %c0_26 = arith.constant 0 : index
    %35 = vector.load %arg3[%c4, %c0_25, %c0_26] : memref<7x16x8xf32, #tpu.memory_space<vmem>>, vector<1x16x8xf32>
    %36 = vector.shape_cast %35 : vector<1x16x8xf32> to vector<16x8xf32>
    %cst_27 = arith.constant dense<0.000000e+00> : vector<8x8xf32>
    %37 = tpu.matmul %34, %36, %cst_27 {dimension_numbers = #tpu.dot_dimension_numbers<[1], [0], [0], [1], [0, 0, 1, 1], [], []>} : vector<8x16xf32>, vector<16x8xf32>, vector<8x8xf32> -> vector<8x8xf32>
    %38 = arith.addf %33, %37 : vector<8x8xf32>
    %39 = vector.extract_strided_slice %12 {offsets = [40, 0], sizes = [8, 16], strides = [1, 1]} : vector<56x16xf32> to vector<8x16xf32>
    %c5 = arith.constant 5 : index
    %c0_28 = arith.constant 0 : index
    %c0_29 = arith.constant 0 : index
    %40 = vector.load %arg3[%c5, %c0_28, %c0_29] : memref<7x16x8xf32, #tpu.memory_space<vmem>>, vector<1x16x8xf32>
    %41 = vector.shape_cast %40 : vector<1x16x8xf32> to vector<16x8xf32>
    %cst_30 = arith.constant dense<0.000000e+00> : vector<8x8xf32>
    %42 = tpu.matmul %39, %41, %cst_30 {dimension_numbers = #tpu.dot_dimension_numbers<[1], [0], [0], [1], [0, 0, 1, 1], [], []>} : vector<8x16xf32>, vector<16x8xf32>, vector<8x8xf32> -> vector<8x8xf32>
    %43 = arith.addf %38, %42 : vector<8x8xf32>
    %44 = vector.extract_strided_slice %12 {offsets = [48, 0], sizes = [8, 16], strides = [1, 1]} : vector<56x16xf32> to vector<8x16xf32>
    %c6 = arith.constant 6 : index
    %c0_31 = arith.constant 0 : index
    %c0_32 = arith.constant 0 : index
    %45 = vector.load %arg3[%c6, %c0_31, %c0_32] : memref<7x16x8xf32, #tpu.memory_space<vmem>>, vector<1x16x8xf32>
    %46 = vector.shape_cast %45 : vector<1x16x8xf32> to vector<16x8xf32>
    %cst_33 = arith.constant dense<0.000000e+00> : vector<8x8xf32>
    %47 = tpu.matmul %44, %46, %cst_33 {dimension_numbers = #tpu.dot_dimension_numbers<[1], [0], [0], [1], [0, 0, 1, 1], [], []>} : vector<8x16xf32>, vector<16x8xf32>, vector<8x8xf32> -> vector<8x8xf32>
    %48 = arith.addf %43, %47 : vector<8x8xf32>
    %c0_34 = arith.constant 0 : index
    %49 = memref.load %arg20[%c0_34] : memref<6xf32, #tpu.memory_space<smem>>
    %50 = vector.broadcast %49 : f32 to vector<8x8xf32>
    %51 = arith.addf %48, %50 : vector<8x8xf32>
    %cst_35 = arith.constant 0.000000e+00 : f32
    %52 = vector.broadcast %cst_35 : f32 to vector<8x8xf32>
    %53 = arith.maximumf %51, %52 : vector<8x8xf32>
    %c1_36 = arith.constant 1 : index
    %54 = memref.load %arg20[%c1_36] : memref<6xf32, #tpu.memory_space<smem>>
    %cst_37 = arith.constant 0.000000e+00 : f32
    %55 = vector.broadcast %cst_37 : f32 to vector<4x4xf32>
    %c0_38 = arith.constant 0 : index
    %c0_39 = arith.constant 0 : index
    %c0_40 = arith.constant 0 : index
    %56 = vector.load %arg4[%c0_38, %c0_39, %c0_40] : memref<5x4x8xf32, #tpu.memory_space<vmem>>, vector<1x4x8xf32>
    %57 = vector.shape_cast %56 : vector<1x4x8xf32> to vector<4x8xf32>
    %cst_41 = arith.constant dense<0.000000e+00> : vector<4x8xf32>
    %58 = tpu.matmul %57, %53, %cst_41 {dimension_numbers = #tpu.dot_dimension_numbers<[1], [0], [0], [1], [0, 0, 1, 1], [], []>} : vector<4x8xf32>, vector<8x8xf32>, vector<4x8xf32> -> vector<4x8xf32>
    %c0_42 = arith.constant 0 : index
    %c0_43 = arith.constant 0 : index
    %c0_44 = arith.constant 0 : index
    %59 = vector.load %arg5[%c0_42, %c0_43, %c0_44] : memref<5x8x4xf32, #tpu.memory_space<vmem>>, vector<1x8x4xf32>
    %60 = vector.shape_cast %59 : vector<1x8x4xf32> to vector<8x4xf32>
    %cst_45 = arith.constant dense<0.000000e+00> : vector<4x4xf32>
    %61 = tpu.matmul %58, %60, %cst_45 {dimension_numbers = #tpu.dot_dimension_numbers<[1], [0], [0], [1], [0, 0, 1, 1], [], []>} : vector<4x8xf32>, vector<8x4xf32>, vector<4x4xf32> -> vector<4x4xf32>
    %62 = arith.addf %55, %61 : vector<4x4xf32>
    %c1_46 = arith.constant 1 : index
    %c0_47 = arith.constant 0 : index
    %c0_48 = arith.constant 0 : index
    %63 = vector.load %arg4[%c1_46, %c0_47, %c0_48] : memref<5x4x8xf32, #tpu.memory_space<vmem>>, vector<1x4x8xf32>
    %64 = vector.shape_cast %63 : vector<1x4x8xf32> to vector<4x8xf32>
    %cst_49 = arith.constant dense<0.000000e+00> : vector<4x8xf32>
    %65 = tpu.matmul %64, %53, %cst_49 {dimension_numbers = #tpu.dot_dimension_numbers<[1], [0], [0], [1], [0, 0, 1, 1], [], []>} : vector<4x8xf32>, vector<8x8xf32>, vector<4x8xf32> -> vector<4x8xf32>
    %c1_50 = arith.constant 1 : index
    %c0_51 = arith.constant 0 : index
    %c0_52 = arith.constant 0 : index
    %66 = vector.load %arg5[%c1_50, %c0_51, %c0_52] : memref<5x8x4xf32, #tpu.memory_space<vmem>>, vector<1x8x4xf32>
    %67 = vector.shape_cast %66 : vector<1x8x4xf32> to vector<8x4xf32>
    %cst_53 = arith.constant dense<0.000000e+00> : vector<4x4xf32>
    %68 = tpu.matmul %65, %67, %cst_53 {dimension_numbers = #tpu.dot_dimension_numbers<[1], [0], [0], [1], [0, 0, 1, 1], [], []>} : vector<4x8xf32>, vector<8x4xf32>, vector<4x4xf32> -> vector<4x4xf32>
    %69 = arith.addf %62, %68 : vector<4x4xf32>
    %c2_54 = arith.constant 2 : index
    %c0_55 = arith.constant 0 : index
    %c0_56 = arith.constant 0 : index
    %70 = vector.load %arg4[%c2_54, %c0_55, %c0_56] : memref<5x4x8xf32, #tpu.memory_space<vmem>>, vector<1x4x8xf32>
    %71 = vector.shape_cast %70 : vector<1x4x8xf32> to vector<4x8xf32>
    %cst_57 = arith.constant dense<0.000000e+00> : vector<4x8xf32>
    %72 = tpu.matmul %71, %53, %cst_57 {dimension_numbers = #tpu.dot_dimension_numbers<[1], [0], [0], [1], [0, 0, 1, 1], [], []>} : vector<4x8xf32>, vector<8x8xf32>, vector<4x8xf32> -> vector<4x8xf32>
    %c2_58 = arith.constant 2 : index
    %c0_59 = arith.constant 0 : index
    %c0_60 = arith.constant 0 : index
    %73 = vector.load %arg5[%c2_58, %c0_59, %c0_60] : memref<5x8x4xf32, #tpu.memory_space<vmem>>, vector<1x8x4xf32>
    %74 = vector.shape_cast %73 : vector<1x8x4xf32> to vector<8x4xf32>
    %cst_61 = arith.constant dense<0.000000e+00> : vector<4x4xf32>
    %75 = tpu.matmul %72, %74, %cst_61 {dimension_numbers = #tpu.dot_dimension_numbers<[1], [0], [0], [1], [0, 0, 1, 1], [], []>} : vector<4x8xf32>, vector<8x4xf32>, vector<4x4xf32> -> vector<4x4xf32>
    %76 = arith.addf %69, %75 : vector<4x4xf32>
    %c3_62 = arith.constant 3 : index
    %c0_63 = arith.constant 0 : index
    %c0_64 = arith.constant 0 : index
    %77 = vector.load %arg4[%c3_62, %c0_63, %c0_64] : memref<5x4x8xf32, #tpu.memory_space<vmem>>, vector<1x4x8xf32>
    %78 = vector.shape_cast %77 : vector<1x4x8xf32> to vector<4x8xf32>
    %cst_65 = arith.constant dense<0.000000e+00> : vector<4x8xf32>
    %79 = tpu.matmul %78, %53, %cst_65 {dimension_numbers = #tpu.dot_dimension_numbers<[1], [0], [0], [1], [0, 0, 1, 1], [], []>} : vector<4x8xf32>, vector<8x8xf32>, vector<4x8xf32> -> vector<4x8xf32>
    %c3_66 = arith.constant 3 : index
    %c0_67 = arith.constant 0 : index
    %c0_68 = arith.constant 0 : index
    %80 = vector.load %arg5[%c3_66, %c0_67, %c0_68] : memref<5x8x4xf32, #tpu.memory_space<vmem>>, vector<1x8x4xf32>
    %81 = vector.shape_cast %80 : vector<1x8x4xf32> to vector<8x4xf32>
    %cst_69 = arith.constant dense<0.000000e+00> : vector<4x4xf32>
    %82 = tpu.matmul %79, %81, %cst_69 {dimension_numbers = #tpu.dot_dimension_numbers<[1], [0], [0], [1], [0, 0, 1, 1], [], []>} : vector<4x8xf32>, vector<8x4xf32>, vector<4x4xf32> -> vector<4x4xf32>
    %83 = arith.addf %76, %82 : vector<4x4xf32>
    %c4_70 = arith.constant 4 : index
    %c0_71 = arith.constant 0 : index
    %c0_72 = arith.constant 0 : index
    %84 = vector.load %arg4[%c4_70, %c0_71, %c0_72] : memref<5x4x8xf32, #tpu.memory_space<vmem>>, vector<1x4x8xf32>
    %85 = vector.shape_cast %84 : vector<1x4x8xf32> to vector<4x8xf32>
    %cst_73 = arith.constant dense<0.000000e+00> : vector<4x8xf32>
    %86 = tpu.matmul %85, %53, %cst_73 {dimension_numbers = #tpu.dot_dimension_numbers<[1], [0], [0], [1], [0, 0, 1, 1], [], []>} : vector<4x8xf32>, vector<8x8xf32>, vector<4x8xf32> -> vector<4x8xf32>
    %c4_74 = arith.constant 4 : index
    %c0_75 = arith.constant 0 : index
    %c0_76 = arith.constant 0 : index
    %87 = vector.load %arg5[%c4_74, %c0_75, %c0_76] : memref<5x8x4xf32, #tpu.memory_space<vmem>>, vector<1x8x4xf32>
    %88 = vector.shape_cast %87 : vector<1x8x4xf32> to vector<8x4xf32>
    %cst_77 = arith.constant dense<0.000000e+00> : vector<4x4xf32>
    %89 = tpu.matmul %86, %88, %cst_77 {dimension_numbers = #tpu.dot_dimension_numbers<[1], [0], [0], [1], [0, 0, 1, 1], [], []>} : vector<4x8xf32>, vector<8x4xf32>, vector<4x4xf32> -> vector<4x4xf32>
    %90 = arith.addf %83, %89 : vector<4x4xf32>
    %91 = vector.broadcast %54 : f32 to vector<4x4xf32>
    %92 = arith.addf %90, %91 : vector<4x4xf32>
    %cst_78 = arith.constant 0.000000e+00 : f32
    %93 = vector.broadcast %cst_78 : f32 to vector<4x4xf32>
    %94 = arith.maximumf %92, %93 : vector<4x4xf32>
    %c2_79 = arith.constant 2 : index
    %95 = memref.load %arg20[%c2_79] : memref<6xf32, #tpu.memory_space<smem>>
    %cst_80 = arith.constant 0.000000e+00 : f32
    %96 = vector.broadcast %cst_80 : f32 to vector<2x2xf32>
    %c0_81 = arith.constant 0 : index
    %c0_82 = arith.constant 0 : index
    %c0_83 = arith.constant 0 : index
    %97 = vector.load %arg6[%c0_81, %c0_82, %c0_83] : memref<3x2x4xf32, #tpu.memory_space<vmem>>, vector<1x2x4xf32>
    %98 = vector.shape_cast %97 : vector<1x2x4xf32> to vector<2x4xf32>
    %cst_84 = arith.constant dense<0.000000e+00> : vector<2x4xf32>
    %99 = tpu.matmul %98, %94, %cst_84 {dimension_numbers = #tpu.dot_dimension_numbers<[1], [0], [0], [1], [0, 0, 1, 1], [], []>} : vector<2x4xf32>, vector<4x4xf32>, vector<2x4xf32> -> vector<2x4xf32>
    %c0_85 = arith.constant 0 : index
    %c0_86 = arith.constant 0 : index
    %c0_87 = arith.constant 0 : index
    %100 = vector.load %arg7[%c0_85, %c0_86, %c0_87] : memref<3x4x2xf32, #tpu.memory_space<vmem>>, vector<1x4x2xf32>
    %101 = vector.shape_cast %100 : vector<1x4x2xf32> to vector<4x2xf32>
    %cst_88 = arith.constant dense<0.000000e+00> : vector<2x2xf32>
    %102 = tpu.matmul %99, %101, %cst_88 {dimension_numbers = #tpu.dot_dimension_numbers<[1], [0], [0], [1], [0, 0, 1, 1], [], []>} : vector<2x4xf32>, vector<4x2xf32>, vector<2x2xf32> -> vector<2x2xf32>
    %103 = arith.addf %96, %102 : vector<2x2xf32>
    %c1_89 = arith.constant 1 : index
    %c0_90 = arith.constant 0 : index
    %c0_91 = arith.constant 0 : index
    %104 = vector.load %arg6[%c1_89, %c0_90, %c0_91] : memref<3x2x4xf32, #tpu.memory_space<vmem>>, vector<1x2x4xf32>
    %105 = vector.shape_cast %104 : vector<1x2x4xf32> to vector<2x4xf32>
    %cst_92 = arith.constant dense<0.000000e+00> : vector<2x4xf32>
    %106 = tpu.matmul %105, %94, %cst_92 {dimension_numbers = #tpu.dot_dimension_numbers<[1], [0], [0], [1], [0, 0, 1, 1], [], []>} : vector<2x4xf32>, vector<4x4xf32>, vector<2x4xf32> -> vector<2x4xf32>
    %c1_93 = arith.constant 1 : index
    %c0_94 = arith.constant 0 : index
    %c0_95 = arith.constant 0 : index
    %107 = vector.load %arg7[%c1_93, %c0_94, %c0_95] : memref<3x4x2xf32, #tpu.memory_space<vmem>>, vector<1x4x2xf32>
    %108 = vector.shape_cast %107 : vector<1x4x2xf32> to vector<4x2xf32>
    %cst_96 = arith.constant dense<0.000000e+00> : vector<2x2xf32>
    %109 = tpu.matmul %106, %108, %cst_96 {dimension_numbers = #tpu.dot_dimension_numbers<[1], [0], [0], [1], [0, 0, 1, 1], [], []>} : vector<2x4xf32>, vector<4x2xf32>, vector<2x2xf32> -> vector<2x2xf32>
    %110 = arith.addf %103, %109 : vector<2x2xf32>
    %c2_97 = arith.constant 2 : index
    %c0_98 = arith.constant 0 : index
    %c0_99 = arith.constant 0 : index
    %111 = vector.load %arg6[%c2_97, %c0_98, %c0_99] : memref<3x2x4xf32, #tpu.memory_space<vmem>>, vector<1x2x4xf32>
    %112 = vector.shape_cast %111 : vector<1x2x4xf32> to vector<2x4xf32>
    %cst_100 = arith.constant dense<0.000000e+00> : vector<2x4xf32>
    %113 = tpu.matmul %112, %94, %cst_100 {dimension_numbers = #tpu.dot_dimension_numbers<[1], [0], [0], [1], [0, 0, 1, 1], [], []>} : vector<2x4xf32>, vector<4x4xf32>, vector<2x4xf32> -> vector<2x4xf32>
    %c2_101 = arith.constant 2 : index
    %c0_102 = arith.constant 0 : index
    %c0_103 = arith.constant 0 : index
    %114 = vector.load %arg7[%c2_101, %c0_102, %c0_103] : memref<3x4x2xf32, #tpu.memory_space<vmem>>, vector<1x4x2xf32>
    %115 = vector.shape_cast %114 : vector<1x4x2xf32> to vector<4x2xf32>
    %cst_104 = arith.constant dense<0.000000e+00> : vector<2x2xf32>
    %116 = tpu.matmul %113, %115, %cst_104 {dimension_numbers = #tpu.dot_dimension_numbers<[1], [0], [0], [1], [0, 0, 1, 1], [], []>} : vector<2x4xf32>, vector<4x2xf32>, vector<2x2xf32> -> vector<2x2xf32>
    %117 = arith.addf %110, %116 : vector<2x2xf32>
    %118 = vector.broadcast %95 : f32 to vector<2x2xf32>
    %119 = arith.addf %117, %118 : vector<2x2xf32>
    %cst_105 = arith.constant 0.000000e+00 : f32
    %120 = vector.broadcast %cst_105 : f32 to vector<2x2xf32>
    %121 = arith.maximumf %119, %120 : vector<2x2xf32>
    %c3_106 = arith.constant 3 : index
    %122 = memref.load %arg20[%c3_106] : memref<6xf32, #tpu.memory_space<smem>>
    %cst_107 = arith.constant 0.000000e+00 : f32
    %123 = vector.broadcast %cst_107 : f32 to vector<2x2xf32>
    %c0_108 = arith.constant 0 : index
    %c0_109 = arith.constant 0 : index
    %c0_110 = arith.constant 0 : index
    %124 = vector.load %arg8[%c0_108, %c0_109, %c0_110] : memref<3x2x2xf32, #tpu.memory_space<vmem>>, vector<1x2x2xf32>
    %125 = vector.shape_cast %124 : vector<1x2x2xf32> to vector<2x2xf32>
    %cst_111 = arith.constant dense<0.000000e+00> : vector<2x2xf32>
    %126 = tpu.matmul %125, %121, %cst_111 {dimension_numbers = #tpu.dot_dimension_numbers<[1], [0], [0], [1], [0, 0, 1, 1], [], []>} : vector<2x2xf32>, vector<2x2xf32>, vector<2x2xf32> -> vector<2x2xf32>
    %c0_112 = arith.constant 0 : index
    %c0_113 = arith.constant 0 : index
    %c0_114 = arith.constant 0 : index
    %127 = vector.load %arg9[%c0_112, %c0_113, %c0_114] : memref<3x2x2xf32, #tpu.memory_space<vmem>>, vector<1x2x2xf32>
    %128 = vector.shape_cast %127 : vector<1x2x2xf32> to vector<2x2xf32>
    %cst_115 = arith.constant dense<0.000000e+00> : vector<2x2xf32>
    %129 = tpu.matmul %126, %128, %cst_115 {dimension_numbers = #tpu.dot_dimension_numbers<[1], [0], [0], [1], [0, 0, 1, 1], [], []>} : vector<2x2xf32>, vector<2x2xf32>, vector<2x2xf32> -> vector<2x2xf32>
    %130 = arith.addf %123, %129 : vector<2x2xf32>
    %c1_116 = arith.constant 1 : index
    %c0_117 = arith.constant 0 : index
    %c0_118 = arith.constant 0 : index
    %131 = vector.load %arg8[%c1_116, %c0_117, %c0_118] : memref<3x2x2xf32, #tpu.memory_space<vmem>>, vector<1x2x2xf32>
    %132 = vector.shape_cast %131 : vector<1x2x2xf32> to vector<2x2xf32>
    %cst_119 = arith.constant dense<0.000000e+00> : vector<2x2xf32>
    %133 = tpu.matmul %132, %121, %cst_119 {dimension_numbers = #tpu.dot_dimension_numbers<[1], [0], [0], [1], [0, 0, 1, 1], [], []>} : vector<2x2xf32>, vector<2x2xf32>, vector<2x2xf32> -> vector<2x2xf32>
    %c1_120 = arith.constant 1 : index
    %c0_121 = arith.constant 0 : index
    %c0_122 = arith.constant 0 : index
    %134 = vector.load %arg9[%c1_120, %c0_121, %c0_122] : memref<3x2x2xf32, #tpu.memory_space<vmem>>, vector<1x2x2xf32>
    %135 = vector.shape_cast %134 : vector<1x2x2xf32> to vector<2x2xf32>
    %cst_123 = arith.constant dense<0.000000e+00> : vector<2x2xf32>
    %136 = tpu.matmul %133, %135, %cst_123 {dimension_numbers = #tpu.dot_dimension_numbers<[1], [0], [0], [1], [0, 0, 1, 1], [], []>} : vector<2x2xf32>, vector<2x2xf32>, vector<2x2xf32> -> vector<2x2xf32>
    %137 = arith.addf %130, %136 : vector<2x2xf32>
    %c2_124 = arith.constant 2 : index
    %c0_125 = arith.constant 0 : index
    %c0_126 = arith.constant 0 : index
    %138 = vector.load %arg8[%c2_124, %c0_125, %c0_126] : memref<3x2x2xf32, #tpu.memory_space<vmem>>, vector<1x2x2xf32>
    %139 = vector.shape_cast %138 : vector<1x2x2xf32> to vector<2x2xf32>
    %cst_127 = arith.constant dense<0.000000e+00> : vector<2x2xf32>
    %140 = tpu.matmul %139, %121, %cst_127 {dimension_numbers = #tpu.dot_dimension_numbers<[1], [0], [0], [1], [0, 0, 1, 1], [], []>} : vector<2x2xf32>, vector<2x2xf32>, vector<2x2xf32> -> vector<2x2xf32>
    %c2_128 = arith.constant 2 : index
    %c0_129 = arith.constant 0 : index
    %c0_130 = arith.constant 0 : index
    %141 = vector.load %arg9[%c2_128, %c0_129, %c0_130] : memref<3x2x2xf32, #tpu.memory_space<vmem>>, vector<1x2x2xf32>
    %142 = vector.shape_cast %141 : vector<1x2x2xf32> to vector<2x2xf32>
    %cst_131 = arith.constant dense<0.000000e+00> : vector<2x2xf32>
    %143 = tpu.matmul %140, %142, %cst_131 {dimension_numbers = #tpu.dot_dimension_numbers<[1], [0], [0], [1], [0, 0, 1, 1], [], []>} : vector<2x2xf32>, vector<2x2xf32>, vector<2x2xf32> -> vector<2x2xf32>
    %144 = arith.addf %137, %143 : vector<2x2xf32>
    %145 = vector.broadcast %122 : f32 to vector<2x2xf32>
    %146 = arith.addf %144, %145 : vector<2x2xf32>
    %cst_132 = arith.constant 0.000000e+00 : f32
    %147 = vector.broadcast %cst_132 : f32 to vector<2x2xf32>
    %148 = arith.maximumf %146, %147 : vector<2x2xf32>
    %c4_133 = arith.constant 4 : index
    %149 = memref.load %arg20[%c4_133] : memref<6xf32, #tpu.memory_space<smem>>
    %cst_134 = arith.constant 0.000000e+00 : f32
    %150 = vector.broadcast %cst_134 : f32 to vector<4x4xf32>
    %c0_135 = arith.constant 0 : index
    %c0_136 = arith.constant 0 : index
    %c0_137 = arith.constant 0 : index
    %151 = vector.load %arg10[%c0_135, %c0_136, %c0_137] : memref<5x4x4xf32, #tpu.memory_space<vmem>>, vector<1x4x4xf32>
    %152 = vector.shape_cast %151 : vector<1x4x4xf32> to vector<4x4xf32>
    %cst_138 = arith.constant dense<0.000000e+00> : vector<4x4xf32>
    %153 = tpu.matmul %152, %94, %cst_138 {dimension_numbers = #tpu.dot_dimension_numbers<[1], [0], [0], [1], [0, 0, 1, 1], [], []>} : vector<4x4xf32>, vector<4x4xf32>, vector<4x4xf32> -> vector<4x4xf32>
    %c0_139 = arith.constant 0 : index
    %c0_140 = arith.constant 0 : index
    %c0_141 = arith.constant 0 : index
    %154 = vector.load %arg11[%c0_139, %c0_140, %c0_141] : memref<5x4x4xf32, #tpu.memory_space<vmem>>, vector<1x4x4xf32>
    %155 = vector.shape_cast %154 : vector<1x4x4xf32> to vector<4x4xf32>
    %cst_142 = arith.constant dense<0.000000e+00> : vector<4x4xf32>
    %156 = tpu.matmul %153, %155, %cst_142 {dimension_numbers = #tpu.dot_dimension_numbers<[1], [0], [0], [1], [0, 0, 1, 1], [], []>} : vector<4x4xf32>, vector<4x4xf32>, vector<4x4xf32> -> vector<4x4xf32>
    %157 = arith.addf %150, %156 : vector<4x4xf32>
    %c1_143 = arith.constant 1 : index
    %c0_144 = arith.constant 0 : index
    %c0_145 = arith.constant 0 : index
    %158 = vector.load %arg10[%c1_143, %c0_144, %c0_145] : memref<5x4x4xf32, #tpu.memory_space<vmem>>, vector<1x4x4xf32>
    %159 = vector.shape_cast %158 : vector<1x4x4xf32> to vector<4x4xf32>
    %cst_146 = arith.constant dense<0.000000e+00> : vector<4x4xf32>
    %160 = tpu.matmul %159, %94, %cst_146 {dimension_numbers = #tpu.dot_dimension_numbers<[1], [0], [0], [1], [0, 0, 1, 1], [], []>} : vector<4x4xf32>, vector<4x4xf32>, vector<4x4xf32> -> vector<4x4xf32>
    %c1_147 = arith.constant 1 : index
    %c0_148 = arith.constant 0 : index
    %c0_149 = arith.constant 0 : index
    %161 = vector.load %arg11[%c1_147, %c0_148, %c0_149] : memref<5x4x4xf32, #tpu.memory_space<vmem>>, vector<1x4x4xf32>
    %162 = vector.shape_cast %161 : vector<1x4x4xf32> to vector<4x4xf32>
    %cst_150 = arith.constant dense<0.000000e+00> : vector<4x4xf32>
    %163 = tpu.matmul %160, %162, %cst_150 {dimension_numbers = #tpu.dot_dimension_numbers<[1], [0], [0], [1], [0, 0, 1, 1], [], []>} : vector<4x4xf32>, vector<4x4xf32>, vector<4x4xf32> -> vector<4x4xf32>
    %164 = arith.addf %157, %163 : vector<4x4xf32>
    %c2_151 = arith.constant 2 : index
    %c0_152 = arith.constant 0 : index
    %c0_153 = arith.constant 0 : index
    %165 = vector.load %arg10[%c2_151, %c0_152, %c0_153] : memref<5x4x4xf32, #tpu.memory_space<vmem>>, vector<1x4x4xf32>
    %166 = vector.shape_cast %165 : vector<1x4x4xf32> to vector<4x4xf32>
    %cst_154 = arith.constant dense<0.000000e+00> : vector<4x4xf32>
    %167 = tpu.matmul %166, %94, %cst_154 {dimension_numbers = #tpu.dot_dimension_numbers<[1], [0], [0], [1], [0, 0, 1, 1], [], []>} : vector<4x4xf32>, vector<4x4xf32>, vector<4x4xf32> -> vector<4x4xf32>
    %c2_155 = arith.constant 2 : index
    %c0_156 = arith.constant 0 : index
    %c0_157 = arith.constant 0 : index
    %168 = vector.load %arg11[%c2_155, %c0_156, %c0_157] : memref<5x4x4xf32, #tpu.memory_space<vmem>>, vector<1x4x4xf32>
    %169 = vector.shape_cast %168 : vector<1x4x4xf32> to vector<4x4xf32>
    %cst_158 = arith.constant dense<0.000000e+00> : vector<4x4xf32>
    %170 = tpu.matmul %167, %169, %cst_158 {dimension_numbers = #tpu.dot_dimension_numbers<[1], [0], [0], [1], [0, 0, 1, 1], [], []>} : vector<4x4xf32>, vector<4x4xf32>, vector<4x4xf32> -> vector<4x4xf32>
    %171 = arith.addf %164, %170 : vector<4x4xf32>
    %c3_159 = arith.constant 3 : index
    %c0_160 = arith.constant 0 : index
    %c0_161 = arith.constant 0 : index
    %172 = vector.load %arg10[%c3_159, %c0_160, %c0_161] : memref<5x4x4xf32, #tpu.memory_space<vmem>>, vector<1x4x4xf32>
    %173 = vector.shape_cast %172 : vector<1x4x4xf32> to vector<4x4xf32>
    %cst_162 = arith.constant dense<0.000000e+00> : vector<4x4xf32>
    %174 = tpu.matmul %173, %94, %cst_162 {dimension_numbers = #tpu.dot_dimension_numbers<[1], [0], [0], [1], [0, 0, 1, 1], [], []>} : vector<4x4xf32>, vector<4x4xf32>, vector<4x4xf32> -> vector<4x4xf32>
    %c3_163 = arith.constant 3 : index
    %c0_164 = arith.constant 0 : index
    %c0_165 = arith.constant 0 : index
    %175 = vector.load %arg11[%c3_163, %c0_164, %c0_165] : memref<5x4x4xf32, #tpu.memory_space<vmem>>, vector<1x4x4xf32>
    %176 = vector.shape_cast %175 : vector<1x4x4xf32> to vector<4x4xf32>
    %cst_166 = arith.constant dense<0.000000e+00> : vector<4x4xf32>
    %177 = tpu.matmul %174, %176, %cst_166 {dimension_numbers = #tpu.dot_dimension_numbers<[1], [0], [0], [1], [0, 0, 1, 1], [], []>} : vector<4x4xf32>, vector<4x4xf32>, vector<4x4xf32> -> vector<4x4xf32>
    %178 = arith.addf %171, %177 : vector<4x4xf32>
    %c4_167 = arith.constant 4 : index
    %c0_168 = arith.constant 0 : index
    %c0_169 = arith.constant 0 : index
    %179 = vector.load %arg10[%c4_167, %c0_168, %c0_169] : memref<5x4x4xf32, #tpu.memory_space<vmem>>, vector<1x4x4xf32>
    %180 = vector.shape_cast %179 : vector<1x4x4xf32> to vector<4x4xf32>
    %cst_170 = arith.constant dense<0.000000e+00> : vector<4x4xf32>
    %181 = tpu.matmul %180, %94, %cst_170 {dimension_numbers = #tpu.dot_dimension_numbers<[1], [0], [0], [1], [0, 0, 1, 1], [], []>} : vector<4x4xf32>, vector<4x4xf32>, vector<4x4xf32> -> vector<4x4xf32>
    %c4_171 = arith.constant 4 : index
    %c0_172 = arith.constant 0 : index
    %c0_173 = arith.constant 0 : index
    %182 = vector.load %arg11[%c4_171, %c0_172, %c0_173] : memref<5x4x4xf32, #tpu.memory_space<vmem>>, vector<1x4x4xf32>
    %183 = vector.shape_cast %182 : vector<1x4x4xf32> to vector<4x4xf32>
    %cst_174 = arith.constant dense<0.000000e+00> : vector<4x4xf32>
    %184 = tpu.matmul %181, %183, %cst_174 {dimension_numbers = #tpu.dot_dimension_numbers<[1], [0], [0], [1], [0, 0, 1, 1], [], []>} : vector<4x4xf32>, vector<4x4xf32>, vector<4x4xf32> -> vector<4x4xf32>
    %185 = arith.addf %178, %184 : vector<4x4xf32>
    %186 = vector.broadcast %149 : f32 to vector<4x4xf32>
    %187 = arith.addf %185, %186 : vector<4x4xf32>
    %cst_175 = arith.constant 0.000000e+00 : f32
    %188 = vector.broadcast %cst_175 : f32 to vector<4x4xf32>
    %189 = arith.maximumf %187, %188 : vector<4x4xf32>
    %c0_176 = arith.constant 0 : index
    %c0_177 = arith.constant 0 : index
    %190 = vector.load %arg14[%c0_176, %c0_177] : memref<4x2xf32, #tpu.memory_space<vmem>>, vector<4x2xf32>
    %cst_178 = arith.constant dense<0.000000e+00> : vector<4x2xf32>
    %191 = tpu.matmul %190, %148, %cst_178 {dimension_numbers = #tpu.dot_dimension_numbers<[1], [0], [0], [1], [0, 0, 1, 1], [], []>} : vector<4x2xf32>, vector<2x2xf32>, vector<4x2xf32> -> vector<4x2xf32>
    %c0_179 = arith.constant 0 : index
    %c0_180 = arith.constant 0 : index
    %192 = vector.load %arg15[%c0_179, %c0_180] : memref<2x4xf32, #tpu.memory_space<vmem>>, vector<2x4xf32>
    %cst_181 = arith.constant dense<0.000000e+00> : vector<4x4xf32>
    %193 = tpu.matmul %191, %192, %cst_181 {dimension_numbers = #tpu.dot_dimension_numbers<[1], [0], [0], [1], [0, 0, 1, 1], [], []>} : vector<4x2xf32>, vector<2x4xf32>, vector<4x4xf32> -> vector<4x4xf32>
    %194 = arith.addf %189, %193 : vector<4x4xf32>
    %c0_182 = arith.constant 0 : index
    %c0_183 = arith.constant 0 : index
    %195 = vector.load %arg16[%c0_182, %c0_183] : memref<8x4xf32, #tpu.memory_space<vmem>>, vector<8x4xf32>
    %cst_184 = arith.constant dense<0.000000e+00> : vector<8x4xf32>
    %196 = tpu.matmul %195, %194, %cst_184 {dimension_numbers = #tpu.dot_dimension_numbers<[1], [0], [0], [1], [0, 0, 1, 1], [], []>} : vector<8x4xf32>, vector<4x4xf32>, vector<8x4xf32> -> vector<8x4xf32>
    %c0_185 = arith.constant 0 : index
    %c0_186 = arith.constant 0 : index
    %197 = vector.load %arg17[%c0_185, %c0_186] : memref<4x8xf32, #tpu.memory_space<vmem>>, vector<4x8xf32>
    %cst_187 = arith.constant dense<0.000000e+00> : vector<8x8xf32>
    %198 = tpu.matmul %196, %197, %cst_187 {dimension_numbers = #tpu.dot_dimension_numbers<[1], [0], [0], [1], [0, 0, 1, 1], [], []>} : vector<8x4xf32>, vector<4x8xf32>, vector<8x8xf32> -> vector<8x8xf32>
    %c5_188 = arith.constant 5 : index
    %199 = memref.load %arg20[%c5_188] : memref<6xf32, #tpu.memory_space<smem>>
    %cst_189 = arith.constant 0.000000e+00 : f32
    %200 = vector.broadcast %cst_189 : f32 to vector<8x8xf32>
    %c0_190 = arith.constant 0 : index
    %c0_191 = arith.constant 0 : index
    %c0_192 = arith.constant 0 : index
    %201 = vector.load %arg12[%c0_190, %c0_191, %c0_192] : memref<7x8x8xf32, #tpu.memory_space<vmem>>, vector<1x8x8xf32>
    %202 = vector.shape_cast %201 : vector<1x8x8xf32> to vector<8x8xf32>
    %cst_193 = arith.constant dense<0.000000e+00> : vector<8x8xf32>
    %203 = tpu.matmul %202, %53, %cst_193 {dimension_numbers = #tpu.dot_dimension_numbers<[1], [0], [0], [1], [0, 0, 1, 1], [], []>} : vector<8x8xf32>, vector<8x8xf32>, vector<8x8xf32> -> vector<8x8xf32>
    %c0_194 = arith.constant 0 : index
    %c0_195 = arith.constant 0 : index
    %c0_196 = arith.constant 0 : index
    %204 = vector.load %arg13[%c0_194, %c0_195, %c0_196] : memref<7x8x8xf32, #tpu.memory_space<vmem>>, vector<1x8x8xf32>
    %205 = vector.shape_cast %204 : vector<1x8x8xf32> to vector<8x8xf32>
    %cst_197 = arith.constant dense<0.000000e+00> : vector<8x8xf32>
    %206 = tpu.matmul %203, %205, %cst_197 {dimension_numbers = #tpu.dot_dimension_numbers<[1], [0], [0], [1], [0, 0, 1, 1], [], []>} : vector<8x8xf32>, vector<8x8xf32>, vector<8x8xf32> -> vector<8x8xf32>
    %207 = arith.addf %200, %206 : vector<8x8xf32>
    %c1_198 = arith.constant 1 : index
    %c0_199 = arith.constant 0 : index
    %c0_200 = arith.constant 0 : index
    %208 = vector.load %arg12[%c1_198, %c0_199, %c0_200] : memref<7x8x8xf32, #tpu.memory_space<vmem>>, vector<1x8x8xf32>
    %209 = vector.shape_cast %208 : vector<1x8x8xf32> to vector<8x8xf32>
    %cst_201 = arith.constant dense<0.000000e+00> : vector<8x8xf32>
    %210 = tpu.matmul %209, %53, %cst_201 {dimension_numbers = #tpu.dot_dimension_numbers<[1], [0], [0], [1], [0, 0, 1, 1], [], []>} : vector<8x8xf32>, vector<8x8xf32>, vector<8x8xf32> -> vector<8x8xf32>
    %c1_202 = arith.constant 1 : index
    %c0_203 = arith.constant 0 : index
    %c0_204 = arith.constant 0 : index
    %211 = vector.load %arg13[%c1_202, %c0_203, %c0_204] : memref<7x8x8xf32, #tpu.memory_space<vmem>>, vector<1x8x8xf32>
    %212 = vector.shape_cast %211 : vector<1x8x8xf32> to vector<8x8xf32>
    %cst_205 = arith.constant dense<0.000000e+00> : vector<8x8xf32>
    %213 = tpu.matmul %210, %212, %cst_205 {dimension_numbers = #tpu.dot_dimension_numbers<[1], [0], [0], [1], [0, 0, 1, 1], [], []>} : vector<8x8xf32>, vector<8x8xf32>, vector<8x8xf32> -> vector<8x8xf32>
    %214 = arith.addf %207, %213 : vector<8x8xf32>
    %c2_206 = arith.constant 2 : index
    %c0_207 = arith.constant 0 : index
    %c0_208 = arith.constant 0 : index
    %215 = vector.load %arg12[%c2_206, %c0_207, %c0_208] : memref<7x8x8xf32, #tpu.memory_space<vmem>>, vector<1x8x8xf32>
    %216 = vector.shape_cast %215 : vector<1x8x8xf32> to vector<8x8xf32>
    %cst_209 = arith.constant dense<0.000000e+00> : vector<8x8xf32>
    %217 = tpu.matmul %216, %53, %cst_209 {dimension_numbers = #tpu.dot_dimension_numbers<[1], [0], [0], [1], [0, 0, 1, 1], [], []>} : vector<8x8xf32>, vector<8x8xf32>, vector<8x8xf32> -> vector<8x8xf32>
    %c2_210 = arith.constant 2 : index
    %c0_211 = arith.constant 0 : index
    %c0_212 = arith.constant 0 : index
    %218 = vector.load %arg13[%c2_210, %c0_211, %c0_212] : memref<7x8x8xf32, #tpu.memory_space<vmem>>, vector<1x8x8xf32>
    %219 = vector.shape_cast %218 : vector<1x8x8xf32> to vector<8x8xf32>
    %cst_213 = arith.constant dense<0.000000e+00> : vector<8x8xf32>
    %220 = tpu.matmul %217, %219, %cst_213 {dimension_numbers = #tpu.dot_dimension_numbers<[1], [0], [0], [1], [0, 0, 1, 1], [], []>} : vector<8x8xf32>, vector<8x8xf32>, vector<8x8xf32> -> vector<8x8xf32>
    %221 = arith.addf %214, %220 : vector<8x8xf32>
    %c3_214 = arith.constant 3 : index
    %c0_215 = arith.constant 0 : index
    %c0_216 = arith.constant 0 : index
    %222 = vector.load %arg12[%c3_214, %c0_215, %c0_216] : memref<7x8x8xf32, #tpu.memory_space<vmem>>, vector<1x8x8xf32>
    %223 = vector.shape_cast %222 : vector<1x8x8xf32> to vector<8x8xf32>
    %cst_217 = arith.constant dense<0.000000e+00> : vector<8x8xf32>
    %224 = tpu.matmul %223, %53, %cst_217 {dimension_numbers = #tpu.dot_dimension_numbers<[1], [0], [0], [1], [0, 0, 1, 1], [], []>} : vector<8x8xf32>, vector<8x8xf32>, vector<8x8xf32> -> vector<8x8xf32>
    %c3_218 = arith.constant 3 : index
    %c0_219 = arith.constant 0 : index
    %c0_220 = arith.constant 0 : index
    %225 = vector.load %arg13[%c3_218, %c0_219, %c0_220] : memref<7x8x8xf32, #tpu.memory_space<vmem>>, vector<1x8x8xf32>
    %226 = vector.shape_cast %225 : vector<1x8x8xf32> to vector<8x8xf32>
    %cst_221 = arith.constant dense<0.000000e+00> : vector<8x8xf32>
    %227 = tpu.matmul %224, %226, %cst_221 {dimension_numbers = #tpu.dot_dimension_numbers<[1], [0], [0], [1], [0, 0, 1, 1], [], []>} : vector<8x8xf32>, vector<8x8xf32>, vector<8x8xf32> -> vector<8x8xf32>
    %228 = arith.addf %221, %227 : vector<8x8xf32>
    %c4_222 = arith.constant 4 : index
    %c0_223 = arith.constant 0 : index
    %c0_224 = arith.constant 0 : index
    %229 = vector.load %arg12[%c4_222, %c0_223, %c0_224] : memref<7x8x8xf32, #tpu.memory_space<vmem>>, vector<1x8x8xf32>
    %230 = vector.shape_cast %229 : vector<1x8x8xf32> to vector<8x8xf32>
    %cst_225 = arith.constant dense<0.000000e+00> : vector<8x8xf32>
    %231 = tpu.matmul %230, %53, %cst_225 {dimension_numbers = #tpu.dot_dimension_numbers<[1], [0], [0], [1], [0, 0, 1, 1], [], []>} : vector<8x8xf32>, vector<8x8xf32>, vector<8x8xf32> -> vector<8x8xf32>
    %c4_226 = arith.constant 4 : index
    %c0_227 = arith.constant 0 : index
    %c0_228 = arith.constant 0 : index
    %232 = vector.load %arg13[%c4_226, %c0_227, %c0_228] : memref<7x8x8xf32, #tpu.memory_space<vmem>>, vector<1x8x8xf32>
    %233 = vector.shape_cast %232 : vector<1x8x8xf32> to vector<8x8xf32>
    %cst_229 = arith.constant dense<0.000000e+00> : vector<8x8xf32>
    %234 = tpu.matmul %231, %233, %cst_229 {dimension_numbers = #tpu.dot_dimension_numbers<[1], [0], [0], [1], [0, 0, 1, 1], [], []>} : vector<8x8xf32>, vector<8x8xf32>, vector<8x8xf32> -> vector<8x8xf32>
    %235 = arith.addf %228, %234 : vector<8x8xf32>
    %c5_230 = arith.constant 5 : index
    %c0_231 = arith.constant 0 : index
    %c0_232 = arith.constant 0 : index
    %236 = vector.load %arg12[%c5_230, %c0_231, %c0_232] : memref<7x8x8xf32, #tpu.memory_space<vmem>>, vector<1x8x8xf32>
    %237 = vector.shape_cast %236 : vector<1x8x8xf32> to vector<8x8xf32>
    %cst_233 = arith.constant dense<0.000000e+00> : vector<8x8xf32>
    %238 = tpu.matmul %237, %53, %cst_233 {dimension_numbers = #tpu.dot_dimension_numbers<[1], [0], [0], [1], [0, 0, 1, 1], [], []>} : vector<8x8xf32>, vector<8x8xf32>, vector<8x8xf32> -> vector<8x8xf32>
    %c5_234 = arith.constant 5 : index
    %c0_235 = arith.constant 0 : index
    %c0_236 = arith.constant 0 : index
    %239 = vector.load %arg13[%c5_234, %c0_235, %c0_236] : memref<7x8x8xf32, #tpu.memory_space<vmem>>, vector<1x8x8xf32>
    %240 = vector.shape_cast %239 : vector<1x8x8xf32> to vector<8x8xf32>
    %cst_237 = arith.constant dense<0.000000e+00> : vector<8x8xf32>
    %241 = tpu.matmul %238, %240, %cst_237 {dimension_numbers = #tpu.dot_dimension_numbers<[1], [0], [0], [1], [0, 0, 1, 1], [], []>} : vector<8x8xf32>, vector<8x8xf32>, vector<8x8xf32> -> vector<8x8xf32>
    %242 = arith.addf %235, %241 : vector<8x8xf32>
    %c6_238 = arith.constant 6 : index
    %c0_239 = arith.constant 0 : index
    %c0_240 = arith.constant 0 : index
    %243 = vector.load %arg12[%c6_238, %c0_239, %c0_240] : memref<7x8x8xf32, #tpu.memory_space<vmem>>, vector<1x8x8xf32>
    %244 = vector.shape_cast %243 : vector<1x8x8xf32> to vector<8x8xf32>
    %cst_241 = arith.constant dense<0.000000e+00> : vector<8x8xf32>
    %245 = tpu.matmul %244, %53, %cst_241 {dimension_numbers = #tpu.dot_dimension_numbers<[1], [0], [0], [1], [0, 0, 1, 1], [], []>} : vector<8x8xf32>, vector<8x8xf32>, vector<8x8xf32> -> vector<8x8xf32>
    %c6_242 = arith.constant 6 : index
    %c0_243 = arith.constant 0 : index
    %c0_244 = arith.constant 0 : index
    %246 = vector.load %arg13[%c6_242, %c0_243, %c0_244] : memref<7x8x8xf32, #tpu.memory_space<vmem>>, vector<1x8x8xf32>
    %247 = vector.shape_cast %246 : vector<1x8x8xf32> to vector<8x8xf32>
    %cst_245 = arith.constant dense<0.000000e+00> : vector<8x8xf32>
    %248 = tpu.matmul %245, %247, %cst_245 {dimension_numbers = #tpu.dot_dimension_numbers<[1], [0], [0], [1], [0, 0, 1, 1], [], []>} : vector<8x8xf32>, vector<8x8xf32>, vector<8x8xf32> -> vector<8x8xf32>
    %249 = arith.addf %242, %248 : vector<8x8xf32>
    %250 = vector.broadcast %199 : f32 to vector<8x8xf32>
    %251 = arith.addf %249, %250 : vector<8x8xf32>
    %cst_246 = arith.constant 0.000000e+00 : f32
    %252 = vector.broadcast %cst_246 : f32 to vector<8x8xf32>
    %253 = arith.maximumf %251, %252 : vector<8x8xf32>
    %254 = arith.addf %198, %253 : vector<8x8xf32>
    %c0_247 = arith.constant 0 : index
    %c0_248 = arith.constant 0 : index
    %255 = vector.load %arg18[%c0_247, %c0_248] : memref<16x8xf32, #tpu.memory_space<vmem>>, vector<16x8xf32>
    %cst_249 = arith.constant dense<0.000000e+00> : vector<16x8xf32>
    %256 = tpu.matmul %255, %254, %cst_249 {dimension_numbers = #tpu.dot_dimension_numbers<[1], [0], [0], [1], [0, 0, 1, 1], [], []>} : vector<16x8xf32>, vector<8x8xf32>, vector<16x8xf32> -> vector<16x8xf32>
    %c0_250 = arith.constant 0 : index
    %c0_251 = arith.constant 0 : index
    %257 = vector.load %arg19[%c0_250, %c0_251] : memref<8x16xf32, #tpu.memory_space<vmem>>, vector<8x16xf32>
    %cst_252 = arith.constant dense<0.000000e+00> : vector<16x16xf32>
    %258 = tpu.matmul %256, %257, %cst_252 {dimension_numbers = #tpu.dot_dimension_numbers<[1], [0], [0], [1], [0, 0, 1, 1], [], []>} : vector<16x8xf32>, vector<8x16xf32>, vector<16x16xf32> -> vector<16x16xf32>
    %c0_253 = arith.constant 0 : index
    %c0_254 = arith.constant 0 : index
    %c0_255 = arith.constant 0 : index
    %259 = vector.load %arg21[%c0_253, %c0_254, %c0_255] : memref<1x16x16xf32, #tpu.memory_space<vmem>>, vector<1x16x16xf32>
    %260 = vector.shape_cast %259 : vector<1x16x16xf32> to vector<16x16xf32>
    %261 = vector.shape_cast %258 : vector<16x16xf32> to vector<1x16x16xf32>
    tpu.vector_store %arg21[%c0_253, %c0_254, %c0_255], %261 {strides = array<i32>} : memref<1x16x16xf32, #tpu.memory_space<vmem>>, vector<1x16x16xf32>,
    return
  }
  func.func @transform_0(%arg0: i32) -> (i32, i32, i32, i32) {
    %c0_i32 = arith.constant 0 : i32
    %c0_i32_0 = arith.constant 0 : i32
    %c0_i32_1 = arith.constant 0 : i32
    %c0_i32_2 = arith.constant 0 : i32
    return %arg0, %c0_i32, %c0_i32_0, %c0_i32_1 : i32, i32, i32, i32
  }
  func.func @transform_1(%arg0: i32) -> (i32, i32) {
    %c0_i32 = arith.constant 0 : i32
    %c0_i32_0 = arith.constant 0 : i32
    %c0_i32_1 = arith.constant 0 : i32
    return %c0_i32, %c0_i32_0 : i32, i32
  }
  func.func @transform_2(%arg0: i32) -> (i32, i32, i32) {
    %c0_i32 = arith.constant 0 : i32
    %c0_i32_0 = arith.constant 0 : i32
    %c0_i32_1 = arith.constant 0 : i32
    %c0_i32_2 = arith.constant 0 : i32
    return %c0_i32, %c0_i32_0, %c0_i32_1 : i32, i32, i32
  }
  func.func @transform_3(%arg0: i32) -> (i32, i32, i32) {
    %c0_i32 = arith.constant 0 : i32
    %c0_i32_0 = arith.constant 0 : i32
    %c0_i32_1 = arith.constant 0 : i32
    %c0_i32_2 = arith.constant 0 : i32
    return %c0_i32, %c0_i32_0, %c0_i32_1 : i32, i32, i32
  }
  func.func @transform_4(%arg0: i32) -> (i32, i32, i32) {
    %c0_i32 = arith.constant 0 : i32
    %c0_i32_0 = arith.constant 0 : i32
    %c0_i32_1 = arith.constant 0 : i32
    %c0_i32_2 = arith.constant 0 : i32
    return %c0_i32, %c0_i32_0, %c0_i32_1 : i32, i32, i32
  }
  func.func @transform_5(%arg0: i32) -> (i32, i32, i32) {
    %c0_i32 = arith.constant 0 : i32
    %c0_i32_0 = arith.constant 0 : i32
    %c0_i32_1 = arith.constant 0 : i32
    %c0_i32_2 = arith.constant 0 : i32
    return %c0_i32, %c0_i32_0, %c0_i32_1 : i32, i32, i32
  }
  func.func @transform_6(%arg0: i32) -> (i32, i32, i32) {
    %c0_i32 = arith.constant 0 : i32
    %c0_i32_0 = arith.constant 0 : i32
    %c0_i32_1 = arith.constant 0 : i32
    %c0_i32_2 = arith.constant 0 : i32
    return %c0_i32, %c0_i32_0, %c0_i32_1 : i32, i32, i32
  }
  func.func @transform_7(%arg0: i32) -> (i32, i32, i32) {
    %c0_i32 = arith.constant 0 : i32
    %c0_i32_0 = arith.constant 0 : i32
    %c0_i32_1 = arith.constant 0 : i32
    %c0_i32_2 = arith.constant 0 : i32
    return %c0_i32, %c0_i32_0, %c0_i32_1 : i32, i32, i32
  }
  func.func @transform_8(%arg0: i32) -> (i32, i32, i32) {
    %c0_i32 = arith.constant 0 : i32
    %c0_i32_0 = arith.constant 0 : i32
    %c0_i32_1 = arith.constant 0 : i32
    %c0_i32_2 = arith.constant 0 : i32
    return %c0_i32, %c0_i32_0, %c0_i32_1 : i32, i32, i32
  }
  func.func @transform_9(%arg0: i32) -> (i32, i32, i32) {
    %c0_i32 = arith.constant 0 : i32
    %c0_i32_0 = arith.constant 0 : i32
    %c0_i32_1 = arith.constant 0 : i32
    %c0_i32_2 = arith.constant 0 : i32
    return %c0_i32, %c0_i32_0, %c0_i32_1 : i32, i32, i32
  }
  func.func @transform_10(%arg0: i32) -> (i32, i32, i32) {
    %c0_i32 = arith.constant 0 : i32
    %c0_i32_0 = arith.constant 0 : i32
    %c0_i32_1 = arith.constant 0 : i32
    %c0_i32_2 = arith.constant 0 : i32
    return %c0_i32, %c0_i32_0, %c0_i32_1 : i32, i32, i32
  }
  func.func @transform_11(%arg0: i32) -> (i32, i32, i32) {
    %c0_i32 = arith.constant 0 : i32
    %c0_i32_0 = arith.constant 0 : i32
    %c0_i32_1 = arith.constant 0 : i32
    %c0_i32_2 = arith.constant 0 : i32
    return %c0_i32, %c0_i32_0, %c0_i32_1 : i32, i32, i32
  }
  func.func @transform_12(%arg0: i32) -> (i32, i32, i32) {
    %c0_i32 = arith.constant 0 : i32
    %c0_i32_0 = arith.constant 0 : i32
    %c0_i32_1 = arith.constant 0 : i32
    %c0_i32_2 = arith.constant 0 : i32
    return %c0_i32, %c0_i32_0, %c0_i32_1 : i32, i32, i32
  }
  func.func @transform_13(%arg0: i32) -> (i32, i32) {
    %c0_i32 = arith.constant 0 : i32
    %c0_i32_0 = arith.constant 0 : i32
    %c0_i32_1 = arith.constant 0 : i32
    return %c0_i32, %c0_i32_0 : i32, i32
  }
  func.func @transform_14(%arg0: i32) -> (i32, i32) {
    %c0_i32 = arith.constant 0 : i32
    %c0_i32_0 = arith.constant 0 : i32
    %c0_i32_1 = arith.constant 0 : i32
    return %c0_i32, %c0_i32_0 : i32, i32
  }
  func.func @transform_15(%arg0: i32) -> (i32, i32) {
    %c0_i32 = arith.constant 0 : i32
    %c0_i32_0 = arith.constant 0 : i32
    %c0_i32_1 = arith.constant 0 : i32
    return %c0_i32, %c0_i32_0 : i32, i32
  }
  func.func @transform_16(%arg0: i32) -> (i32, i32) {
    %c0_i32 = arith.constant 0 : i32
    %c0_i32_0 = arith.constant 0 : i32
    %c0_i32_1 = arith.constant 0 : i32
    return %c0_i32, %c0_i32_0 : i32, i32
  }
  func.func @transform_17(%arg0: i32) -> (i32, i32) {
    %c0_i32 = arith.constant 0 : i32
    %c0_i32_0 = arith.constant 0 : i32
    %c0_i32_1 = arith.constant 0 : i32
    return %c0_i32, %c0_i32_0 : i32, i32
  }
  func.func @transform_18(%arg0: i32) -> (i32, i32) {
    %c0_i32 = arith.constant 0 : i32
    %c0_i32_0 = arith.constant 0 : i32
    %c0_i32_1 = arith.constant 0 : i32
    return %c0_i32, %c0_i32_0 : i32, i32
  }
  func.func @transform_19(%arg0: i32) -> i32 {
    %c0_i32 = arith.constant 0 : i32
    %c0_i32_0 = arith.constant 0 : i32
    return %c0_i32 : i32
  }
  func.func @transform_20(%arg0: i32) -> (i32, i32, i32) {
    %c0_i32 = arith.constant 0 : i32
    %c0_i32_0 = arith.constant 0 : i32
    %c0_i32_1 = arith.constant 0 : i32
    return %arg0, %c0_i32, %c0_i32_0 : i32, i32, i32
  }
  func.func @transform_21(%arg0: i32) -> (i32, i32, i32) {
    %c0_i32 = arith.constant 0 : i32
    %c0_i32_0 = arith.constant 0 : i32
    %c0_i32_1 = arith.constant 0 : i32
    return %arg0, %c0_i32, %c0_i32_0 : i32, i32, i32
  }
}

module attributes {stable_mosaic.version = 11 : i64} {
  func.func @_fused_mid_kernel(%arg0: i32, %arg1: i32, %arg2: memref<1x4x256xf32, #tpu.memory_space<vmem>>, %arg3: memref<1x1x256xf32, #tpu.memory_space<vmem>>, %arg4: memref<1x8x1xf32, #tpu.memory_space<vmem>>, %arg5: memref<8x4xbf16, #tpu.memory_space<vmem>>, %arg6: memref<8x1xf32, #tpu.memory_space<vmem>>, %arg7: memref<1x8x256xf32, #tpu.memory_space<vmem>>) attributes {dimension_semantics = [#tpu.dimension_semantics<parallel>, #tpu.dimension_semantics<parallel>], iteration_bounds = array<i64: 2, 1>, scalar_prefetch = 0 : i64, scratch_operands = 0 : i64, tpu.core_type = #tpu.core_type<tc>, window_params = [{transform_indices = @transform_0, window_bounds = array<i64: 1, 4, 256>}, {transform_indices = @transform_1, window_bounds = array<i64: 1, 1, 256>}, {transform_indices = @transform_2, window_bounds = array<i64: 1, 8, 1>}, {pipeline_mode = #tpu.pipeline_mode<synchronous>, transform_indices = @transform_3, window_bounds = array<i64: 8, 4>}, {pipeline_mode = #tpu.pipeline_mode<synchronous>, transform_indices = @transform_4, window_bounds = array<i64: 8, 1>}, {transform_indices = @transform_5, window_bounds = array<i64: 1, 8, 256>}]} {
    %c0 = arith.constant 0 : index
    %c0_0 = arith.constant 0 : index
    %c0_1 = arith.constant 0 : index
    %0 = vector.load %arg2[%c0, %c0_0, %c0_1] : memref<1x4x256xf32, #tpu.memory_space<vmem>>, vector<1x4x256xf32>
    %1 = vector.shape_cast %0 : vector<1x4x256xf32> to vector<4x256xf32>
    %2 = arith.truncf %1 : vector<4x256xf32> to vector<4x256xbf16>
    %c0_2 = arith.constant 0 : index
    %c0_3 = arith.constant 0 : index
    %3 = vector.load %arg5[%c0_2, %c0_3] : memref<8x4xbf16, #tpu.memory_space<vmem>>, vector<8x4xbf16>
    %cst = arith.constant dense<0.000000e+00> : vector<8x256xf32>
    %4 = tpu.matmul %3, %2, %cst {dimension_numbers = #tpu.dot_dimension_numbers<[1], [0], [0], [1], [0, 0, 1, 1], [], []>} : vector<8x4xbf16>, vector<4x256xbf16>, vector<8x256xf32> -> vector<8x256xf32>
    %c0_4 = arith.constant 0 : index
    %c0_5 = arith.constant 0 : index
    %5 = vector.load %arg6[%c0_4, %c0_5] : memref<8x1xf32, #tpu.memory_space<vmem>>, vector<8x1xf32>
    %6 = vector.broadcast %5 : vector<8x1xf32> to vector<8x256xf32>
    %7 = arith.addf %4, %6 : vector<8x256xf32>
    %cst_6 = arith.constant 0.000000e+00 : f32
    %8 = vector.broadcast %cst_6 : f32 to vector<8x256xf32>
    %9 = arith.maximumf %7, %8 : vector<8x256xf32>
    %c0_7 = arith.constant 0 : index
    %c0_8 = arith.constant 0 : index
    %c0_9 = arith.constant 0 : index
    %10 = vector.load %arg3[%c0_7, %c0_8, %c0_9] : memref<1x1x256xf32, #tpu.memory_space<vmem>>, vector<1x1x256xf32>
    %11 = vector.shape_cast %10 : vector<1x1x256xf32> to vector<1x256xf32>
    %12 = vector.broadcast %11 : vector<1x256xf32> to vector<8x256xf32>
    %13 = arith.mulf %9, %12 : vector<8x256xf32>
    %c0_10 = arith.constant 0 : index
    %c0_11 = arith.constant 0 : index
    %c0_12 = arith.constant 0 : index
    %14 = vector.load %arg4[%c0_10, %c0_11, %c0_12] : memref<1x8x1xf32, #tpu.memory_space<vmem>>, vector<1x8x1xf32>
    %15 = vector.shape_cast %14 : vector<1x8x1xf32> to vector<8x1xf32>
    %16 = vector.broadcast %15 : vector<8x1xf32> to vector<8x256xf32>
    %17 = arith.addf %13, %16 : vector<8x256xf32>
    %c0_13 = arith.constant 0 : index
    %c0_14 = arith.constant 0 : index
    %c0_15 = arith.constant 0 : index
    %18 = vector.load %arg7[%c0_13, %c0_14, %c0_15] : memref<1x8x256xf32, #tpu.memory_space<vmem>>, vector<1x8x256xf32>
    %19 = vector.shape_cast %18 : vector<1x8x256xf32> to vector<8x256xf32>
    %20 = vector.shape_cast %17 : vector<8x256xf32> to vector<1x8x256xf32>
    tpu.vector_store %arg7[%c0_13, %c0_14, %c0_15], %20 {strides = array<i32>} : memref<1x8x256xf32, #tpu.memory_space<vmem>>, vector<1x8x256xf32>,
    return
  }
  func.func @transform_0(%arg0: i32, %arg1: i32) -> (i32, i32, i32) {
    %c0_i32 = arith.constant 0 : i32
    %c0_i32_0 = arith.constant 0 : i32
    return %arg0, %c0_i32, %arg1 : i32, i32, i32
  }
  func.func @transform_1(%arg0: i32, %arg1: i32) -> (i32, i32, i32) {
    %c0_i32 = arith.constant 0 : i32
    %c0_i32_0 = arith.constant 0 : i32
    return %arg0, %c0_i32, %arg1 : i32, i32, i32
  }
  func.func @transform_2(%arg0: i32, %arg1: i32) -> (i32, i32, i32) {
    %c0_i32 = arith.constant 0 : i32
    %c0_i32_0 = arith.constant 0 : i32
    %c0_i32_1 = arith.constant 0 : i32
    return %arg0, %c0_i32, %c0_i32_0 : i32, i32, i32
  }
  func.func @transform_3(%arg0: i32, %arg1: i32) -> (i32, i32) {
    %c0_i32 = arith.constant 0 : i32
    %c0_i32_0 = arith.constant 0 : i32
    %c0_i32_1 = arith.constant 0 : i32
    return %c0_i32, %c0_i32_0 : i32, i32
  }
  func.func @transform_4(%arg0: i32, %arg1: i32) -> (i32, i32) {
    %c0_i32 = arith.constant 0 : i32
    %c0_i32_0 = arith.constant 0 : i32
    %c0_i32_1 = arith.constant 0 : i32
    return %c0_i32, %c0_i32_0 : i32, i32
  }
  func.func @transform_5(%arg0: i32, %arg1: i32) -> (i32, i32, i32) {
    %c0_i32 = arith.constant 0 : i32
    %c0_i32_0 = arith.constant 0 : i32
    return %arg0, %c0_i32, %arg1 : i32, i32, i32
  }
}

</mosaic_0001>

<llo_original>
// kernel: fpa_module2.3
$region0: #{fpa_module2.3}
  #allocation0 [shape = 'u32[]', space=smem, size = 0x4, offset = 0x4, fixed_abs, tag = 'smem constant byte address 0x4 - core index']
  #allocation1 [shape = 'u32[72,128]{1,0:T(1,128)}', space=vmem, size = 0x9000, scoped, tag = 'internal scratch']
  %s0 = inlined_call_operand.vmem [shape: f32[2,4,256], index: 0, kind: input, shape index: {}]
  %s1 = inlined_call_operand.vmem [shape: f32[2,1,256], index: 1, kind: input, shape index: {}]
  %s2 = inlined_call_operand.vmem [shape: f32[2,8,1], index: 2, kind: input, shape index: {}]
  %s3 = inlined_call_operand.vmem [shape: bf16[8,4], index: 3, kind: input, shape index: {}]
  %s4 = inlined_call_operand.vmem [shape: f32[8,1], index: 4, kind: input, shape index: {}]
  %s5 = inlined_call_operand.vmem [shape: f32[2,8,256], index: 5, kind: output, shape index: {}]
  %s6 = sld [smem:[#allocation0]]
  $region53: #{fpa_module2.3} parent=0
    _
  %s8 = ssub.s32 1, %s6
  %s9 = scalar_select 0, %s8, %s6
  loop: start=0, step=1, limit=4
  $region2: #{fpa_module2.3} parent=0 // loop_pre_header
    _
  $region3: #{fpa_module2.3} parent=0 // loop_header
    %s11 = sphi 0, %s15
    %p12 = scmp.ge.s32.totalorder %s11, 4
    %s18 = sphi 0, %s30
    %s19 = sphi 0, %s26
    %s20 = sphi 0, %s18
    %s21 = sphi 0, %s19
    %s22 = sphi 0, %s20
    %s23 = sphi 0, %s21
    %s35 = sphi 0, %s37
    %s38 = sphi 0, %s35
    %s39 = sphi 0, %s38
    %s55 = sphi 0, %s39
    %s63 = sphi 0, %s65
    %s66 = sphi 0, %s63
    %s67 = sphi 0, %s66
    %s83 = sphi 0, %s67
    %s89 = sphi 0, %s91
    %s92 = sphi 0, %s89
    %s93 = sphi 0, %s92
    %s109 = sphi 0, %s93
    %s113 = sphi 0, %s113
    %s115 = sphi 0, %s113
    %s116 = sphi 0, %s115
    %s130 = sphi 0, %s116
    %s134 = sphi 0, %s134
    %s136 = sphi 0, %s134
    %s137 = sphi 0, %s136
    %s151 = sphi 0, %s137
    %s159 = sphi 0, %s161
    %s162 = sphi 0, %s159
    %s163 = sphi 0, %s162
    %s179 = sphi 0, %s163
  $region4: #{fpa_module2.3} parent=0 // loop_header_branch
    %14 = sbr.rel (%p12) target = $region8
  $region5: #{fpa_module2.3} parent=0 // loop_body
    %s16 = ssub.s32 %s11, 1
    %s17 = ssub.s32 %s11, 2
    %s24 = sadd.s32 1, %s19
    %p25 = scmp.ge.s32.totalorder %s24, 1
    %s26 = scalar_select %p25, 0, %s24
    %s27 = sadd.s32 1, %s18
    %s28 = scalar_select %p25, %s27, %s18
    %p29 = scmp.ge.s32.totalorder %s28, 2
    %s30 = scalar_select %p29, 0, %s28
    %s31 = ssub.s32 %s18, %s30
    %s32 = ssub.s32 %s19, %s26
    %s33 = sor.u32 %s31, %s32
    %p34 = scmp.eq.s32.totalorder %s33, 0
    %s36 = sadd.s32 %s35, 1
    %s37 = scalar_select %p34, %s35, %s36
    %p40 = pneg %p34
    %p41 = scmp.eq.s32.totalorder %s11, 1
    %p42 = por %p40, %p41
    %p43 = scmp.ne.s32.totalorder %s35, %s38
    %p44 = scmp.eq.s32.totalorder %s11, 0
    %p45 = por %p43, %p44
    %p46 = scmp.ne.s32.totalorder %s35, %s38
    %p47 = scmp.eq.s32.totalorder %s16, 1
    %p48 = por %p46, %p47
    %p49 = scmp.ne.s32.totalorder %s38, %s39
    %p50 = scmp.eq.s32.totalorder %s16, 0
    %p51 = por %p49, %p50
    %p52 = scmp.ne.s32.totalorder %s38, %s39
    %p53 = scmp.eq.s32.totalorder %s17, 1
    %p54 = por %p52, %p53
    %p56 = scmp.ne.s32.totalorder %s39, %s55
    %p57 = scmp.eq.s32.totalorder %s17, 0
    %p58 = por %p56, %p57
    %s59 = ssub.s32 %s18, %s30
    %s60 = ssub.s32 %s19, %s26
    %s61 = sor.u32 %s59, %s60
    %p62 = scmp.eq.s32.totalorder %s61, 0
    %s64 = sadd.s32 %s63, 1
    %s65 = scalar_select %p62, %s63, %s64
    %p68 = pneg %p62
    %p69 = scmp.eq.s32.totalorder %s11, 1
    %p70 = por %p68, %p69
    %p71 = scmp.ne.s32.totalorder %s63, %s66
    %p72 = scmp.eq.s32.totalorder %s11, 0
    %p73 = por %p71, %p72
    %p74 = scmp.ne.s32.totalorder %s63, %s66
    %p75 = scmp.eq.s32.totalorder %s16, 1
    %p76 = por %p74, %p75
    %p77 = scmp.ne.s32.totalorder %s66, %s67
    %p78 = scmp.eq.s32.totalorder %s16, 0
    %p79 = por %p77, %p78
    %p80 = scmp.ne.s32.totalorder %s66, %s67
    %p81 = scmp.eq.s32.totalorder %s17, 1
    %p82 = por %p80, %p81
    %p84 = scmp.ne.s32.totalorder %s67, %s83
    %p85 = scmp.eq.s32.totalorder %s17, 0
    %p86 = por %p84, %p85
    %s87 = ssub.s32 %s18, %s30
    %p88 = scmp.eq.s32.totalorder %s87, 0
    %s90 = sadd.s32 %s89, 1
    %s91 = scalar_select %p88, %s89, %s90
    %p94 = pneg %p88
    %p95 = scmp.eq.s32.totalorder %s11, 1
    %p96 = por %p94, %p95
    %p97 = scmp.ne.s32.totalorder %s89, %s92
    %p98 = scmp.eq.s32.totalorder %s11, 0
    %p99 = por %p97, %p98
    %p100 = scmp.ne.s32.totalorder %s89, %s92
    %p101 = scmp.eq.s32.totalorder %s16, 1
    %p102 = por %p100, %p101
    %p103 = scmp.ne.s32.totalorder %s92, %s93
    %p104 = scmp.eq.s32.totalorder %s16, 0
    %p105 = por %p103, %p104
    %p106 = scmp.ne.s32.totalorder %s92, %s93
    %p107 = scmp.eq.s32.totalorder %s17, 1
    %p108 = por %p106, %p107
    %p110 = scmp.ne.s32.totalorder %s93, %s109
    %p111 = scmp.eq.s32.totalorder %s17, 0
    %p112 = por %p110, %p111
    %s114 = sadd.s32 %s113, 1
    %p117 = scmp.eq.s32.totalorder %s11, 1
    %p118 = scmp.ne.s32.totalorder %s113, %s115
    %p119 = scmp.eq.s32.totalorder %s11, 0
    %p120 = por %p118, %p119
    %p121 = scmp.ne.s32.totalorder %s113, %s115
    %p122 = scmp.eq.s32.totalorder %s16, 1
    %p123 = por %p121, %p122
    %p124 = scmp.ne.s32.totalorder %s115, %s116
    %p125 = scmp.eq.s32.totalorder %s16, 0
    %p126 = por %p124, %p125
    %p127 = scmp.ne.s32.totalorder %s115, %s116
    %p128 = scmp.eq.s32.totalorder %s17, 1
    %p129 = por %p127, %p128
    %p131 = scmp.ne.s32.totalorder %s116, %s130
    %p132 = scmp.eq.s32.totalorder %s17, 0
    %p133 = por %p131, %p132
    %s135 = sadd.s32 %s134, 1
    %p138 = scmp.eq.s32.totalorder %s11, 1
    %p139 = scmp.ne.s32.totalorder %s134, %s136
    %p140 = scmp.eq.s32.totalorder %s11, 0
    %p141 = por %p139, %p140
    %p142 = scmp.ne.s32.totalorder %s134, %s136
    %p143 = scmp.eq.s32.totalorder %s16, 1
    %p144 = por %p142, %p143
    %p145 = scmp.ne.s32.totalorder %s136, %s137
    %p146 = scmp.eq.s32.totalorder %s16, 0
    %p147 = por %p145, %p146
    %p148 = scmp.ne.s32.totalorder %s136, %s137
    %p149 = scmp.eq.s32.totalorder %s17, 1
    %p150 = por %p148, %p149
    %p152 = scmp.ne.s32.totalorder %s137, %s151
    %p153 = scmp.eq.s32.totalorder %s17, 0
    %p154 = por %p152, %p153
    %s155 = ssub.s32 %s18, %s30
    %s156 = ssub.s32 %s19, %s26
    %s157 = sor.u32 %s155, %s156
    %p158 = scmp.eq.s32.totalorder %s157, 0
    %s160 = sadd.s32 %s159, 1
    %s161 = scalar_select %p158, %s159, %s160
    %p164 = pneg %p158
    %p165 = scmp.eq.s32.totalorder %s11, 1
    %p166 = por %p164, %p165
    %p167 = scmp.ne.s32.totalorder %s159, %s162
    %p168 = scmp.eq.s32.totalorder %s11, 0
    %p169 = por %p167, %p168
    %p170 = scmp.ne.s32.totalorder %s159, %s162
    %p171 = scmp.eq.s32.totalorder %s16, 1
    %p172 = por %p170, %p171
    %p173 = scmp.ne.s32.totalorder %s162, %s163
    %p174 = scmp.eq.s32.totalorder %s16, 0
    %p175 = por %p173, %p174
    %p176 = scmp.ne.s32.totalorder %s162, %s163
    %p177 = scmp.eq.s32.totalorder %s17, 1
    %p178 = por %p176, %p177
    %p180 = scmp.ne.s32.totalorder %s163, %s179
    %p181 = scmp.eq.s32.totalorder %s17, 0
    %p182 = por %p180, %p181
    %p183 = scmp.le.s32.totalorder 1, %s11
    %p184 = scmp.lt.s32.totalorder %s11, 3
    %p185 = pnand %p183, %p184
    %p186 = pneg %p185
    // Predicated region
    $region9: #{fpa_module2.3} parent=5 // pred_check
      _
    $region10: #{fpa_module2.3} parent=5 // pred_check_branch
      %188 = sbr.rel (%p185) target = $region12
    $region11: #{fpa_module2.3} parent=5 // pred_region
      %s189 = ssub.s32 %s11, 1
      // Predicated region
      $region13: #{fpa_module2.3} parent=11 // pred_check
        %p190 = pneg %p126
      $region14: #{fpa_module2.3} parent=11 // pred_check_branch
        %192 = sbr.rel (%p190) target = $region16
      $region15: #{fpa_module2.3} parent=11 // pred_region
        _
      $region16: #{fpa_module2.3} parent=11 // pred_fallthru
        _
      // Predicated region
      $region17: #{fpa_module2.3} parent=11 // pred_check
        %p193 = pneg %p147
      $region18: #{fpa_module2.3} parent=11 // pred_check_branch
        %195 = sbr.rel (%p193) target = $region20
      $region19: #{fpa_module2.3} parent=11 // pred_region
        _
      $region20: #{fpa_module2.3} parent=11 // pred_fallthru
        _
    $region12: #{fpa_module2.3} parent=5 // pred_fallthru
      _
    %p196 = scmp.lt.s32.totalorder %s11, 2
    // Predicated region
    $region21: #{fpa_module2.3} parent=5 // pred_check
      %p197 = pneg %p196
    $region22: #{fpa_module2.3} parent=5 // pred_check_branch
      %199 = sbr.rel (%p197) target = $region24
    $region23: #{fpa_module2.3} parent=5 // pred_region
      // Predicated region
      $region25: #{fpa_module2.3} parent=23 // pred_check
        %p200 = pneg %p45
      $region26: #{fpa_module2.3} parent=23 // pred_check_branch
        %202 = sbr.rel (%p200) target = $region28
      $region27: #{fpa_module2.3} parent=23 // pred_region
        %s203 = smul.u32 2, %s19
        %p204 = scmp.lt.s32.totalorder %s18, 1
        %s205 = scalar_select %p204, %s18, 1
        %p206 = scmp.lt.s32.totalorder %s203, 1
        %s207 = scalar_select %p206, %s203, 1
        %s208 = smul.addr %s205, 2
        %s209 = sadd.s32 %s207, %s208
        %s210 = smul.addr %s209, 4
        %s211 = scalar_lea.vmem %s0, %s210
        %s212 = smul.u32 2, %s19
      $region28: #{fpa_module2.3} parent=23 // pred_fallthru
        _
      // Predicated region
      $region29: #{fpa_module2.3} parent=23 // pred_check
        %p213 = pneg %p73
      $region30: #{fpa_module2.3} parent=23 // pred_check_branch
        %215 = sbr.rel (%p213) target = $region32
      $region31: #{fpa_module2.3} parent=23 // pred_region
        %s216 = smul.u32 2, %s19
        %p217 = scmp.lt.s32.totalorder %s18, 1
        %s218 = scalar_select %p217, %s18, 1
        %p219 = scmp.lt.s32.totalorder %s216, 1
        %s220 = scalar_select %p219, %s216, 1
        %s221 = smul.addr %s218, 2
        %s222 = sadd.s32 %s220, %s221
        %s223 = scalar_lea.vmem %s1, %s222
        %s224 = smul.u32 2, %s19
      $region32: #{fpa_module2.3} parent=23 // pred_fallthru
        _
      // Predicated region
      $region33: #{fpa_module2.3} parent=23 // pred_check
        %p225 = pneg %p99
      $region34: #{fpa_module2.3} parent=23 // pred_check_branch
        %227 = sbr.rel (%p225) target = $region36
      $region35: #{fpa_module2.3} parent=23 // pred_region
        %p228 = scmp.lt.s32.totalorder %s18, 1
        %s229 = scalar_select %p228, %s18, 1
        %s230 = smul.addr %s229, 8
        %s231 = scalar_lea.vmem %s2, %s230
      $region36: #{fpa_module2.3} parent=23 // pred_fallthru
        _
    $region24: #{fpa_module2.3} parent=5 // pred_fallthru
      _
    %p232 = scmp.le.s32.totalorder 1, %s11
    %p233 = scmp.lt.s32.totalorder %s11, 3
    %p234 = pnand %p232, %p233
    %p235 = pneg %p234
    // Predicated region
    $region37: #{fpa_module2.3} parent=5 // pred_check
      _
    $region38: #{fpa_module2.3} parent=5 // pred_check_branch
      %237 = sbr.rel (%p234) target = $region40
    $region39: #{fpa_module2.3} parent=5 // pred_region
      %s238 = ssub.s32 %s11, 1
      %s239 = smul.u32 2, %s21
      %p240 = scmp.lt.s32.totalorder %s20, 1
      %s241 = scalar_select %p240, %s20, 1
      %p242 = scmp.lt.s32.totalorder %s239, 1
      %s243 = scalar_select %p242, %s239, 1
      %s244 = smul.addr %s241, 2
      %s245 = sadd.s32 %s243, %s244
      %s246 = smul.addr %s245, 4
      %s247 = scalar_lea.vmem %s0, %s246
      %p248 = pneg %p51
      %p249 = pneg %p48
      %s250 = smul.u32 2, %s21
      %p251 = scmp.lt.s32.totalorder %s20, 1
      %s252 = scalar_select %p251, %s20, 1
      %p253 = scmp.lt.s32.totalorder %s250, 1
      %s254 = scalar_select %p253, %s250, 1
      %s255 = smul.addr %s252, 2
      %s256 = sadd.s32 %s254, %s255
      %s257 = scalar_lea.vmem %s1, %s256
      %p258 = pneg %p79
      %p259 = pneg %p76
      %p260 = scmp.lt.s32.totalorder %s20, 1
      %s261 = scalar_select %p260, %s20, 1
      %s262 = smul.addr %s261, 8
      %s263 = scalar_lea.vmem %s2, %s262
      %p264 = pneg %p105
      %p265 = pneg %p102
      %p266 = pneg %p126
      %p267 = pneg %p123
      %p268 = pneg %p147
      %p269 = pneg %p144
      %p270 = pneg %p175
      %p271 = pneg %p172
      %s272 = smul.u32 2, %s21
      %p273 = scmp.lt.s32.totalorder %s20, 1
      %s274 = scalar_select %p273, %s20, 1
      %p275 = scmp.lt.s32.totalorder %s272, 1
      %s276 = scalar_select %p275, %s272, 1
      %s277 = smul.addr %s274, 2
      %s278 = sadd.s32 %s276, %s277
      %s279 = smul.addr %s278, 8
      %s280 = scalar_lea.vmem %s5, %s279
      %s281 = smul.u32 2, %s21
      %p282 = scmp.lt.s32.totalorder %s20, 1
      %s283 = scalar_select %p282, %s20, 1
      %p284 = scmp.lt.s32.totalorder %s281, 1
      %s285 = scalar_select %p284, %s281, 1
      %s286 = smul.addr %s283, 2
      %s287 = sadd.s32 %s285, %s286
      %s288 = smul.addr %s287, 4
      %s289 = scalar_lea.vmem %s0, %s288
      %s290 = smul.u32 2, %s21
      %s291 = smul.u32 2, %s21
      %p292 = scmp.lt.s32.totalorder %s20, 1
      %s293 = scalar_select %p292, %s20, 1
      %p294 = scmp.lt.s32.totalorder %s291, 1
      %s295 = scalar_select %p294, %s291, 1
      %s296 = smul.addr %s293, 2
      %s297 = sadd.s32 %s295, %s296
      %s298 = scalar_lea.vmem %s1, %s297
      %s299 = smul.u32 2, %s21
      %p300 = scmp.lt.s32.totalorder %s20, 1
      %s301 = scalar_select %p300, %s20, 1
      %s302 = smul.addr %s301, 8
      %s303 = scalar_lea.vmem %s2, %s302
      %s304 = smul.u32 2, %s21
      %p305 = scmp.lt.s32.totalorder %s20, 1
      %s306 = scalar_select %p305, %s20, 1
      %p307 = scmp.lt.s32.totalorder %s304, 1
      %s308 = scalar_select %p307, %s304, 1
      %s309 = smul.addr %s306, 2
      %s310 = sadd.s32 %s308, %s309
      %s311 = smul.addr %s310, 8
      %s312 = scalar_lea.vmem %s5, %s311
      %s313 = smul.u32 2, %s21
      %v315 = vld [vmem:[%s289] sm:$0xff]
      %317 = vst [vmem:[#allocation1] ss:$2 sm:$0xff] %v315
      %v318 = vld.sshfl [vmem:[#allocation1] sm:$0xff pattern:$0x75316420]
      %v319 = vld.sshfl [vmem:[#allocation1 + $0x8] sm:$0xff pattern:$0x75316420]
      %v322 = vpack.c.bf16 %v318, %v318
      %v323 = vpack.c.bf16 %v319, %v319
      %v324 = vld [vmem:[%s3] sm:$0xf]
      %v325 = vld [vmem:[%s4] sm:$0xff]
      %327 = vset.pattern.permute.xlu0 0
      %328 = vperm.xlu0 %327, %v325
      %v329 = vpop.permute.xlu0 %328
      %vm331 = vcmask 31744
      %v333 = vsel %vm331, %v324, 0
      %vm335 = vcmask 1041408
      %v337 = vsel %vm335, %v322, 0
      %v340 = vsel %vm335, %v323, 0
      %342 = vmatpush.bf16.msra.mxu0 0
      %343 = vmatpush.bf16.msra.mxu0 0
      %344 = vmatpush.bf16.msra.mxu0 0
      %345 = vmatpush.bf16.msra.mxu0 0
      %346 = vmatpush.bf16.msra.mxu0 0
      %347 = vmatpush.bf16.msra.mxu0 0
      %348 = vmatpush.bf16.msra.mxu0 0
      %349 = vmatpush.bf16.msra.mxu0 %v337
      %350 = vmatmul.bf16.gmra.mxu0 %v333
      %v351 = vpop.f32.mrf.mxu0
      %v352 = vadd.f32 %v329, %v351
      %v353 = vpop.f32.mrf.mxu0
      %354 = vdwg.mxu0
      %355 = vmatpush.bf16.msra.mxu0 0
      %356 = vmatpush.bf16.msra.mxu0 0
      %357 = vmatpush.bf16.msra.mxu0 0
      %358 = vmatpush.bf16.msra.mxu0 0
      %359 = vmatpush.bf16.msra.mxu0 0
      %360 = vmatpush.bf16.msra.mxu0 0
      %361 = vmatpush.bf16.msra.mxu0 0
      %362 = vmatpush.bf16.msra.mxu0 %v340
      %363 = vmatmul.bf16.gmra.mxu0 %v333
      %v364 = vpop.f32.mrf.mxu0
      %v365 = vadd.f32 %v329, %v364
      %v366 = vpop.f32.mrf.mxu0
      %367 = vdwg.mxu0
      %v368 = vmax.f32 %v352, 0.0
      %v369 = vmax.f32 %v365, 0.0
      %v370 = vld [vmem:[%s298] sm:$0x3]
      %v372 = vperm.slane %v370, 0
      %v373 = vperm.slane %v370, 1
      %v376 = vmul.f32 %v368, %v372
      %v377 = vmul.f32 %v369, %v373
      %v378 = vld [vmem:[%s303] sm:$0xff]
      %380 = vset.pattern.permute.xlu0 0
      %381 = vperm.xlu0 %380, %v378
      %v382 = vpop.permute.xlu0 %381
      %v384 = vadd.f32 %v376, %v382
      %v385 = vadd.f32 %v377, %v382
      %386 = vst [vmem:[%s312] sm:$0xff] %v384
      %387 = vst [vmem:[%s312 + $0x8] sm:$0xff] %v385
      %s388 = smul.u32 2, %s21
      %p389 = scmp.lt.s32.totalorder %s20, 1
      %s390 = scalar_select %p389, %s20, 1
      %p391 = scmp.lt.s32.totalorder %s388, 1
      %s392 = scalar_select %p391, %s388, 1
      %s393 = smul.addr %s390, 2
      %s394 = sadd.s32 %s392, %s393
      %s395 = smul.addr %s394, 8
      %s396 = scalar_lea.vmem %s5, %s395
      // Predicated region
      $region41: #{fpa_module2.3} parent=39 // pred_check
        %p397 = pneg %p172
      $region42: #{fpa_module2.3} parent=39 // pred_check_branch
        %399 = sbr.rel (%p397) target = $region44
      $region43: #{fpa_module2.3} parent=39 // pred_region
        %s400 = smul.u32 2, %s21
      $region44: #{fpa_module2.3} parent=39 // pred_fallthru
        _
    $region40: #{fpa_module2.3} parent=5 // pred_fallthru
      _
    %p401 = scmp.le.s32.totalorder 2, %s11
    // Predicated region
    $region45: #{fpa_module2.3} parent=5 // pred_check
      %p402 = pneg %p401
    $region46: #{fpa_module2.3} parent=5 // pred_check_branch
      %404 = sbr.rel (%p402) target = $region48
    $region47: #{fpa_module2.3} parent=5 // pred_region
      %s405 = ssub.s32 %s11, 2
      // Predicated region
      $region49: #{fpa_module2.3} parent=47 // pred_check
        %p406 = pneg %p178
      $region50: #{fpa_module2.3} parent=47 // pred_check_branch
        %408 = sbr.rel (%p406) target = $region52
      $region51: #{fpa_module2.3} parent=47 // pred_region
        %s409 = smul.u32 2, %s23
        %p410 = scmp.lt.s32.totalorder %s22, 1
        %s411 = scalar_select %p410, %s22, 1
        %p412 = scmp.lt.s32.totalorder %s409, 1
        %s413 = scalar_select %p412, %s409, 1
        %s414 = smul.addr %s411, 2
        %s415 = sadd.s32 %s413, %s414
        %s416 = smul.addr %s415, 8
        %s417 = scalar_lea.vmem %s5, %s416
      $region52: #{fpa_module2.3} parent=47 // pred_fallthru
        _
    $region48: #{fpa_module2.3} parent=5 // pred_fallthru
      _
  $region6: #{fpa_module2.3} parent=0 // loop_footer
    %s15 = sadd.s32 1, %s11
  $region7: #{fpa_module2.3} parent=0 // loop_footer_branch
    %10 = sbr.rel target = $region3
  $region8: #{fpa_module2.3} parent=0 // loop_exit
    _

// kernel: fpa_module2.2
$region0: #{fpa_module2.2}
  #allocation0 [shape = 'u32[]', space=smem, size = 0x4, offset = 0x4, fixed_abs, tag = 'smem constant byte address 0x4 - core index']
  #allocation1 [shape = 'u32[72,128]{1,0:T(1,128)}', space=vmem, size = 0x9000, scoped, tag = 'internal scratch']
  %s0 = inlined_call_operand.vmem [shape: f32[2,4,16,16], index: 0, kind: input, shape index: {}]
  %s1 = inlined_call_operand.vmem [shape: f32[56,64], index: 1, kind: input, shape index: {}]
  %s2 = inlined_call_operand.vmem [shape: f32[7,16,8], index: 2, kind: input, shape index: {}]
  %s3 = inlined_call_operand.vmem [shape: f32[5,4,8], index: 3, kind: input, shape index: {}]
  %s4 = inlined_call_operand.vmem [shape: f32[5,8,4], index: 4, kind: input, shape index: {}]
  %s5 = inlined_call_operand.vmem [shape: f32[3,2,4], index: 5, kind: input, shape index: {}]
  %s6 = inlined_call_operand.vmem [shape: f32[3,4,2], index: 6, kind: input, shape index: {}]
  %s7 = inlined_call_operand.vmem [shape: f32[3,2,2], index: 7, kind: input, shape index: {}]
  %s8 = inlined_call_operand.vmem [shape: f32[3,2,2], index: 8, kind: input, shape index: {}]
  %s9 = inlined_call_operand.vmem [shape: f32[5,4,4], index: 9, kind: input, shape index: {}]
  %s10 = inlined_call_operand.vmem [shape: f32[5,4,4], index: 10, kind: input, shape index: {}]
  %s11 = inlined_call_operand.vmem [shape: f32[7,8,8], index: 11, kind: input, shape index: {}]
  %s12 = inlined_call_operand.vmem [shape: f32[7,8,8], index: 12, kind: input, shape index: {}]
  %s13 = inlined_call_operand.vmem [shape: f32[4,2], index: 13, kind: input, shape index: {}]
  %s14 = inlined_call_operand.vmem [shape: f32[2,4], index: 14, kind: input, shape index: {}]
  %s15 = inlined_call_operand.vmem [shape: f32[8,4], index: 15, kind: input, shape index: {}]
  %s16 = inlined_call_operand.vmem [shape: f32[4,8], index: 16, kind: input, shape index: {}]
  %s17 = inlined_call_operand.vmem [shape: f32[16,8], index: 17, kind: input, shape index: {}]
  %s18 = inlined_call_operand.vmem [shape: f32[8,16], index: 18, kind: input, shape index: {}]
  %s19 = inlined_call_operand.vmem [shape: f32[6], index: 19, kind: input, shape index: {}]
  %s20 = inlined_call_operand.vmem [shape: f32[2,16,16], index: 20, kind: output, shape index: {0}]
  %s21 = inlined_call_operand.vmem [shape: f32[2,4,1], index: 21, kind: output, shape index: {1}]
  %22 = xla_tuple %s20, %s21
  %s23 = sld [smem:[#allocation0]]
  $region125: #{fpa_module2.2} parent=0
    _
  %s25 = ssub.s32 1, %s23
  %s26 = scalar_select 0, %s25, %s23
  $region1: #{fpa_module2.2} parent=0
    #allocation2 [shape = 'u8[512]{0}', space=smem, size = 0x200, scoped, tag = 'input window, operand 19, single buffered']
    #allocation3 [shape = 's32[2]{0}', space=sflag, size = 0x8, scoped, tag = 'scoped memory for fpa_module2.2']
    %27 = vsyncpa [#allocation3], 0
    loop: start=0, step=1, limit=4
    $region2: #{fpa_module2.2} parent=1 // loop_pre_header
      _
    $region3: #{fpa_module2.2} parent=1 // loop_header
      %s29 = sphi 0, %s33
      %p30 = scmp.ge.s32.totalorder %s29, 4
      %s39 = sphi 0, %s41
      %s42 = sphi 0, %s39
      %s43 = sphi 0, %s42
      %s59 = sphi 0, %s43
      %s63 = sphi 0, %s63
      %s65 = sphi 0, %s63
      %s66 = sphi 0, %s65
      %s80 = sphi 0, %s66
      %s84 = sphi 0, %s84
      %s86 = sphi 0, %s84
      %s87 = sphi 0, %s86
      %s101 = sphi 0, %s87
      %s105 = sphi 0, %s105
      %s107 = sphi 0, %s105
      %s108 = sphi 0, %s107
      %s122 = sphi 0, %s108
      %s126 = sphi 0, %s126
      %s128 = sphi 0, %s126
      %s129 = sphi 0, %s128
      %s143 = sphi 0, %s129
      %s147 = sphi 0, %s147
      %s149 = sphi 0, %s147
      %s150 = sphi 0, %s149
      %s164 = sphi 0, %s150
      %s168 = sphi 0, %s168
      %s170 = sphi 0, %s168
      %s171 = sphi 0, %s170
      %s185 = sphi 0, %s171
      %s189 = sphi 0, %s189
      %s191 = sphi 0, %s189
      %s192 = sphi 0, %s191
      %s206 = sphi 0, %s192
      %s210 = sphi 0, %s210
      %s212 = sphi 0, %s210
      %s213 = sphi 0, %s212
      %s227 = sphi 0, %s213
      %s231 = sphi 0, %s231
      %s233 = sphi 0, %s231
      %s234 = sphi 0, %s233
      %s248 = sphi 0, %s234
      %s252 = sphi 0, %s252
      %s254 = sphi 0, %s252
      %s255 = sphi 0, %s254
      %s269 = sphi 0, %s255
      %s273 = sphi 0, %s273
      %s275 = sphi 0, %s273
      %s276 = sphi 0, %s275
      %s290 = sphi 0, %s276
      %s294 = sphi 0, %s294
      %s296 = sphi 0, %s294
      %s297 = sphi 0, %s296
      %s311 = sphi 0, %s297
      %s315 = sphi 0, %s315
      %s317 = sphi 0, %s315
      %s318 = sphi 0, %s317
      %s332 = sphi 0, %s318
      %s336 = sphi 0, %s336
      %s338 = sphi 0, %s336
      %s339 = sphi 0, %s338
      %s353 = sphi 0, %s339
      %s357 = sphi 0, %s357
      %s359 = sphi 0, %s357
      %s360 = sphi 0, %s359
      %s374 = sphi 0, %s360
      %s378 = sphi 0, %s378
      %s380 = sphi 0, %s378
      %s381 = sphi 0, %s380
      %s395 = sphi 0, %s381
      %s399 = sphi 0, %s399
      %s401 = sphi 0, %s399
      %s402 = sphi 0, %s401
      %s416 = sphi 0, %s402
      %s420 = sphi 0, %s420
      %s422 = sphi 0, %s420
      %s423 = sphi 0, %s422
      %s437 = sphi 0, %s423
      %s441 = sphi 0, %s441
      %s443 = sphi 0, %s441
      %s444 = sphi 0, %s443
      %s458 = sphi 0, %s444
      %s464 = sphi 0, %s466
      %s467 = sphi 0, %s464
      %s468 = sphi 0, %s467
      %s484 = sphi 0, %s468
      %s490 = sphi 0, %s492
      %s493 = sphi 0, %s490
      %s494 = sphi 0, %s493
      %s510 = sphi 0, %s494
    $region4: #{fpa_module2.2} parent=1 // loop_header_branch
      %32 = sbr.rel (%p30) target = $region8
    $region5: #{fpa_module2.2} parent=1 // loop_body
      %s34 = ssub.s32 %s29, 1
      %s35 = ssub.s32 %s29, 2
      %s36 = sadd.s32 %s29, 1
      %s37 = ssub.s32 %s29, %s36
      %p38 = scmp.eq.s32.totalorder %s37, 0
      %s40 = sadd.s32 %s39, 1
      %s41 = scalar_select %p38, %s39, %s40
      %p44 = pneg %p38
      %p45 = scmp.eq.s32.totalorder %s29, 1
      %p46 = por %p44, %p45
      %p47 = scmp.ne.s32.totalorder %s39, %s42
      %p48 = scmp.eq.s32.totalorder %s29, 0
      %p49 = por %p47, %p48
      %p50 = scmp.ne.s32.totalorder %s39, %s42
      %p51 = scmp.eq.s32.totalorder %s34, 1
      %p52 = por %p50, %p51
      %p53 = scmp.ne.s32.totalorder %s42, %s43
      %p54 = scmp.eq.s32.totalorder %s34, 0
      %p55 = por %p53, %p54
      %p56 = scmp.ne.s32.totalorder %s42, %s43
      %p57 = scmp.eq.s32.totalorder %s35, 1
      %p58 = por %p56, %p57
      %p60 = scmp.ne.s32.totalorder %s43, %s59
      %p61 = scmp.eq.s32.totalorder %s35, 0
      %p62 = por %p60, %p61
      %s64 = sadd.s32 %s63, 1
      %p67 = scmp.eq.s32.totalorder %s29, 1
      %p68 = scmp.ne.s32.totalorder %s63, %s65
      %p69 = scmp.eq.s32.totalorder %s29, 0
      %p70 = por %p68, %p69
      %p71 = scmp.ne.s32.totalorder %s63, %s65
      %p72 = scmp.eq.s32.totalorder %s34, 1
      %p73 = por %p71, %p72
      %p74 = scmp.ne.s32.totalorder %s65, %s66
      %p75 = scmp.eq.s32.totalorder %s34, 0
      %p76 = por %p74, %p75
      %p77 = scmp.ne.s32.totalorder %s65, %s66
      %p78 = scmp.eq.s32.totalorder %s35, 1
      %p79 = por %p77, %p78
      %p81 = scmp.ne.s32.totalorder %s66, %s80
      %p82 = scmp.eq.s32.totalorder %s35, 0
      %p83 = por %p81, %p82
      %s85 = sadd.s32 %s84, 1
      %p88 = scmp.eq.s32.totalorder %s29, 1
      %p89 = scmp.ne.s32.totalorder %s84, %s86
      %p90 = scmp.eq.s32.totalorder %s29, 0
      %p91 = por %p89, %p90
      %p92 = scmp.ne.s32.totalorder %s84, %s86
      %p93 = scmp.eq.s32.totalorder %s34, 1
      %p94 = por %p92, %p93
      %p95 = scmp.ne.s32.totalorder %s86, %s87
      %p96 = scmp.eq.s32.totalorder %s34, 0
      %p97 = por %p95, %p96
      %p98 = scmp.ne.s32.totalorder %s86, %s87
      %p99 = scmp.eq.s32.totalorder %s35, 1
      %p100 = por %p98, %p99
      %p102 = scmp.ne.s32.totalorder %s87, %s101
      %p103 = scmp.eq.s32.totalorder %s35, 0
      %p104 = por %p102, %p103
      %s106 = sadd.s32 %s105, 1
      %p109 = scmp.eq.s32.totalorder %s29, 1
      %p110 = scmp.ne.s32.totalorder %s105, %s107
      %p111 = scmp.eq.s32.totalorder %s29, 0
      %p112 = por %p110, %p111
      %p113 = scmp.ne.s32.totalorder %s105, %s107
      %p114 = scmp.eq.s32.totalorder %s34, 1
      %p115 = por %p113, %p114
      %p116 = scmp.ne.s32.totalorder %s107, %s108
      %p117 = scmp.eq.s32.totalorder %s34, 0
      %p118 = por %p116, %p117
      %p119 = scmp.ne.s32.totalorder %s107, %s108
      %p120 = scmp.eq.s32.totalorder %s35, 1
      %p121 = por %p119, %p120
      %p123 = scmp.ne.s32.totalorder %s108, %s122
      %p124 = scmp.eq.s32.totalorder %s35, 0
      %p125 = por %p123, %p124
      %s127 = sadd.s32 %s126, 1
      %p130 = scmp.eq.s32.totalorder %s29, 1
      %p131 = scmp.ne.s32.totalorder %s126, %s128
      %p132 = scmp.eq.s32.totalorder %s29, 0
      %p133 = por %p131, %p132
      %p134 = scmp.ne.s32.totalorder %s126, %s128
      %p135 = scmp.eq.s32.totalorder %s34, 1
      %p136 = por %p134, %p135
      %p137 = scmp.ne.s32.totalorder %s128, %s129
      %p138 = scmp.eq.s32.totalorder %s34, 0
      %p139 = por %p137, %p138
      %p140 = scmp.ne.s32.totalorder %s128, %s129
      %p141 = scmp.eq.s32.totalorder %s35, 1
      %p142 = por %p140, %p141
      %p144 = scmp.ne.s32.totalorder %s129, %s143
      %p145 = scmp.eq.s32.totalorder %s35, 0
      %p146 = por %p144, %p145
      %s148 = sadd.s32 %s147, 1
      %p151 = scmp.eq.s32.totalorder %s29, 1
      %p152 = scmp.ne.s32.totalorder %s147, %s149
      %p153 = scmp.eq.s32.totalorder %s29, 0
      %p154 = por %p152, %p153
      %p155 = scmp.ne.s32.totalorder %s147, %s149
      %p156 = scmp.eq.s32.totalorder %s34, 1
      %p157 = por %p155, %p156
      %p158 = scmp.ne.s32.totalorder %s149, %s150
      %p159 = scmp.eq.s32.totalorder %s34, 0
      %p160 = por %p158, %p159
      %p161 = scmp.ne.s32.totalorder %s149, %s150
      %p162 = scmp.eq.s32.totalorder %s35, 1
      %p163 = por %p161, %p162
      %p165 = scmp.ne.s32.totalorder %s150, %s164
      %p166 = scmp.eq.s32.totalorder %s35, 0
      %p167 = por %p165, %p166
      %s169 = sadd.s32 %s168, 1
      %p172 = scmp.eq.s32.totalorder %s29, 1
      %p173 = scmp.ne.s32.totalorder %s168, %s170
      %p174 = scmp.eq.s32.totalorder %s29, 0
      %p175 = por %p173, %p174
      %p176 = scmp.ne.s32.totalorder %s168, %s170
      %p177 = scmp.eq.s32.totalorder %s34, 1
      %p178 = por %p176, %p177
      %p179 = scmp.ne.s32.totalorder %s170, %s171
      %p180 = scmp.eq.s32.totalorder %s34, 0
      %p181 = por %p179, %p180
      %p182 = scmp.ne.s32.totalorder %s170, %s171
      %p183 = scmp.eq.s32.totalorder %s35, 1
      %p184 = por %p182, %p183
      %p186 = scmp.ne.s32.totalorder %s171, %s185
      %p187 = scmp.eq.s32.totalorder %s35, 0
      %p188 = por %p186, %p187
      %s190 = sadd.s32 %s189, 1
      %p193 = scmp.eq.s32.totalorder %s29, 1
      %p194 = scmp.ne.s32.totalorder %s189, %s191
      %p195 = scmp.eq.s32.totalorder %s29, 0
      %p196 = por %p194, %p195
      %p197 = scmp.ne.s32.totalorder %s189, %s191
      %p198 = scmp.eq.s32.totalorder %s34, 1
      %p199 = por %p197, %p198
      %p200 = scmp.ne.s32.totalorder %s191, %s192
      %p201 = scmp.eq.s32.totalorder %s34, 0
      %p202 = por %p200, %p201
      %p203 = scmp.ne.s32.totalorder %s191, %s192
      %p204 = scmp.eq.s32.totalorder %s35, 1
      %p205 = por %p203, %p204
      %p207 = scmp.ne.s32.totalorder %s192, %s206
      %p208 = scmp.eq.s32.totalorder %s35, 0
      %p209 = por %p207, %p208
      %s211 = sadd.s32 %s210, 1
      %p214 = scmp.eq.s32.totalorder %s29, 1
      %p215 = scmp.ne.s32.totalorder %s210, %s212
      %p216 = scmp.eq.s32.totalorder %s29, 0
      %p217 = por %p215, %p216
      %p218 = scmp.ne.s32.totalorder %s210, %s212
      %p219 = scmp.eq.s32.totalorder %s34, 1
      %p220 = por %p218, %p219
      %p221 = scmp.ne.s32.totalorder %s212, %s213
      %p222 = scmp.eq.s32.totalorder %s34, 0
      %p223 = por %p221, %p222
      %p224 = scmp.ne.s32.totalorder %s212, %s213
      %p225 = scmp.eq.s32.totalorder %s35, 1
      %p226 = por %p224, %p225
      %p228 = scmp.ne.s32.totalorder %s213, %s227
      %p229 = scmp.eq.s32.totalorder %s35, 0
      %p230 = por %p228, %p229
      %s232 = sadd.s32 %s231, 1
      %p235 = scmp.eq.s32.totalorder %s29, 1
      %p236 = scmp.ne.s32.totalorder %s231, %s233
      %p237 = scmp.eq.s32.totalorder %s29, 0
      %p238 = por %p236, %p237
      %p239 = scmp.ne.s32.totalorder %s231, %s233
      %p240 = scmp.eq.s32.totalorder %s34, 1
      %p241 = por %p239, %p240
      %p242 = scmp.ne.s32.totalorder %s233, %s234
      %p243 = scmp.eq.s32.totalorder %s34, 0
      %p244 = por %p242, %p243
      %p245 = scmp.ne.s32.totalorder %s233, %s234
      %p246 = scmp.eq.s32.totalorder %s35, 1
      %p247 = por %p245, %p246
      %p249 = scmp.ne.s32.totalorder %s234, %s248
      %p250 = scmp.eq.s32.totalorder %s35, 0
      %p251 = por %p249, %p250
      %s253 = sadd.s32 %s252, 1
      %p256 = scmp.eq.s32.totalorder %s29, 1
      %p257 = scmp.ne.s32.totalorder %s252, %s254
      %p258 = scmp.eq.s32.totalorder %s29, 0
      %p259 = por %p257, %p258
      %p260 = scmp.ne.s32.totalorder %s252, %s254
      %p261 = scmp.eq.s32.totalorder %s34, 1
      %p262 = por %p260, %p261
      %p263 = scmp.ne.s32.totalorder %s254, %s255
      %p264 = scmp.eq.s32.totalorder %s34, 0
      %p265 = por %p263, %p264
      %p266 = scmp.ne.s32.totalorder %s254, %s255
      %p267 = scmp.eq.s32.totalorder %s35, 1
      %p268 = por %p266, %p267
      %p270 = scmp.ne.s32.totalorder %s255, %s269
      %p271 = scmp.eq.s32.totalorder %s35, 0
      %p272 = por %p270, %p271
      %s274 = sadd.s32 %s273, 1
      %p277 = scmp.eq.s32.totalorder %s29, 1
      %p278 = scmp.ne.s32.totalorder %s273, %s275
      %p279 = scmp.eq.s32.totalorder %s29, 0
      %p280 = por %p278, %p279
      %p281 = scmp.ne.s32.totalorder %s273, %s275
      %p282 = scmp.eq.s32.totalorder %s34, 1
      %p283 = por %p281, %p282
      %p284 = scmp.ne.s32.totalorder %s275, %s276
      %p285 = scmp.eq.s32.totalorder %s34, 0
      %p286 = por %p284, %p285
      %p287 = scmp.ne.s32.totalorder %s275, %s276
      %p288 = scmp.eq.s32.totalorder %s35, 1
      %p289 = por %p287, %p288
      %p291 = scmp.ne.s32.totalorder %s276, %s290
      %p292 = scmp.eq.s32.totalorder %s35, 0
      %p293 = por %p291, %p292
      %s295 = sadd.s32 %s294, 1
      %p298 = scmp.eq.s32.totalorder %s29, 1
      %p299 = scmp.ne.s32.totalorder %s294, %s296
      %p300 = scmp.eq.s32.totalorder %s29, 0
      %p301 = por %p299, %p300
      %p302 = scmp.ne.s32.totalorder %s294, %s296
      %p303 = scmp.eq.s32.totalorder %s34, 1
      %p304 = por %p302, %p303
      %p305 = scmp.ne.s32.totalorder %s296, %s297
      %p306 = scmp.eq.s32.totalorder %s34, 0
      %p307 = por %p305, %p306
      %p308 = scmp.ne.s32.totalorder %s296, %s297
      %p309 = scmp.eq.s32.totalorder %s35, 1
      %p310 = por %p308, %p309
      %p312 = scmp.ne.s32.totalorder %s297, %s311
      %p313 = scmp.eq.s32.totalorder %s35, 0
      %p314 = por %p312, %p313
      %s316 = sadd.s32 %s315, 1
      %p319 = scmp.eq.s32.totalorder %s29, 1
      %p320 = scmp.ne.s32.totalorder %s315, %s317
      %p321 = scmp.eq.s32.totalorder %s29, 0
      %p322 = por %p320, %p321
      %p323 = scmp.ne.s32.totalorder %s315, %s317
      %p324 = scmp.eq.s32.totalorder %s34, 1
      %p325 = por %p323, %p324
      %p326 = scmp.ne.s32.totalorder %s317, %s318
      %p327 = scmp.eq.s32.totalorder %s34, 0
      %p328 = por %p326, %p327
      %p329 = scmp.ne.s32.totalorder %s317, %s318
      %p330 = scmp.eq.s32.totalorder %s35, 1
      %p331 = por %p329, %p330
      %p333 = scmp.ne.s32.totalorder %s318, %s332
      %p334 = scmp.eq.s32.totalorder %s35, 0
      %p335 = por %p333, %p334
      %s337 = sadd.s32 %s336, 1
      %p340 = scmp.eq.s32.totalorder %s29, 1
      %p341 = scmp.ne.s32.totalorder %s336, %s338
      %p342 = scmp.eq.s32.totalorder %s29, 0
      %p343 = por %p341, %p342
      %p344 = scmp.ne.s32.totalorder %s336, %s338
      %p345 = scmp.eq.s32.totalorder %s34, 1
      %p346 = por %p344, %p345
      %p347 = scmp.ne.s32.totalorder %s338, %s339
      %p348 = scmp.eq.s32.totalorder %s34, 0
      %p349 = por %p347, %p348
      %p350 = scmp.ne.s32.totalorder %s338, %s339
      %p351 = scmp.eq.s32.totalorder %s35, 1
      %p352 = por %p350, %p351
      %p354 = scmp.ne.s32.totalorder %s339, %s353
      %p355 = scmp.eq.s32.totalorder %s35, 0
      %p356 = por %p354, %p355
      %s358 = sadd.s32 %s357, 1
      %p361 = scmp.eq.s32.totalorder %s29, 1
      %p362 = scmp.ne.s32.totalorder %s357, %s359
      %p363 = scmp.eq.s32.totalorder %s29, 0
      %p364 = por %p362, %p363
      %p365 = scmp.ne.s32.totalorder %s357, %s359
      %p366 = scmp.eq.s32.totalorder %s34, 1
      %p367 = por %p365, %p366
      %p368 = scmp.ne.s32.totalorder %s359, %s360
      %p369 = scmp.eq.s32.totalorder %s34, 0
      %p370 = por %p368, %p369
      %p371 = scmp.ne.s32.totalorder %s359, %s360
      %p372 = scmp.eq.s32.totalorder %s35, 1
      %p373 = por %p371, %p372
      %p375 = scmp.ne.s32.totalorder %s360, %s374
      %p376 = scmp.eq.s32.totalorder %s35, 0
      %p377 = por %p375, %p376
      %s379 = sadd.s32 %s378, 1
      %p382 = scmp.eq.s32.totalorder %s29, 1
      %p383 = scmp.ne.s32.totalorder %s378, %s380
      %p384 = scmp.eq.s32.totalorder %s29, 0
      %p385 = por %p383, %p384
      %p386 = scmp.ne.s32.totalorder %s378, %s380
      %p387 = scmp.eq.s32.totalorder %s34, 1
      %p388 = por %p386, %p387
      %p389 = scmp.ne.s32.totalorder %s380, %s381
      %p390 = scmp.eq.s32.totalorder %s34, 0
      %p391 = por %p389, %p390
      %p392 = scmp.ne.s32.totalorder %s380, %s381
      %p393 = scmp.eq.s32.totalorder %s35, 1
      %p394 = por %p392, %p393
      %p396 = scmp.ne.s32.totalorder %s381, %s395
      %p397 = scmp.eq.s32.totalorder %s35, 0
      %p398 = por %p396, %p397
      %s400 = sadd.s32 %s399, 1
      %p403 = scmp.eq.s32.totalorder %s29, 1
      %p404 = scmp.ne.s32.totalorder %s399, %s401
      %p405 = scmp.eq.s32.totalorder %s29, 0
      %p406 = por %p404, %p405
      %p407 = scmp.ne.s32.totalorder %s399, %s401
      %p408 = scmp.eq.s32.totalorder %s34, 1
      %p409 = por %p407, %p408
      %p410 = scmp.ne.s32.totalorder %s401, %s402
      %p411 = scmp.eq.s32.totalorder %s34, 0
      %p412 = por %p410, %p411
      %p413 = scmp.ne.s32.totalorder %s401, %s402
      %p414 = scmp.eq.s32.totalorder %s35, 1
      %p415 = por %p413, %p414
      %p417 = scmp.ne.s32.totalorder %s402, %s416
      %p418 = scmp.eq.s32.totalorder %s35, 0
      %p419 = por %p417, %p418
      %s421 = sadd.s32 %s420, 1
      %p424 = scmp.eq.s32.totalorder %s29, 1
      %p425 = scmp.ne.s32.totalorder %s420, %s422
      %p426 = scmp.eq.s32.totalorder %s29, 0
      %p427 = por %p425, %p426
      %p428 = scmp.ne.s32.totalorder %s420, %s422
      %p429 = scmp.eq.s32.totalorder %s34, 1
      %p430 = por %p428, %p429
      %p431 = scmp.ne.s32.totalorder %s422, %s423
      %p432 = scmp.eq.s32.totalorder %s34, 0
      %p433 = por %p431, %p432
      %p434 = scmp.ne.s32.totalorder %s422, %s423
      %p435 = scmp.eq.s32.totalorder %s35, 1
      %p436 = por %p434, %p435
      %p438 = scmp.ne.s32.totalorder %s423, %s437
      %p439 = scmp.eq.s32.totalorder %s35, 0
      %p440 = por %p438, %p439
      %s442 = sadd.s32 %s441, 1
      %p445 = scmp.eq.s32.totalorder %s29, 1
      %p446 = scmp.ne.s32.totalorder %s441, %s443
      %p447 = scmp.eq.s32.totalorder %s29, 0
      %p448 = por %p446, %p447
      %p449 = scmp.ne.s32.totalorder %s441, %s443
      %p450 = scmp.eq.s32.totalorder %s34, 1
      %p451 = por %p449, %p450
      %p452 = scmp.ne.s32.totalorder %s443, %s444
      %p453 = scmp.eq.s32.totalorder %s34, 0
      %p454 = por %p452, %p453
      %p455 = scmp.ne.s32.totalorder %s443, %s444
      %p456 = scmp.eq.s32.totalorder %s35, 1
      %p457 = por %p455, %p456
      %p459 = scmp.ne.s32.totalorder %s444, %s458
      %p460 = scmp.eq.s32.totalorder %s35, 0
      %p461 = por %p459, %p460
      %s462 = ssub.s32 %s29, %s36
      %p463 = scmp.eq.s32.totalorder %s462, 0
      %s465 = sadd.s32 %s464, 1
      %s466 = scalar_select %p463, %s464, %s465
      %p469 = pneg %p463
      %p470 = scmp.eq.s32.totalorder %s29, 1
      %p471 = por %p469, %p470
      %p472 = scmp.ne.s32.totalorder %s464, %s467
      %p473 = scmp.eq.s32.totalorder %s29, 0
      %p474 = por %p472, %p473
      %p475 = scmp.ne.s32.totalorder %s464, %s467
      %p476 = scmp.eq.s32.totalorder %s34, 1
      %p477 = por %p475, %p476
      %p478 = scmp.ne.s32.totalorder %s467, %s468
      %p479 = scmp.eq.s32.totalorder %s34, 0
      %p480 = por %p478, %p479
      %p481 = scmp.ne.s32.totalorder %s467, %s468
      %p482 = scmp.eq.s32.totalorder %s35, 1
      %p483 = por %p481, %p482
      %p485 = scmp.ne.s32.totalorder %s468, %s484
      %p486 = scmp.eq.s32.totalorder %s35, 0
      %p487 = por %p485, %p486
      %s488 = ssub.s32 %s29, %s36
      %p489 = scmp.eq.s32.totalorder %s488, 0
      %s491 = sadd.s32 %s490, 1
      %s492 = scalar_select %p489, %s490, %s491
      %p495 = pneg %p489
      %p496 = scmp.eq.s32.totalorder %s29, 1
      %p497 = por %p495, %p496
      %p498 = scmp.ne.s32.totalorder %s490, %s493
      %p499 = scmp.eq.s32.totalorder %s29, 0
      %p500 = por %p498, %p499
      %p501 = scmp.ne.s32.totalorder %s490, %s493
      %p502 = scmp.eq.s32.totalorder %s34, 1
      %p503 = por %p501, %p502
      %p504 = scmp.ne.s32.totalorder %s493, %s494
      %p505 = scmp.eq.s32.totalorder %s34, 0
      %p506 = por %p504, %p505
      %p507 = scmp.ne.s32.totalorder %s493, %s494
      %p508 = scmp.eq.s32.totalorder %s35, 1
      %p509 = por %p507, %p508
      %p511 = scmp.ne.s32.totalorder %s494, %s510
      %p512 = scmp.eq.s32.totalorder %s35, 0
      %p513 = por %p511, %p512
      %p514 = scmp.le.s32.totalorder 1, %s29
      %p515 = scmp.lt.s32.totalorder %s29, 3
      %p516 = pnand %p514, %p515
      %p517 = pneg %p516
      // Predicated region
      $region9: #{fpa_module2.2} parent=5 // pred_check
        _
      $region10: #{fpa_module2.2} parent=5 // pred_check_branch
        %519 = sbr.rel (%p516) target = $region12
      $region11: #{fpa_module2.2} parent=5 // pred_region
        %s520 = ssub.s32 %s29, 1
        // Predicated region
        $region13: #{fpa_module2.2} parent=11 // pred_check
          %p521 = pneg %p76
        $region14: #{fpa_module2.2} parent=11 // pred_check_branch
          %523 = sbr.rel (%p521) target = $region16
        $region15: #{fpa_module2.2} parent=11 // pred_region
          _
        $region16: #{fpa_module2.2} parent=11 // pred_fallthru
          _
        // Predicated region
        $region17: #{fpa_module2.2} parent=11 // pred_check
          %p524 = pneg %p97
        $region18: #{fpa_module2.2} parent=11 // pred_check_branch
          %526 = sbr.rel (%p524) target = $region20
        $region19: #{fpa_module2.2} parent=11 // pred_region
          _
        $region20: #{fpa_module2.2} parent=11 // pred_fallthru
          _
        // Predicated region
        $region21: #{fpa_module2.2} parent=11 // pred_check
          %p527 = pneg %p118
        $region22: #{fpa_module2.2} parent=11 // pred_check_branch
          %529 = sbr.rel (%p527) target = $region24
        $region23: #{fpa_module2.2} parent=11 // pred_region
          _
        $region24: #{fpa_module2.2} parent=11 // pred_fallthru
          _
        // Predicated region
        $region25: #{fpa_module2.2} parent=11 // pred_check
          %p530 = pneg %p139
        $region26: #{fpa_module2.2} parent=11 // pred_check_branch
          %532 = sbr.rel (%p530) target = $region28
        $region27: #{fpa_module2.2} parent=11 // pred_region
          _
        $region28: #{fpa_module2.2} parent=11 // pred_fallthru
          _
        // Predicated region
        $region29: #{fpa_module2.2} parent=11 // pred_check
          %p533 = pneg %p160
        $region30: #{fpa_module2.2} parent=11 // pred_check_branch
          %535 = sbr.rel (%p533) target = $region32
        $region31: #{fpa_module2.2} parent=11 // pred_region
          _
        $region32: #{fpa_module2.2} parent=11 // pred_fallthru
          _
        // Predicated region
        $region33: #{fpa_module2.2} parent=11 // pred_check
          %p536 = pneg %p181
        $region34: #{fpa_module2.2} parent=11 // pred_check_branch
          %538 = sbr.rel (%p536) target = $region36
        $region35: #{fpa_module2.2} parent=11 // pred_region
          _
        $region36: #{fpa_module2.2} parent=11 // pred_fallthru
          _
        // Predicated region
        $region37: #{fpa_module2.2} parent=11 // pred_check
          %p539 = pneg %p202
        $region38: #{fpa_module2.2} parent=11 // pred_check_branch
          %541 = sbr.rel (%p539) target = $region40
        $region39: #{fpa_module2.2} parent=11 // pred_region
          _
        $region40: #{fpa_module2.2} parent=11 // pred_fallthru
          _
        // Predicated region
        $region41: #{fpa_module2.2} parent=11 // pred_check
          %p542 = pneg %p223
        $region42: #{fpa_module2.2} parent=11 // pred_check_branch
          %544 = sbr.rel (%p542) target = $region44
        $region43: #{fpa_module2.2} parent=11 // pred_region
          _
        $region44: #{fpa_module2.2} parent=11 // pred_fallthru
          _
        // Predicated region
        $region45: #{fpa_module2.2} parent=11 // pred_check
          %p545 = pneg %p244
        $region46: #{fpa_module2.2} parent=11 // pred_check_branch
          %547 = sbr.rel (%p545) target = $region48
        $region47: #{fpa_module2.2} parent=11 // pred_region
          _
        $region48: #{fpa_module2.2} parent=11 // pred_fallthru
          _
        // Predicated region
        $region49: #{fpa_module2.2} parent=11 // pred_check
          %p548 = pneg %p265
        $region50: #{fpa_module2.2} parent=11 // pred_check_branch
          %550 = sbr.rel (%p548) target = $region52
        $region51: #{fpa_module2.2} parent=11 // pred_region
          _
        $region52: #{fpa_module2.2} parent=11 // pred_fallthru
          _
        // Predicated region
        $region53: #{fpa_module2.2} parent=11 // pred_check
          %p551 = pneg %p286
        $region54: #{fpa_module2.2} parent=11 // pred_check_branch
          %553 = sbr.rel (%p551) target = $region56
        $region55: #{fpa_module2.2} parent=11 // pred_region
          _
        $region56: #{fpa_module2.2} parent=11 // pred_fallthru
          _
        // Predicated region
        $region57: #{fpa_module2.2} parent=11 // pred_check
          %p554 = pneg %p307
        $region58: #{fpa_module2.2} parent=11 // pred_check_branch
          %556 = sbr.rel (%p554) target = $region60
        $region59: #{fpa_module2.2} parent=11 // pred_region
          _
        $region60: #{fpa_module2.2} parent=11 // pred_fallthru
          _
        // Predicated region
        $region61: #{fpa_module2.2} parent=11 // pred_check
          %p557 = pneg %p328
        $region62: #{fpa_module2.2} parent=11 // pred_check_branch
          %559 = sbr.rel (%p557) target = $region64
        $region63: #{fpa_module2.2} parent=11 // pred_region
          _
        $region64: #{fpa_module2.2} parent=11 // pred_fallthru
          _
        // Predicated region
        $region65: #{fpa_module2.2} parent=11 // pred_check
          %p560 = pneg %p349
        $region66: #{fpa_module2.2} parent=11 // pred_check_branch
          %562 = sbr.rel (%p560) target = $region68
        $region67: #{fpa_module2.2} parent=11 // pred_region
          _
        $region68: #{fpa_module2.2} parent=11 // pred_fallthru
          _
        // Predicated region
        $region69: #{fpa_module2.2} parent=11 // pred_check
          %p563 = pneg %p370
        $region70: #{fpa_module2.2} parent=11 // pred_check_branch
          %565 = sbr.rel (%p563) target = $region72
        $region71: #{fpa_module2.2} parent=11 // pred_region
          _
        $region72: #{fpa_module2.2} parent=11 // pred_fallthru
          _
        // Predicated region
        $region73: #{fpa_module2.2} parent=11 // pred_check
          %p566 = pneg %p391
        $region74: #{fpa_module2.2} parent=11 // pred_check_branch
          %568 = sbr.rel (%p566) target = $region76
        $region75: #{fpa_module2.2} parent=11 // pred_region
          _
        $region76: #{fpa_module2.2} parent=11 // pred_fallthru
          _
        // Predicated region
        $region77: #{fpa_module2.2} parent=11 // pred_check
          %p569 = pneg %p412
        $region78: #{fpa_module2.2} parent=11 // pred_check_branch
          %571 = sbr.rel (%p569) target = $region80
        $region79: #{fpa_module2.2} parent=11 // pred_region
          _
        $region80: #{fpa_module2.2} parent=11 // pred_fallthru
          _
        // Predicated region
        $region81: #{fpa_module2.2} parent=11 // pred_check
          %p572 = pneg %p433
        $region82: #{fpa_module2.2} parent=11 // pred_check_branch
          %574 = sbr.rel (%p572) target = $region84
        $region83: #{fpa_module2.2} parent=11 // pred_region
          _
        $region84: #{fpa_module2.2} parent=11 // pred_fallthru
          _
        // Predicated region
        $region85: #{fpa_module2.2} parent=11 // pred_check
          %p575 = pneg %p454
        $region86: #{fpa_module2.2} parent=11 // pred_check_branch
          %577 = sbr.rel (%p575) target = $region88
        $region87: #{fpa_module2.2} parent=11 // pred_region
          %579 = vsyncadd [#allocation3], 0
          %s581 = sshll.u32 %s19, 4
          %s582 = int_to_ptr.vmem [resolvable:$true] %s581
          %584 = dma.vmem_to_smem %s582, 16, [#allocation2], [#allocation3]
        $region88: #{fpa_module2.2} parent=11 // pred_fallthru
          _
      $region12: #{fpa_module2.2} parent=5 // pred_fallthru
        _
      %p585 = scmp.lt.s32.totalorder %s29, 2
      // Predicated region
      $region89: #{fpa_module2.2} parent=5 // pred_check
        %p586 = pneg %p585
      $region90: #{fpa_module2.2} parent=5 // pred_check_branch
        %588 = sbr.rel (%p586) target = $region92
      $region91: #{fpa_module2.2} parent=5 // pred_region
        // Predicated region
        $region93: #{fpa_module2.2} parent=91 // pred_check
          %p589 = pneg %p49
        $region94: #{fpa_module2.2} parent=91 // pred_check_branch
          %591 = sbr.rel (%p589) target = $region96
        $region95: #{fpa_module2.2} parent=91 // pred_region
          %p592 = scmp.lt.s32.totalorder %s29, 1
          %s593 = scalar_select %p592, %s29, 1
          %s594 = smul.addr %s593, 8
          %s595 = smul.addr %s594, 8
          %s596 = scalar_lea.vmem %s0, %s595
        $region96: #{fpa_module2.2} parent=91 // pred_fallthru
          _
      $region92: #{fpa_module2.2} parent=5 // pred_fallthru
        _
      %p597 = scmp.le.s32.totalorder 1, %s29
      %p598 = scmp.lt.s32.totalorder %s29, 3
      %p599 = pnand %p597, %p598
      %p600 = pneg %p599
      // Predicated region
      $region97: #{fpa_module2.2} parent=5 // pred_check
        _
      $region98: #{fpa_module2.2} parent=5 // pred_check_branch
        %602 = sbr.rel (%p599) target = $region100
      $region99: #{fpa_module2.2} parent=5 // pred_region
        %s603 = ssub.s32 %s29, 1
        // Predicated region
        $region101: #{fpa_module2.2} parent=99 // pred_check
          %p604 = pneg %p454
        $region102: #{fpa_module2.2} parent=99 // pred_check_branch
          %606 = sbr.rel (%p604) target = $region104
        $region103: #{fpa_module2.2} parent=99 // pred_region
          %608 = dma.done [#allocation3], 16
        $region104: #{fpa_module2.2} parent=99 // pred_fallthru
          _
        %609 = sfence
        %p610 = scmp.lt.s32.totalorder %s34, 1
        %s611 = scalar_select %p610, %s34, 1
        %s612 = smul.addr %s611, 8
        %s613 = smul.addr %s612, 8
        %s614 = scalar_lea.vmem %s0, %s613
        %p615 = pneg %p55
        %p616 = pneg %p52
        %p617 = pneg %p76
        %p618 = pneg %p73
        %p619 = pneg %p97
        %p620 = pneg %p94
        %p621 = pneg %p118
        %p622 = pneg %p115
        %p623 = pneg %p139
        %p624 = pneg %p136
        %p625 = pneg %p160
        %p626 = pneg %p157
        %p627 = pneg %p181
        %p628 = pneg %p178
        %p629 = pneg %p202
        %p630 = pneg %p199
        %p631 = pneg %p223
        %p632 = pneg %p220
        %p633 = pneg %p244
        %p634 = pneg %p241
        %p635 = pneg %p265
        %p636 = pneg %p262
        %p637 = pneg %p286
        %p638 = pneg %p283
        %p639 = pneg %p307
        %p640 = pneg %p304
        %p641 = pneg %p328
        %p642 = pneg %p325
        %p643 = pneg %p349
        %p644 = pneg %p346
        %p645 = pneg %p370
        %p646 = pneg %p367
        %p647 = pneg %p391
        %p648 = pneg %p388
        %p649 = pneg %p412
        %p650 = pneg %p409
        %p651 = pneg %p433
        %p652 = pneg %p430
        %p653 = pneg %p454
        %p654 = pneg %p451
        %p655 = pneg %p480
        %p656 = pneg %p477
        %p657 = scmp.lt.s32.totalorder %s34, 1
        %s658 = scalar_select %p657, %s34, 1
        %s659 = smul.addr %s658, 2
        %s660 = smul.addr %s659, 8
        %s661 = scalar_lea.vmem %s20, %s660
        %p662 = pneg %p506
        %p663 = pneg %p503
        %p664 = scmp.lt.s32.totalorder %s34, 1
        %s665 = scalar_select %p664, %s34, 1
        %s666 = smul.addr %s665, 4
        %s667 = scalar_lea.vmem %s21, %s666
        %p668 = scmp.lt.s32.totalorder %s34, 1
        %s669 = scalar_select %p668, %s34, 1
        %s670 = smul.addr %s669, 8
        %s671 = smul.addr %s670, 8
        %s672 = scalar_lea.vmem %s0, %s671
        %p673 = scmp.lt.s32.totalorder %s34, 1
        %s674 = scalar_select %p673, %s34, 1
        %s675 = smul.addr %s674, 2
        %s676 = smul.addr %s675, 8
        %s677 = scalar_lea.vmem %s20, %s676
        %p678 = scmp.lt.s32.totalorder %s34, 1
        %s679 = scalar_select %p678, %s34, 1
        %s680 = smul.addr %s679, 4
        %s681 = scalar_lea.vmem %s21, %s680
        %v682 = vld [vmem:[%s672] sm:$0xff]
        %v683 = vld [vmem:[%s672 + $0x8] sm:$0xff]
        %v684 = vld [vmem:[%s672 + $0x10] sm:$0xff]
        %v685 = vld [vmem:[%s672 + $0x18] sm:$0xff]
        %v686 = vld [vmem:[%s672 + $0x20] sm:$0xff]
        %v687 = vld [vmem:[%s672 + $0x28] sm:$0xff]
        %v688 = vld [vmem:[%s672 + $0x30] sm:$0xff]
        %v689 = vld [vmem:[%s672 + $0x38] sm:$0xff]
        %vm690 = vcmask 130048
        %v691 = vsel %vm690, %v682, 0.0
        %692 = vadd.xlane.f32.xlu0 %v691
        %v693 = vpop.xlane.xlu0 %692
        %v694 = vsel %vm690, %v683, 0.0
        %695 = vadd.xlane.f32.xlu0 %v694
        %v696 = vpop.xlane.xlu0 %695
        %v697 = vsel %vm690, %v684, 0.0
        %698 = vadd.xlane.f32.xlu0 %v697
        %v699 = vpop.xlane.xlu0 %698
        %v700 = vsel %vm690, %v685, 0.0
        %701 = vadd.xlane.f32.xlu0 %v700
        %v702 = vpop.xlane.xlu0 %701
        %v703 = vsel %vm690, %v686, 0.0
        %704 = vadd.xlane.f32.xlu0 %v703
        %v705 = vpop.xlane.xlu0 %704
        %v706 = vsel %vm690, %v687, 0.0
        %707 = vadd.xlane.f32.xlu0 %v706
        %v708 = vpop.xlane.xlu0 %707
        %v709 = vsel %vm690, %v688, 0.0
        %710 = vadd.xlane.f32.xlu0 %v709
        %v711 = vpop.xlane.xlu0 %710
        %v712 = vsel %vm690, %v689, 0.0
        %713 = vadd.xlane.f32.xlu0 %v712
        %v714 = vpop.xlane.xlu0 %713
        %v723 = vlaneseq
        %v724 = vand.u32 %v723, 127
        %v725 = vperm.slane %v693, %v724
        %v726 = vadd.s32 %v724, 4294967288
        %v727 = vperm.slane %v696, %v726
        %vm728 = vcmask 130112
        %v729 = vsel %vm728, %v727, %v725
        %v730 = vperm.slane %v699, %v724
        %v731 = vperm.slane %v702, %v726
        %v732 = vsel %vm728, %v731, %v730
        %v733 = vperm.slane %v705, %v724
        %v734 = vperm.slane %v708, %v726
        %v735 = vsel %vm728, %v734, %v733
        %v736 = vperm.slane %v711, %v724
        %v737 = vperm.slane %v714, %v726
        %v738 = vsel %vm728, %v737, %v736
        %vm739 = vcmask 1041409
        %v740 = vsel %vm739, %v732, %v729
        %vm741 = vcmask 1042434
        %v742 = vsel %vm741, %v735, %v740
        %vm743 = vcmask 1043459
        %v744 = vsel %vm743, %v738, %v742
        %vm746 = vcmask 125952
        %v747 = vsel %vm746, %v744, 0.0
        %748 = vadd.xlane.f32.xlu0 %v747
        %v749 = vpop.xlane.xlu0 %748
        %v750 = vmul.f32 %v749, 0.00390625
        %vm751 = vcmask 3072
        %752 = vst.msk [vmem:[%s681] sm:$0xf] %vm751, %v750
        %v753 = vld [vmem:[%s1] sm:$0xff]
        %v754 = vld [vmem:[%s1 + $0x8] sm:$0xff]
        %v755 = vld [vmem:[%s1 + $0x10] sm:$0xff]
        %v756 = vld [vmem:[%s1 + $0x18] sm:$0xff]
        %v757 = vld [vmem:[%s1 + $0x20] sm:$0xff]
        %v758 = vld [vmem:[%s1 + $0x28] sm:$0xff]
        %v759 = vld [vmem:[%s1 + $0x30] sm:$0xff]
        %vm760 = vcmask 523264
        %v762 = vsel %vm760, %v753, 0
        %v765 = vsel %vm760, %v754, 0
        %v768 = vsel %vm760, %v755, 0
        %v771 = vsel %vm760, %v756, 0
        %v774 = vsel %vm760, %v757, 0
        %v777 = vsel %vm760, %v758, 0
        %v780 = vsel %vm760, %v759, 0
        %782 = vmatpush.msra.mxu0 0.0
        %783 = vmatpush.msra.mxu0 0.0
        %784 = vmatpush.msra.mxu0 0.0
        %785 = vmatpush.msra.mxu0 0.0
        %786 = vmatpush.msra.mxu0 0.0
        %787 = vmatpush.msra.mxu0 0.0
        %788 = vmatpush.msra.mxu0 0.0
        %789 = vmatpush.msra.mxu0 0.0
        %790 = vmatpush.msra.mxu0 %v689
        %791 = vmatpush.msra.mxu0 %v688
        %792 = vmatpush.msra.mxu0 %v687
        %793 = vmatpush.msra.mxu0 %v686
        %794 = vmatpush.msra.mxu0 %v685
        %795 = vmatpush.msra.mxu0 %v684
        %796 = vmatpush.msra.mxu0 %v683
        %797 = vmatpush.msra.mxu0 %v682
        %798 = vmatmul.f32.gmra.mxu0 %v762
        %v799 = vpop.f32.mrf.mxu0
        %v800 = vadd.f32 0.0, %v799
        %801 = vmatmul.f32.gmra.mxu0 %v765
        %v802 = vpop.f32.mrf.mxu0
        %v803 = vadd.f32 0.0, %v802
        %804 = vmatmul.f32.gmra.mxu0 %v768
        %v805 = vpop.f32.mrf.mxu0
        %v806 = vadd.f32 0.0, %v805
        %807 = vmatmul.f32.gmra.mxu0 %v771
        %v808 = vpop.f32.mrf.mxu0
        %v809 = vadd.f32 0.0, %v808
        %810 = vmatmul.f32.gmra.mxu0 %v774
        %v811 = vpop.f32.mrf.mxu0
        %v812 = vadd.f32 0.0, %v811
        %813 = vmatmul.f32.gmra.mxu0 %v777
        %v814 = vpop.f32.mrf.mxu0
        %v815 = vadd.f32 0.0, %v814
        %816 = vmatmul.f32.gmra.mxu0 %v780
        %v817 = vpop.f32.mrf.mxu0
        %v818 = vadd.f32 0.0, %v817
        %819 = vdwg.mxu0
        %v820 = vld [vmem:[%s2] sm:$0xff]
        %v821 = vld [vmem:[%s2 + $0x8] sm:$0xff]
        %s822 = scalar_lea.vmem %s2, 16
        %v823 = vld [vmem:[%s822] sm:$0xff]
        %v824 = vld [vmem:[%s822 + $0x8] sm:$0xff]
        %v826 = vsel %vm690, %v803, 0
        %828 = vmatpush.msra.mxu0 0.0
        %829 = vmatpush.msra.mxu0 0.0
        %830 = vmatpush.msra.mxu0 0.0
        %831 = vmatpush.msra.mxu0 0.0
        %832 = vmatpush.msra.mxu0 0.0
        %833 = vmatpush.msra.mxu0 0.0
        %834 = vmatpush.msra.mxu0 0.0
        %835 = vmatpush.msra.mxu0 0.0
        %836 = vmatpush.msra.mxu0 0.0
        %837 = vmatpush.msra.mxu0 0.0
        %838 = vmatpush.msra.mxu0 0.0
        %839 = vmatpush.msra.mxu0 0.0
        %840 = vmatpush.msra.mxu0 0.0
        %841 = vmatpush.msra.mxu0 0.0
        %842 = vmatpush.msra.mxu0 %v824
        %843 = vmatpush.msra.mxu0 %v823
        %844 = vmatmul.f32.gmra.mxu0 %v826
        %v845 = vpop.f32.mrf.mxu0
        %v846 = vadd.f32 0.0, %v845
        %847 = vdwg.mxu0
        %v849 = vsel %vm690, %v800, 0
        %851 = vmatpush.msra.mxu0 0.0
        %852 = vmatpush.msra.mxu0 0.0
        %853 = vmatpush.msra.mxu0 0.0
        %854 = vmatpush.msra.mxu0 0.0
        %855 = vmatpush.msra.mxu0 0.0
        %856 = vmatpush.msra.mxu0 0.0
        %857 = vmatpush.msra.mxu0 0.0
        %858 = vmatpush.msra.mxu0 0.0
        %859 = vmatpush.msra.mxu0 0.0
        %860 = vmatpush.msra.mxu0 0.0
        %861 = vmatpush.msra.mxu0 0.0
        %862 = vmatpush.msra.mxu0 0.0
        %863 = vmatpush.msra.mxu0 0.0
        %864 = vmatpush.msra.mxu0 0.0
        %865 = vmatpush.msra.mxu0 %v821
        %866 = vmatpush.msra.mxu0 %v820
        %867 = vmatmul.f32.gmra.mxu0 %v849
        %v868 = vpop.f32.mrf.mxu0
        %v869 = vadd.f32 %v846, %v868
        %870 = vdwg.mxu0
        %s871 = scalar_lea.vmem %s2, 32
        %v872 = vld [vmem:[%s871] sm:$0xff]
        %v873 = vld [vmem:[%s871 + $0x8] sm:$0xff]
        %v875 = vsel %vm690, %v806, 0
        %877 = vmatpush.msra.mxu0 0.0
        %878 = vmatpush.msra.mxu0 0.0
        %879 = vmatpush.msra.mxu0 0.0
        %880 = vmatpush.msra.mxu0 0.0
        %881 = vmatpush.msra.mxu0 0.0
        %882 = vmatpush.msra.mxu0 0.0
        %883 = vmatpush.msra.mxu0 0.0
        %884 = vmatpush.msra.mxu0 0.0
        %885 = vmatpush.msra.mxu0 0.0
        %886 = vmatpush.msra.mxu0 0.0
        %887 = vmatpush.msra.mxu0 0.0
        %888 = vmatpush.msra.mxu0 0.0
        %889 = vmatpush.msra.mxu0 0.0
        %890 = vmatpush.msra.mxu0 0.0
        %891 = vmatpush.msra.mxu0 %v873
        %892 = vmatpush.msra.mxu0 %v872
        %893 = vmatmul.f32.gmra.mxu0 %v875
        %v894 = vpop.f32.mrf.mxu0
        %v895 = vadd.f32 0.0, %v894
        %896 = vdwg.mxu0
        %v897 = vadd.f32 %v869, %v895
        %s898 = scalar_lea.vmem %s2, 48
        %v899 = vld [vmem:[%s898] sm:$0xff]
        %v900 = vld [vmem:[%s898 + $0x8] sm:$0xff]
        %v902 = vsel %vm690, %v809, 0
        %904 = vmatpush.msra.mxu0 0.0
        %905 = vmatpush.msra.mxu0 0.0
        %906 = vmatpush.msra.mxu0 0.0
        %907 = vmatpush.msra.mxu0 0.0
        %908 = vmatpush.msra.mxu0 0.0
        %909 = vmatpush.msra.mxu0 0.0
        %910 = vmatpush.msra.mxu0 0.0
        %911 = vmatpush.msra.mxu0 0.0
        %912 = vmatpush.msra.mxu0 0.0
        %913 = vmatpush.msra.mxu0 0.0
        %914 = vmatpush.msra.mxu0 0.0
        %915 = vmatpush.msra.mxu0 0.0
        %916 = vmatpush.msra.mxu0 0.0
        %917 = vmatpush.msra.mxu0 0.0
        %918 = vmatpush.msra.mxu0 %v900
        %919 = vmatpush.msra.mxu0 %v899
        %920 = vmatmul.f32.gmra.mxu0 %v902
        %v921 = vpop.f32.mrf.mxu0
        %v922 = vadd.f32 0.0, %v921
        %923 = vdwg.mxu0
        %v924 = vadd.f32 %v897, %v922
        %s925 = scalar_lea.vmem %s2, 64
        %v926 = vld [vmem:[%s925] sm:$0xff]
        %v927 = vld [vmem:[%s925 + $0x8] sm:$0xff]
        %v929 = vsel %vm690, %v812, 0
        %931 = vmatpush.msra.mxu0 0.0
        %932 = vmatpush.msra.mxu0 0.0
        %933 = vmatpush.msra.mxu0 0.0
        %934 = vmatpush.msra.mxu0 0.0
        %935 = vmatpush.msra.mxu0 0.0
        %936 = vmatpush.msra.mxu0 0.0
        %937 = vmatpush.msra.mxu0 0.0
        %938 = vmatpush.msra.mxu0 0.0
        %939 = vmatpush.msra.mxu0 0.0
        %940 = vmatpush.msra.mxu0 0.0
        %941 = vmatpush.msra.mxu0 0.0
        %942 = vmatpush.msra.mxu0 0.0
        %943 = vmatpush.msra.mxu0 0.0
        %944 = vmatpush.msra.mxu0 0.0
        %945 = vmatpush.msra.mxu0 %v927
        %946 = vmatpush.msra.mxu0 %v926
        %947 = vmatmul.f32.gmra.mxu0 %v929
        %v948 = vpop.f32.mrf.mxu0
        %v949 = vadd.f32 0.0, %v948
        %950 = vdwg.mxu0
        %v951 = vadd.f32 %v924, %v949
        %s952 = scalar_lea.vmem %s2, 80
        %v953 = vld [vmem:[%s952] sm:$0xff]
        %v954 = vld [vmem:[%s952 + $0x8] sm:$0xff]
        %v956 = vsel %vm690, %v815, 0
        %958 = vmatpush.msra.mxu0 0.0
        %959 = vmatpush.msra.mxu0 0.0
        %960 = vmatpush.msra.mxu0 0.0
        %961 = vmatpush.msra.mxu0 0.0
        %962 = vmatpush.msra.mxu0 0.0
        %963 = vmatpush.msra.mxu0 0.0
        %964 = vmatpush.msra.mxu0 0.0
        %965 = vmatpush.msra.mxu0 0.0
        %966 = vmatpush.msra.mxu0 0.0
        %967 = vmatpush.msra.mxu0 0.0
        %968 = vmatpush.msra.mxu0 0.0
        %969 = vmatpush.msra.mxu0 0.0
        %970 = vmatpush.msra.mxu0 0.0
        %971 = vmatpush.msra.mxu0 0.0
        %972 = vmatpush.msra.mxu0 %v954
        %973 = vmatpush.msra.mxu0 %v953
        %974 = vmatmul.f32.gmra.mxu0 %v956
        %v975 = vpop.f32.mrf.mxu0
        %v976 = vadd.f32 0.0, %v975
        %977 = vdwg.mxu0
        %v978 = vadd.f32 %v951, %v976
        %s979 = scalar_lea.vmem %s2, 96
        %v980 = vld [vmem:[%s979] sm:$0xff]
        %v981 = vld [vmem:[%s979 + $0x8] sm:$0xff]
        %v983 = vsel %vm690, %v818, 0
        %985 = vmatpush.msra.mxu0 0.0
        %986 = vmatpush.msra.mxu0 0.0
        %987 = vmatpush.msra.mxu0 0.0
        %988 = vmatpush.msra.mxu0 0.0
        %989 = vmatpush.msra.mxu0 0.0
        %990 = vmatpush.msra.mxu0 0.0
        %991 = vmatpush.msra.mxu0 0.0
        %992 = vmatpush.msra.mxu0 0.0
        %993 = vmatpush.msra.mxu0 0.0
        %994 = vmatpush.msra.mxu0 0.0
        %995 = vmatpush.msra.mxu0 0.0
        %996 = vmatpush.msra.mxu0 0.0
        %997 = vmatpush.msra.mxu0 0.0
        %998 = vmatpush.msra.mxu0 0.0
        %999 = vmatpush.msra.mxu0 %v981
        %1000 = vmatpush.msra.mxu0 %v980
        %1001 = vmatmul.f32.gmra.mxu0 %v983
        %v1002 = vpop.f32.mrf.mxu0
        %v1003 = vadd.f32 0.0, %v1002
        %1004 = vdwg.mxu0
        %v1005 = vadd.f32 %v978, %v1003
        %s1006 = sld [smem:[#allocation2]]
        %v1007 = vstv %s1006
        %v1008 = vadd.f32 %v1005, %v1007
        %v1009 = vmax.f32 %v1008, 0.0
        %s1010 = sld [smem:[#allocation2 + $0x1]]
        %v1011 = vld [vmem:[%s3] sm:$0xf]
        %vm1012 = vcmask 64512
        %v1014 = vsel %vm1012, %v1011, 0
        %1016 = vmatpush.msra.mxu0 0.0
        %1017 = vmatpush.msra.mxu0 0.0
        %1018 = vmatpush.msra.mxu0 0.0
        %1019 = vmatpush.msra.mxu0 0.0
        %1020 = vmatpush.msra.mxu0 0.0
        %1021 = vmatpush.msra.mxu0 0.0
        %1022 = vmatpush.msra.mxu0 0.0
        %1023 = vmatpush.msra.mxu0 0.0
        %1024 = vmatpush.msra.mxu0 0.0
        %1025 = vmatpush.msra.mxu0 0.0
        %1026 = vmatpush.msra.mxu0 0.0
        %1027 = vmatpush.msra.mxu0 0.0
        %1028 = vmatpush.msra.mxu0 0.0
        %1029 = vmatpush.msra.mxu0 0.0
        %1030 = vmatpush.msra.mxu0 0.0
        %1031 = vmatpush.msra.mxu0 %v1009
        %1032 = vmatmul.f32.gmra.mxu0 %v1014
        %v1033 = vpop.f32.mrf.mxu0
        %v1034 = vadd.f32 0.0, %v1033
        %1035 = vdwg.mxu0
        %v1036 = vld [vmem:[%s4] sm:$0xff]
        %s1037 = scalar_lea.vmem %s3, 4
        %v1038 = vld [vmem:[%s1037] sm:$0xf]
        %v1040 = vsel %vm1012, %v1038, 0
        %1042 = vmatpush.msra.mxu0 0.0
        %1043 = vmatpush.msra.mxu0 0.0
        %1044 = vmatpush.msra.mxu0 0.0
        %1045 = vmatpush.msra.mxu0 0.0
        %1046 = vmatpush.msra.mxu0 0.0
        %1047 = vmatpush.msra.mxu0 0.0
        %1048 = vmatpush.msra.mxu0 0.0
        %1049 = vmatpush.msra.mxu0 0.0
        %1050 = vmatpush.msra.mxu0 0.0
        %1051 = vmatpush.msra.mxu0 0.0
        %1052 = vmatpush.msra.mxu0 0.0
        %1053 = vmatpush.msra.mxu0 0.0
        %1054 = vmatpush.msra.mxu0 0.0
        %1055 = vmatpush.msra.mxu0 0.0
        %1056 = vmatpush.msra.mxu0 0.0
        %1057 = vmatpush.msra.mxu0 %v1009
        %1058 = vmatmul.f32.gmra.mxu0 %v1040
        %v1059 = vpop.f32.mrf.mxu0
        %v1060 = vadd.f32 0.0, %v1059
        %1061 = vdwg.mxu0
        %s1062 = scalar_lea.vmem %s4, 8
        %v1063 = vld [vmem:[%s1062] sm:$0xff]
        %v1065 = vsel %vm1012, %v1060, 0
        %1067 = vmatpush.msra.mxu0 0.0
        %1068 = vmatpush.msra.mxu0 0.0
        %1069 = vmatpush.msra.mxu0 0.0
        %1070 = vmatpush.msra.mxu0 0.0
        %1071 = vmatpush.msra.mxu0 0.0
        %1072 = vmatpush.msra.mxu0 0.0
        %1073 = vmatpush.msra.mxu0 0.0
        %1074 = vmatpush.msra.mxu0 0.0
        %1075 = vmatpush.msra.mxu0 0.0
        %1076 = vmatpush.msra.mxu0 0.0
        %1077 = vmatpush.msra.mxu0 0.0
        %1078 = vmatpush.msra.mxu0 0.0
        %1079 = vmatpush.msra.mxu0 0.0
        %1080 = vmatpush.msra.mxu0 0.0
        %1081 = vmatpush.msra.mxu0 0.0
        %1082 = vmatpush.msra.mxu0 %v1063
        %1083 = vmatmul.f32.gmra.mxu0 %v1065
        %v1084 = vpop.f32.mrf.mxu0
        %v1085 = vadd.f32 0.0, %v1084
        %1086 = vdwg.mxu0
        %v1088 = vsel %vm1012, %v1034, 0
        %1090 = vmatpush.msra.mxu0 0.0
        %1091 = vmatpush.msra.mxu0 0.0
        %1092 = vmatpush.msra.mxu0 0.0
        %1093 = vmatpush.msra.mxu0 0.0
        %1094 = vmatpush.msra.mxu0 0.0
        %1095 = vmatpush.msra.mxu0 0.0
        %1096 = vmatpush.msra.mxu0 0.0
        %1097 = vmatpush.msra.mxu0 0.0
        %1098 = vmatpush.msra.mxu0 0.0
        %1099 = vmatpush.msra.mxu0 0.0
        %1100 = vmatpush.msra.mxu0 0.0
        %1101 = vmatpush.msra.mxu0 0.0
        %1102 = vmatpush.msra.mxu0 0.0
        %1103 = vmatpush.msra.mxu0 0.0
        %1104 = vmatpush.msra.mxu0 0.0
        %1105 = vmatpush.msra.mxu0 %v1036
        %1106 = vmatmul.f32.gmra.mxu0 %v1088
        %v1107 = vpop.f32.mrf.mxu0
        %v1108 = vadd.f32 %v1085, %v1107
        %1109 = vdwg.mxu0
        %s1110 = scalar_lea.vmem %s3, 8
        %v1111 = vld [vmem:[%s1110] sm:$0xf]
        %v1113 = vsel %vm1012, %v1111, 0
        %1115 = vmatpush.msra.mxu0 0.0
        %1116 = vmatpush.msra.mxu0 0.0
        %1117 = vmatpush.msra.mxu0 0.0
        %1118 = vmatpush.msra.mxu0 0.0
        %1119 = vmatpush.msra.mxu0 0.0
        %1120 = vmatpush.msra.mxu0 0.0
        %1121 = vmatpush.msra.mxu0 0.0
        %1122 = vmatpush.msra.mxu0 0.0
        %1123 = vmatpush.msra.mxu0 0.0
        %1124 = vmatpush.msra.mxu0 0.0
        %1125 = vmatpush.msra.mxu0 0.0
        %1126 = vmatpush.msra.mxu0 0.0
        %1127 = vmatpush.msra.mxu0 0.0
        %1128 = vmatpush.msra.mxu0 0.0
        %1129 = vmatpush.msra.mxu0 0.0
        %1130 = vmatpush.msra.mxu0 %v1009
        %1131 = vmatmul.f32.gmra.mxu0 %v1113
        %v1132 = vpop.f32.mrf.mxu0
        %v1133 = vadd.f32 0.0, %v1132
        %1134 = vdwg.mxu0
        %s1135 = scalar_lea.vmem %s4, 16
        %v1136 = vld [vmem:[%s1135] sm:$0xff]
        %v1138 = vsel %vm1012, %v1133, 0
        %1140 = vmatpush.msra.mxu0 0.0
        %1141 = vmatpush.msra.mxu0 0.0
        %1142 = vmatpush.msra.mxu0 0.0
        %1143 = vmatpush.msra.mxu0 0.0
        %1144 = vmatpush.msra.mxu0 0.0
        %1145 = vmatpush.msra.mxu0 0.0
        %1146 = vmatpush.msra.mxu0 0.0
        %1147 = vmatpush.msra.mxu0 0.0
        %1148 = vmatpush.msra.mxu0 0.0
        %1149 = vmatpush.msra.mxu0 0.0
        %1150 = vmatpush.msra.mxu0 0.0
        %1151 = vmatpush.msra.mxu0 0.0
        %1152 = vmatpush.msra.mxu0 0.0
        %1153 = vmatpush.msra.mxu0 0.0
        %1154 = vmatpush.msra.mxu0 0.0
        %1155 = vmatpush.msra.mxu0 %v1136
        %1156 = vmatmul.f32.gmra.mxu0 %v1138
        %v1157 = vpop.f32.mrf.mxu0
        %v1158 = vadd.f32 0.0, %v1157
        %1159 = vdwg.mxu0
        %v1160 = vadd.f32 %v1108, %v1158
        %s1161 = scalar_lea.vmem %s3, 12
        %v1162 = vld [vmem:[%s1161] sm:$0xf]
        %v1164 = vsel %vm1012, %v1162, 0
        %1166 = vmatpush.msra.mxu0 0.0
        %1167 = vmatpush.msra.mxu0 0.0
        %1168 = vmatpush.msra.mxu0 0.0
        %1169 = vmatpush.msra.mxu0 0.0
        %1170 = vmatpush.msra.mxu0 0.0
        %1171 = vmatpush.msra.mxu0 0.0
        %1172 = vmatpush.msra.mxu0 0.0
        %1173 = vmatpush.msra.mxu0 0.0
        %1174 = vmatpush.msra.mxu0 0.0
        %1175 = vmatpush.msra.mxu0 0.0
        %1176 = vmatpush.msra.mxu0 0.0
        %1177 = vmatpush.msra.mxu0 0.0
        %1178 = vmatpush.msra.mxu0 0.0
        %1179 = vmatpush.msra.mxu0 0.0
        %1180 = vmatpush.msra.mxu0 0.0
        %1181 = vmatpush.msra.mxu0 %v1009
        %1182 = vmatmul.f32.gmra.mxu0 %v1164
        %v1183 = vpop.f32.mrf.mxu0
        %v1184 = vadd.f32 0.0, %v1183
        %1185 = vdwg.mxu0
        %s1186 = scalar_lea.vmem %s4, 24
        %v1187 = vld [vmem:[%s1186] sm:$0xff]
        %v1189 = vsel %vm1012, %v1184, 0
        %1191 = vmatpush.msra.mxu0 0.0
        %1192 = vmatpush.msra.mxu0 0.0
        %1193 = vmatpush.msra.mxu0 0.0
        %1194 = vmatpush.msra.mxu0 0.0
        %1195 = vmatpush.msra.mxu0 0.0
        %1196 = vmatpush.msra.mxu0 0.0
        %1197 = vmatpush.msra.mxu0 0.0
        %1198 = vmatpush.msra.mxu0 0.0
        %1199 = vmatpush.msra.mxu0 0.0
        %1200 = vmatpush.msra.mxu0 0.0
        %1201 = vmatpush.msra.mxu0 0.0
        %1202 = vmatpush.msra.mxu0 0.0
        %1203 = vmatpush.msra.mxu0 0.0
        %1204 = vmatpush.msra.mxu0 0.0
        %1205 = vmatpush.msra.mxu0 0.0
        %1206 = vmatpush.msra.mxu0 %v1187
        %1207 = vmatmul.f32.gmra.mxu0 %v1189
        %v1208 = vpop.f32.mrf.mxu0
        %v1209 = vadd.f32 0.0, %v1208
        %1210 = vdwg.mxu0
        %v1211 = vadd.f32 %v1160, %v1209
        %s1212 = scalar_lea.vmem %s3, 16
        %v1213 = vld [vmem:[%s1212] sm:$0xf]
        %v1215 = vsel %vm1012, %v1213, 0
        %1217 = vmatpush.msra.mxu0 0.0
        %1218 = vmatpush.msra.mxu0 0.0
        %1219 = vmatpush.msra.mxu0 0.0
        %1220 = vmatpush.msra.mxu0 0.0
        %1221 = vmatpush.msra.mxu0 0.0
        %1222 = vmatpush.msra.mxu0 0.0
        %1223 = vmatpush.msra.mxu0 0.0
        %1224 = vmatpush.msra.mxu0 0.0
        %1225 = vmatpush.msra.mxu0 0.0
        %1226 = vmatpush.msra.mxu0 0.0
        %1227 = vmatpush.msra.mxu0 0.0
        %1228 = vmatpush.msra.mxu0 0.0
        %1229 = vmatpush.msra.mxu0 0.0
        %1230 = vmatpush.msra.mxu0 0.0
        %1231 = vmatpush.msra.mxu0 0.0
        %1232 = vmatpush.msra.mxu0 %v1009
        %1233 = vmatmul.f32.gmra.mxu0 %v1215
        %v1234 = vpop.f32.mrf.mxu0
        %v1235 = vadd.f32 0.0, %v1234
        %1236 = vdwg.mxu0
        %s1237 = scalar_lea.vmem %s4, 32
        %v1238 = vld [vmem:[%s1237] sm:$0xff]
        %v1240 = vsel %vm1012, %v1235, 0
        %1242 = vmatpush.msra.mxu0 0.0
        %1243 = vmatpush.msra.mxu0 0.0
        %1244 = vmatpush.msra.mxu0 0.0
        %1245 = vmatpush.msra.mxu0 0.0
        %1246 = vmatpush.msra.mxu0 0.0
        %1247 = vmatpush.msra.mxu0 0.0
        %1248 = vmatpush.msra.mxu0 0.0
        %1249 = vmatpush.msra.mxu0 0.0
        %1250 = vmatpush.msra.mxu0 0.0
        %1251 = vmatpush.msra.mxu0 0.0
        %1252 = vmatpush.msra.mxu0 0.0
        %1253 = vmatpush.msra.mxu0 0.0
        %1254 = vmatpush.msra.mxu0 0.0
        %1255 = vmatpush.msra.mxu0 0.0
        %1256 = vmatpush.msra.mxu0 0.0
        %1257 = vmatpush.msra.mxu0 %v1238
        %1258 = vmatmul.f32.gmra.mxu0 %v1240
        %v1259 = vpop.f32.mrf.mxu0
        %v1260 = vadd.f32 0.0, %v1259
        %1261 = vdwg.mxu0
        %v1262 = vadd.f32 %v1211, %v1260
        %v1263 = vstv %s1010
        %v1264 = vadd.f32 %v1262, %v1263
        %v1265 = vmax.f32 %v1264, 0.0
        %s1266 = sld [smem:[#allocation2 + $0x2]]
        %v1267 = vld [vmem:[%s5] sm:$0x3]
        %vm1268 = vcmask 31744
        %v1270 = vsel %vm1268, %v1267, 0
        %vm1272 = vcmask 1043456
        %v1274 = vsel %vm1272, %v1265, 0
        %1276 = vmatpush.msra.mxu0 0.0
        %1277 = vmatpush.msra.mxu0 0.0
        %1278 = vmatpush.msra.mxu0 0.0
        %1279 = vmatpush.msra.mxu0 0.0
        %1280 = vmatpush.msra.mxu0 0.0
        %1281 = vmatpush.msra.mxu0 0.0
        %1282 = vmatpush.msra.mxu0 0.0
        %1283 = vmatpush.msra.mxu0 0.0
        %1284 = vmatpush.msra.mxu0 0.0
        %1285 = vmatpush.msra.mxu0 0.0
        %1286 = vmatpush.msra.mxu0 0.0
        %1287 = vmatpush.msra.mxu0 0.0
        %1288 = vmatpush.msra.mxu0 0.0
        %1289 = vmatpush.msra.mxu0 0.0
        %1290 = vmatpush.msra.mxu0 0.0
        %1291 = vmatpush.msra.mxu0 %v1274
        %1292 = vmatmul.f32.gmra.mxu0 %v1270
        %v1293 = vpop.f32.mrf.mxu0
        %v1294 = vadd.f32 0.0, %v1293
        %1295 = vdwg.mxu0
        %v1296 = vld [vmem:[%s6] sm:$0xf]
        %s1297 = scalar_lea.vmem %s5, 2
        %v1298 = vld [vmem:[%s1297] sm:$0x3]
        %v1300 = vsel %vm1268, %v1298, 0
        %1302 = vmatpush.msra.mxu0 0.0
        %1303 = vmatpush.msra.mxu0 0.0
        %1304 = vmatpush.msra.mxu0 0.0
        %1305 = vmatpush.msra.mxu0 0.0
        %1306 = vmatpush.msra.mxu0 0.0
        %1307 = vmatpush.msra.mxu0 0.0
        %1308 = vmatpush.msra.mxu0 0.0
        %1309 = vmatpush.msra.mxu0 0.0
        %1310 = vmatpush.msra.mxu0 0.0
        %1311 = vmatpush.msra.mxu0 0.0
        %1312 = vmatpush.msra.mxu0 0.0
        %1313 = vmatpush.msra.mxu0 0.0
        %1314 = vmatpush.msra.mxu0 0.0
        %1315 = vmatpush.msra.mxu0 0.0
        %1316 = vmatpush.msra.mxu0 0.0
        %1317 = vmatpush.msra.mxu0 %v1274
        %1318 = vmatmul.f32.gmra.mxu0 %v1300
        %v1319 = vpop.f32.mrf.mxu0
        %v1320 = vadd.f32 0.0, %v1319
        %1321 = vdwg.mxu0
        %s1322 = scalar_lea.vmem %s6, 4
        %v1323 = vld [vmem:[%s1322] sm:$0xf]
        %v1325 = vsel %vm1268, %v1320, 0
        %v1328 = vsel %vm1272, %v1323, 0
        %1330 = vmatpush.msra.mxu0 0.0
        %1331 = vmatpush.msra.mxu0 0.0
        %1332 = vmatpush.msra.mxu0 0.0
        %1333 = vmatpush.msra.mxu0 0.0
        %1334 = vmatpush.msra.mxu0 0.0
        %1335 = vmatpush.msra.mxu0 0.0
        %1336 = vmatpush.msra.mxu0 0.0
        %1337 = vmatpush.msra.mxu0 0.0
        %1338 = vmatpush.msra.mxu0 0.0
        %1339 = vmatpush.msra.mxu0 0.0
        %1340 = vmatpush.msra.mxu0 0.0
        %1341 = vmatpush.msra.mxu0 0.0
        %1342 = vmatpush.msra.mxu0 0.0
        %1343 = vmatpush.msra.mxu0 0.0
        %1344 = vmatpush.msra.mxu0 0.0
        %1345 = vmatpush.msra.mxu0 %v1328
        %1346 = vmatmul.f32.gmra.mxu0 %v1325
        %v1347 = vpop.f32.mrf.mxu0
        %v1348 = vadd.f32 0.0, %v1347
        %1349 = vdwg.mxu0
        %v1351 = vsel %vm1268, %v1294, 0
        %v1354 = vsel %vm1272, %v1296, 0
        %1356 = vmatpush.msra.mxu0 0.0
        %1357 = vmatpush.msra.mxu0 0.0
        %1358 = vmatpush.msra.mxu0 0.0
        %1359 = vmatpush.msra.mxu0 0.0
        %1360 = vmatpush.msra.mxu0 0.0
        %1361 = vmatpush.msra.mxu0 0.0
        %1362 = vmatpush.msra.mxu0 0.0
        %1363 = vmatpush.msra.mxu0 0.0
        %1364 = vmatpush.msra.mxu0 0.0
        %1365 = vmatpush.msra.mxu0 0.0
        %1366 = vmatpush.msra.mxu0 0.0
        %1367 = vmatpush.msra.mxu0 0.0
        %1368 = vmatpush.msra.mxu0 0.0
        %1369 = vmatpush.msra.mxu0 0.0
        %1370 = vmatpush.msra.mxu0 0.0
        %1371 = vmatpush.msra.mxu0 %v1354
        %1372 = vmatmul.f32.gmra.mxu0 %v1351
        %v1373 = vpop.f32.mrf.mxu0
        %v1374 = vadd.f32 %v1348, %v1373
        %1375 = vdwg.mxu0
        %s1376 = scalar_lea.vmem %s5, 4
        %v1377 = vld [vmem:[%s1376] sm:$0x3]
        %v1379 = vsel %vm1268, %v1377, 0
        %1381 = vmatpush.msra.mxu0 0.0
        %1382 = vmatpush.msra.mxu0 0.0
        %1383 = vmatpush.msra.mxu0 0.0
        %1384 = vmatpush.msra.mxu0 0.0
        %1385 = vmatpush.msra.mxu0 0.0
        %1386 = vmatpush.msra.mxu0 0.0
        %1387 = vmatpush.msra.mxu0 0.0
        %1388 = vmatpush.msra.mxu0 0.0
        %1389 = vmatpush.msra.mxu0 0.0
        %1390 = vmatpush.msra.mxu0 0.0
        %1391 = vmatpush.msra.mxu0 0.0
        %1392 = vmatpush.msra.mxu0 0.0
        %1393 = vmatpush.msra.mxu0 0.0
        %1394 = vmatpush.msra.mxu0 0.0
        %1395 = vmatpush.msra.mxu0 0.0
        %1396 = vmatpush.msra.mxu0 %v1274
        %1397 = vmatmul.f32.gmra.mxu0 %v1379
        %v1398 = vpop.f32.mrf.mxu0
        %v1399 = vadd.f32 0.0, %v1398
        %1400 = vdwg.mxu0
        %s1401 = scalar_lea.vmem %s6, 8
        %v1402 = vld [vmem:[%s1401] sm:$0xf]
        %v1404 = vsel %vm1268, %v1399, 0
        %v1407 = vsel %vm1272, %v1402, 0
        %1409 = vmatpush.msra.mxu0 0.0
        %1410 = vmatpush.msra.mxu0 0.0
        %1411 = vmatpush.msra.mxu0 0.0
        %1412 = vmatpush.msra.mxu0 0.0
        %1413 = vmatpush.msra.mxu0 0.0
        %1414 = vmatpush.msra.mxu0 0.0
        %1415 = vmatpush.msra.mxu0 0.0
        %1416 = vmatpush.msra.mxu0 0.0
        %1417 = vmatpush.msra.mxu0 0.0
        %1418 = vmatpush.msra.mxu0 0.0
        %1419 = vmatpush.msra.mxu0 0.0
        %1420 = vmatpush.msra.mxu0 0.0
        %1421 = vmatpush.msra.mxu0 0.0
        %1422 = vmatpush.msra.mxu0 0.0
        %1423 = vmatpush.msra.mxu0 0.0
        %1424 = vmatpush.msra.mxu0 %v1407
        %1425 = vmatmul.f32.gmra.mxu0 %v1404
        %v1426 = vpop.f32.mrf.mxu0
        %v1427 = vadd.f32 0.0, %v1426
        %1428 = vdwg.mxu0
        %v1429 = vadd.f32 %v1374, %v1427
        %v1430 = vstv %s1266
        %v1431 = vadd.f32 %v1429, %v1430
        %v1432 = vmax.f32 %v1431, 0.0
        %s1433 = sld [smem:[#allocation2 + $0x3]]
        %v1434 = vld [vmem:[%s7] sm:$0x3]
        %vm1435 = vcmask 15360
        %v1437 = vsel %vm1435, %v1434, 0
        %vm1439 = vcmask 1041408
        %v1441 = vsel %vm1439, %v1432, 0
        %1443 = vmatpush.msra.mxu0 0.0
        %1444 = vmatpush.msra.mxu0 0.0
        %1445 = vmatpush.msra.mxu0 0.0
        %1446 = vmatpush.msra.mxu0 0.0
        %1447 = vmatpush.msra.mxu0 0.0
        %1448 = vmatpush.msra.mxu0 0.0
        %1449 = vmatpush.msra.mxu0 0.0
        %1450 = vmatpush.msra.mxu0 0.0
        %1451 = vmatpush.msra.mxu0 0.0
        %1452 = vmatpush.msra.mxu0 0.0
        %1453 = vmatpush.msra.mxu0 0.0
        %1454 = vmatpush.msra.mxu0 0.0
        %1455 = vmatpush.msra.mxu0 0.0
        %1456 = vmatpush.msra.mxu0 0.0
        %1457 = vmatpush.msra.mxu0 0.0
        %1458 = vmatpush.msra.mxu0 %v1441
        %1459 = vmatmul.f32.gmra.mxu0 %v1437
        %v1460 = vpop.f32.mrf.mxu0
        %v1461 = vadd.f32 0.0, %v1460
        %1462 = vdwg.mxu0
        %v1463 = vld [vmem:[%s8] sm:$0x3]
        %s1464 = scalar_lea.vmem %s7, 2
        %v1465 = vld [vmem:[%s1464] sm:$0x3]
        %v1467 = vsel %vm1435, %v1465, 0
        %1469 = vmatpush.msra.mxu0 0.0
        %1470 = vmatpush.msra.mxu0 0.0
        %1471 = vmatpush.msra.mxu0 0.0
        %1472 = vmatpush.msra.mxu0 0.0
        %1473 = vmatpush.msra.mxu0 0.0
        %1474 = vmatpush.msra.mxu0 0.0
        %1475 = vmatpush.msra.mxu0 0.0
        %1476 = vmatpush.msra.mxu0 0.0
        %1477 = vmatpush.msra.mxu0 0.0
        %1478 = vmatpush.msra.mxu0 0.0
        %1479 = vmatpush.msra.mxu0 0.0
        %1480 = vmatpush.msra.mxu0 0.0
        %1481 = vmatpush.msra.mxu0 0.0
        %1482 = vmatpush.msra.mxu0 0.0
        %1483 = vmatpush.msra.mxu0 0.0
        %1484 = vmatpush.msra.mxu0 %v1441
        %1485 = vmatmul.f32.gmra.mxu0 %v1467
        %v1486 = vpop.f32.mrf.mxu0
        %v1487 = vadd.f32 0.0, %v1486
        %1488 = vdwg.mxu0
        %s1489 = scalar_lea.vmem %s8, 2
        %v1490 = vld [vmem:[%s1489] sm:$0x3]
        %v1492 = vsel %vm1435, %v1487, 0
        %v1495 = vsel %vm1439, %v1490, 0
        %1497 = vmatpush.msra.mxu0 0.0
        %1498 = vmatpush.msra.mxu0 0.0
        %1499 = vmatpush.msra.mxu0 0.0
        %1500 = vmatpush.msra.mxu0 0.0
        %1501 = vmatpush.msra.mxu0 0.0
        %1502 = vmatpush.msra.mxu0 0.0
        %1503 = vmatpush.msra.mxu0 0.0
        %1504 = vmatpush.msra.mxu0 0.0
        %1505 = vmatpush.msra.mxu0 0.0
        %1506 = vmatpush.msra.mxu0 0.0
        %1507 = vmatpush.msra.mxu0 0.0
        %1508 = vmatpush.msra.mxu0 0.0
        %1509 = vmatpush.msra.mxu0 0.0
        %1510 = vmatpush.msra.mxu0 0.0
        %1511 = vmatpush.msra.mxu0 0.0
        %1512 = vmatpush.msra.mxu0 %v1495
        %1513 = vmatmul.f32.gmra.mxu0 %v1492
        %v1514 = vpop.f32.mrf.mxu0
        %v1515 = vadd.f32 0.0, %v1514
        %1516 = vdwg.mxu0
        %v1518 = vsel %vm1435, %v1461, 0
        %v1521 = vsel %vm1439, %v1463, 0
        %1523 = vmatpush.msra.mxu0 0.0
        %1524 = vmatpush.msra.mxu0 0.0
        %1525 = vmatpush.msra.mxu0 0.0
        %1526 = vmatpush.msra.mxu0 0.0
        %1527 = vmatpush.msra.mxu0 0.0
        %1528 = vmatpush.msra.mxu0 0.0
        %1529 = vmatpush.msra.mxu0 0.0
        %1530 = vmatpush.msra.mxu0 0.0
        %1531 = vmatpush.msra.mxu0 0.0
        %1532 = vmatpush.msra.mxu0 0.0
        %1533 = vmatpush.msra.mxu0 0.0
        %1534 = vmatpush.msra.mxu0 0.0
        %1535 = vmatpush.msra.mxu0 0.0
        %1536 = vmatpush.msra.mxu0 0.0
        %1537 = vmatpush.msra.mxu0 0.0
        %1538 = vmatpush.msra.mxu0 %v1521
        %1539 = vmatmul.f32.gmra.mxu0 %v1518
        %v1540 = vpop.f32.mrf.mxu0
        %v1541 = vadd.f32 %v1515, %v1540
        %1542 = vdwg.mxu0
        %s1543 = scalar_lea.vmem %s7, 4
        %v1544 = vld [vmem:[%s1543] sm:$0x3]
        %v1546 = vsel %vm1435, %v1544, 0
        %1548 = vmatpush.msra.mxu0 0.0
        %1549 = vmatpush.msra.mxu0 0.0
        %1550 = vmatpush.msra.mxu0 0.0
        %1551 = vmatpush.msra.mxu0 0.0
        %1552 = vmatpush.msra.mxu0 0.0
        %1553 = vmatpush.msra.mxu0 0.0
        %1554 = vmatpush.msra.mxu0 0.0
        %1555 = vmatpush.msra.mxu0 0.0
        %1556 = vmatpush.msra.mxu0 0.0
        %1557 = vmatpush.msra.mxu0 0.0
        %1558 = vmatpush.msra.mxu0 0.0
        %1559 = vmatpush.msra.mxu0 0.0
        %1560 = vmatpush.msra.mxu0 0.0
        %1561 = vmatpush.msra.mxu0 0.0
        %1562 = vmatpush.msra.mxu0 0.0
        %1563 = vmatpush.msra.mxu0 %v1441
        %1564 = vmatmul.f32.gmra.mxu0 %v1546
        %v1565 = vpop.f32.mrf.mxu0
        %v1566 = vadd.f32 0.0, %v1565
        %1567 = vdwg.mxu0
        %s1568 = scalar_lea.vmem %s8, 4
        %v1569 = vld [vmem:[%s1568] sm:$0x3]
        %v1571 = vsel %vm1435, %v1566, 0
        %v1574 = vsel %vm1439, %v1569, 0
        %1576 = vmatpush.msra.mxu0 0.0
        %1577 = vmatpush.msra.mxu0 0.0
        %1578 = vmatpush.msra.mxu0 0.0
        %1579 = vmatpush.msra.mxu0 0.0
        %1580 = vmatpush.msra.mxu0 0.0
        %1581 = vmatpush.msra.mxu0 0.0
        %1582 = vmatpush.msra.mxu0 0.0
        %1583 = vmatpush.msra.mxu0 0.0
        %1584 = vmatpush.msra.mxu0 0.0
        %1585 = vmatpush.msra.mxu0 0.0
        %1586 = vmatpush.msra.mxu0 0.0
        %1587 = vmatpush.msra.mxu0 0.0
        %1588 = vmatpush.msra.mxu0 0.0
        %1589 = vmatpush.msra.mxu0 0.0
        %1590 = vmatpush.msra.mxu0 0.0
        %1591 = vmatpush.msra.mxu0 %v1574
        %1592 = vmatmul.f32.gmra.mxu0 %v1571
        %v1593 = vpop.f32.mrf.mxu0
        %v1594 = vadd.f32 0.0, %v1593
        %1595 = vdwg.mxu0
        %v1596 = vadd.f32 %v1541, %v1594
        %v1597 = vstv %s1433
        %v1598 = vadd.f32 %v1596, %v1597
        %v1599 = vmax.f32 %v1598, 0.0
        %s1600 = sld [smem:[#allocation2 + $0x4]]
        %v1601 = vld [vmem:[%s9] sm:$0xf]
        %v1603 = vsel %vm1268, %v1601, 0
        %1605 = vmatpush.msra.mxu0 0.0
        %1606 = vmatpush.msra.mxu0 0.0
        %1607 = vmatpush.msra.mxu0 0.0
        %1608 = vmatpush.msra.mxu0 0.0
        %1609 = vmatpush.msra.mxu0 0.0
        %1610 = vmatpush.msra.mxu0 0.0
        %1611 = vmatpush.msra.mxu0 0.0
        %1612 = vmatpush.msra.mxu0 0.0
        %1613 = vmatpush.msra.mxu0 0.0
        %1614 = vmatpush.msra.mxu0 0.0
        %1615 = vmatpush.msra.mxu0 0.0
        %1616 = vmatpush.msra.mxu0 0.0
        %1617 = vmatpush.msra.mxu0 0.0
        %1618 = vmatpush.msra.mxu0 0.0
        %1619 = vmatpush.msra.mxu0 0.0
        %1620 = vmatpush.msra.mxu0 %v1274
        %1621 = vmatmul.f32.gmra.mxu0 %v1603
        %v1622 = vpop.f32.mrf.mxu0
        %v1623 = vadd.f32 0.0, %v1622
        %1624 = vdwg.mxu0
        %v1625 = vld [vmem:[%s10] sm:$0xf]
        %s1626 = scalar_lea.vmem %s9, 4
        %v1627 = vld [vmem:[%s1626] sm:$0xf]
        %v1629 = vsel %vm1268, %v1627, 0
        %1631 = vmatpush.msra.mxu0 0.0
        %1632 = vmatpush.msra.mxu0 0.0
        %1633 = vmatpush.msra.mxu0 0.0
        %1634 = vmatpush.msra.mxu0 0.0
        %1635 = vmatpush.msra.mxu0 0.0
        %1636 = vmatpush.msra.mxu0 0.0
        %1637 = vmatpush.msra.mxu0 0.0
        %1638 = vmatpush.msra.mxu0 0.0
        %1639 = vmatpush.msra.mxu0 0.0
        %1640 = vmatpush.msra.mxu0 0.0
        %1641 = vmatpush.msra.mxu0 0.0
        %1642 = vmatpush.msra.mxu0 0.0
        %1643 = vmatpush.msra.mxu0 0.0
        %1644 = vmatpush.msra.mxu0 0.0
        %1645 = vmatpush.msra.mxu0 0.0
        %1646 = vmatpush.msra.mxu0 %v1274
        %1647 = vmatmul.f32.gmra.mxu0 %v1629
        %v1648 = vpop.f32.mrf.mxu0
        %v1649 = vadd.f32 0.0, %v1648
        %1650 = vdwg.mxu0
        %s1651 = scalar_lea.vmem %s10, 4
        %v1652 = vld [vmem:[%s1651] sm:$0xf]
        %v1654 = vsel %vm1268, %v1649, 0
        %v1657 = vsel %vm1272, %v1652, 0
        %1659 = vmatpush.msra.mxu0 0.0
        %1660 = vmatpush.msra.mxu0 0.0
        %1661 = vmatpush.msra.mxu0 0.0
        %1662 = vmatpush.msra.mxu0 0.0
        %1663 = vmatpush.msra.mxu0 0.0
        %1664 = vmatpush.msra.mxu0 0.0
        %1665 = vmatpush.msra.mxu0 0.0
        %1666 = vmatpush.msra.mxu0 0.0
        %1667 = vmatpush.msra.mxu0 0.0
        %1668 = vmatpush.msra.mxu0 0.0
        %1669 = vmatpush.msra.mxu0 0.0
        %1670 = vmatpush.msra.mxu0 0.0
        %1671 = vmatpush.msra.mxu0 0.0
        %1672 = vmatpush.msra.mxu0 0.0
        %1673 = vmatpush.msra.mxu0 0.0
        %1674 = vmatpush.msra.mxu0 %v1657
        %1675 = vmatmul.f32.gmra.mxu0 %v1654
        %v1676 = vpop.f32.mrf.mxu0
        %v1677 = vadd.f32 0.0, %v1676
        %1678 = vdwg.mxu0
        %v1680 = vsel %vm1268, %v1623, 0
        %v1683 = vsel %vm1272, %v1625, 0
        %1685 = vmatpush.msra.mxu0 0.0
        %1686 = vmatpush.msra.mxu0 0.0
        %1687 = vmatpush.msra.mxu0 0.0
        %1688 = vmatpush.msra.mxu0 0.0
        %1689 = vmatpush.msra.mxu0 0.0
        %1690 = vmatpush.msra.mxu0 0.0
        %1691 = vmatpush.msra.mxu0 0.0
        %1692 = vmatpush.msra.mxu0 0.0
        %1693 = vmatpush.msra.mxu0 0.0
        %1694 = vmatpush.msra.mxu0 0.0
        %1695 = vmatpush.msra.mxu0 0.0
        %1696 = vmatpush.msra.mxu0 0.0
        %1697 = vmatpush.msra.mxu0 0.0
        %1698 = vmatpush.msra.mxu0 0.0
        %1699 = vmatpush.msra.mxu0 0.0
        %1700 = vmatpush.msra.mxu0 %v1683
        %1701 = vmatmul.f32.gmra.mxu0 %v1680
        %v1702 = vpop.f32.mrf.mxu0
        %v1703 = vadd.f32 %v1677, %v1702
        %1704 = vdwg.mxu0
        %s1705 = scalar_lea.vmem %s9, 8
        %v1706 = vld [vmem:[%s1705] sm:$0xf]
        %v1708 = vsel %vm1268, %v1706, 0
        %1710 = vmatpush.msra.mxu0 0.0
        %1711 = vmatpush.msra.mxu0 0.0
        %1712 = vmatpush.msra.mxu0 0.0
        %1713 = vmatpush.msra.mxu0 0.0
        %1714 = vmatpush.msra.mxu0 0.0
        %1715 = vmatpush.msra.mxu0 0.0
        %1716 = vmatpush.msra.mxu0 0.0
        %1717 = vmatpush.msra.mxu0 0.0
        %1718 = vmatpush.msra.mxu0 0.0
        %1719 = vmatpush.msra.mxu0 0.0
        %1720 = vmatpush.msra.mxu0 0.0
        %1721 = vmatpush.msra.mxu0 0.0
        %1722 = vmatpush.msra.mxu0 0.0
        %1723 = vmatpush.msra.mxu0 0.0
        %1724 = vmatpush.msra.mxu0 0.0
        %1725 = vmatpush.msra.mxu0 %v1274
        %1726 = vmatmul.f32.gmra.mxu0 %v1708
        %v1727 = vpop.f32.mrf.mxu0
        %v1728 = vadd.f32 0.0, %v1727
        %1729 = vdwg.mxu0
        %s1730 = scalar_lea.vmem %s10, 8
        %v1731 = vld [vmem:[%s1730] sm:$0xf]
        %v1733 = vsel %vm1268, %v1728, 0
        %v1736 = vsel %vm1272, %v1731, 0
        %1738 = vmatpush.msra.mxu0 0.0
        %1739 = vmatpush.msra.mxu0 0.0
        %1740 = vmatpush.msra.mxu0 0.0
        %1741 = vmatpush.msra.mxu0 0.0
        %1742 = vmatpush.msra.mxu0 0.0
        %1743 = vmatpush.msra.mxu0 0.0
        %1744 = vmatpush.msra.mxu0 0.0
        %1745 = vmatpush.msra.mxu0 0.0
        %1746 = vmatpush.msra.mxu0 0.0
        %1747 = vmatpush.msra.mxu0 0.0
        %1748 = vmatpush.msra.mxu0 0.0
        %1749 = vmatpush.msra.mxu0 0.0
        %1750 = vmatpush.msra.mxu0 0.0
        %1751 = vmatpush.msra.mxu0 0.0
        %1752 = vmatpush.msra.mxu0 0.0
        %1753 = vmatpush.msra.mxu0 %v1736
        %1754 = vmatmul.f32.gmra.mxu0 %v1733
        %v1755 = vpop.f32.mrf.mxu0
        %v1756 = vadd.f32 0.0, %v1755
        %1757 = vdwg.mxu0
        %v1758 = vadd.f32 %v1703, %v1756
        %s1759 = scalar_lea.vmem %s9, 12
        %v1760 = vld [vmem:[%s1759] sm:$0xf]
        %v1762 = vsel %vm1268, %v1760, 0
        %1764 = vmatpush.msra.mxu0 0.0
        %1765 = vmatpush.msra.mxu0 0.0
        %1766 = vmatpush.msra.mxu0 0.0
        %1767 = vmatpush.msra.mxu0 0.0
        %1768 = vmatpush.msra.mxu0 0.0
        %1769 = vmatpush.msra.mxu0 0.0
        %1770 = vmatpush.msra.mxu0 0.0
        %1771 = vmatpush.msra.mxu0 0.0
        %1772 = vmatpush.msra.mxu0 0.0
        %1773 = vmatpush.msra.mxu0 0.0
        %1774 = vmatpush.msra.mxu0 0.0
        %1775 = vmatpush.msra.mxu0 0.0
        %1776 = vmatpush.msra.mxu0 0.0
        %1777 = vmatpush.msra.mxu0 0.0
        %1778 = vmatpush.msra.mxu0 0.0
        %1779 = vmatpush.msra.mxu0 %v1274
        %1780 = vmatmul.f32.gmra.mxu0 %v1762
        %v1781 = vpop.f32.mrf.mxu0
        %v1782 = vadd.f32 0.0, %v1781
        %1783 = vdwg.mxu0
        %s1784 = scalar_lea.vmem %s10, 12
        %v1785 = vld [vmem:[%s1784] sm:$0xf]
        %v1787 = vsel %vm1268, %v1782, 0
        %v1790 = vsel %vm1272, %v1785, 0
        %1792 = vmatpush.msra.mxu0 0.0
        %1793 = vmatpush.msra.mxu0 0.0
        %1794 = vmatpush.msra.mxu0 0.0
        %1795 = vmatpush.msra.mxu0 0.0
        %1796 = vmatpush.msra.mxu0 0.0
        %1797 = vmatpush.msra.mxu0 0.0
        %1798 = vmatpush.msra.mxu0 0.0
        %1799 = vmatpush.msra.mxu0 0.0
        %1800 = vmatpush.msra.mxu0 0.0
        %1801 = vmatpush.msra.mxu0 0.0
        %1802 = vmatpush.msra.mxu0 0.0
        %1803 = vmatpush.msra.mxu0 0.0
        %1804 = vmatpush.msra.mxu0 0.0
        %1805 = vmatpush.msra.mxu0 0.0
        %1806 = vmatpush.msra.mxu0 0.0
        %1807 = vmatpush.msra.mxu0 %v1790
        %1808 = vmatmul.f32.gmra.mxu0 %v1787
        %v1809 = vpop.f32.mrf.mxu0
        %v1810 = vadd.f32 0.0, %v1809
        %1811 = vdwg.mxu0
        %v1812 = vadd.f32 %v1758, %v1810
        %s1813 = scalar_lea.vmem %s9, 16
        %v1814 = vld [vmem:[%s1813] sm:$0xf]
        %v1816 = vsel %vm1268, %v1814, 0
        %1818 = vmatpush.msra.mxu0 0.0
        %1819 = vmatpush.msra.mxu0 0.0
        %1820 = vmatpush.msra.mxu0 0.0
        %1821 = vmatpush.msra.mxu0 0.0
        %1822 = vmatpush.msra.mxu0 0.0
        %1823 = vmatpush.msra.mxu0 0.0
        %1824 = vmatpush.msra.mxu0 0.0
        %1825 = vmatpush.msra.mxu0 0.0
        %1826 = vmatpush.msra.mxu0 0.0
        %1827 = vmatpush.msra.mxu0 0.0
        %1828 = vmatpush.msra.mxu0 0.0
        %1829 = vmatpush.msra.mxu0 0.0
        %1830 = vmatpush.msra.mxu0 0.0
        %1831 = vmatpush.msra.mxu0 0.0
        %1832 = vmatpush.msra.mxu0 0.0
        %1833 = vmatpush.msra.mxu0 %v1274
        %1834 = vmatmul.f32.gmra.mxu0 %v1816
        %v1835 = vpop.f32.mrf.mxu0
        %v1836 = vadd.f32 0.0, %v1835
        %1837 = vdwg.mxu0
        %s1838 = scalar_lea.vmem %s10, 16
        %v1839 = vld [vmem:[%s1838] sm:$0xf]
        %v1841 = vsel %vm1268, %v1836, 0
        %v1844 = vsel %vm1272, %v1839, 0
        %1846 = vmatpush.msra.mxu0 0.0
        %1847 = vmatpush.msra.mxu0 0.0
        %1848 = vmatpush.msra.mxu0 0.0
        %1849 = vmatpush.msra.mxu0 0.0
        %1850 = vmatpush.msra.mxu0 0.0
        %1851 = vmatpush.msra.mxu0 0.0
        %1852 = vmatpush.msra.mxu0 0.0
        %1853 = vmatpush.msra.mxu0 0.0
        %1854 = vmatpush.msra.mxu0 0.0
        %1855 = vmatpush.msra.mxu0 0.0
        %1856 = vmatpush.msra.mxu0 0.0
        %1857 = vmatpush.msra.mxu0 0.0
        %1858 = vmatpush.msra.mxu0 0.0
        %1859 = vmatpush.msra.mxu0 0.0
        %1860 = vmatpush.msra.mxu0 0.0
        %1861 = vmatpush.msra.mxu0 %v1844
        %1862 = vmatmul.f32.gmra.mxu0 %v1841
        %v1863 = vpop.f32.mrf.mxu0
        %v1864 = vadd.f32 0.0, %v1863
        %1865 = vdwg.mxu0
        %v1866 = vadd.f32 %v1812, %v1864
        %v1867 = vstv %s1600
        %v1868 = vadd.f32 %v1866, %v1867
        %v1869 = vmax.f32 %v1868, 0.0
        %v1870 = vld [vmem:[%s13] sm:$0xf]
        %v1872 = vsel %vm1435, %v1870, 0
        %v1875 = vsel %vm1439, %v1599, 0
        %1877 = vmatpush.msra.mxu0 0.0
        %1878 = vmatpush.msra.mxu0 0.0
        %1879 = vmatpush.msra.mxu0 0.0
        %1880 = vmatpush.msra.mxu0 0.0
        %1881 = vmatpush.msra.mxu0 0.0
        %1882 = vmatpush.msra.mxu0 0.0
        %1883 = vmatpush.msra.mxu0 0.0
        %1884 = vmatpush.msra.mxu0 0.0
        %1885 = vmatpush.msra.mxu0 0.0
        %1886 = vmatpush.msra.mxu0 0.0
        %1887 = vmatpush.msra.mxu0 0.0
        %1888 = vmatpush.msra.mxu0 0.0
        %1889 = vmatpush.msra.mxu0 0.0
        %1890 = vmatpush.msra.mxu0 0.0
        %1891 = vmatpush.msra.mxu0 0.0
        %1892 = vmatpush.msra.mxu0 %v1875
        %1893 = vmatmul.f32.gmra.mxu0 %v1872
        %v1894 = vpop.f32.mrf.mxu0
        %v1895 = vadd.f32 0.0, %v1894
        %1896 = vdwg.mxu0
        %v1897 = vld [vmem:[%s14] sm:$0x3]
        %v1899 = vsel %vm1435, %v1895, 0
        %v1902 = vsel %vm1439, %v1897, 0
        %1904 = vmatpush.msra.mxu0 0.0
        %1905 = vmatpush.msra.mxu0 0.0
        %1906 = vmatpush.msra.mxu0 0.0
        %1907 = vmatpush.msra.mxu0 0.0
        %1908 = vmatpush.msra.mxu0 0.0
        %1909 = vmatpush.msra.mxu0 0.0
        %1910 = vmatpush.msra.mxu0 0.0
        %1911 = vmatpush.msra.mxu0 0.0
        %1912 = vmatpush.msra.mxu0 0.0
        %1913 = vmatpush.msra.mxu0 0.0
        %1914 = vmatpush.msra.mxu0 0.0
        %1915 = vmatpush.msra.mxu0 0.0
        %1916 = vmatpush.msra.mxu0 0.0
        %1917 = vmatpush.msra.mxu0 0.0
        %1918 = vmatpush.msra.mxu0 0.0
        %1919 = vmatpush.msra.mxu0 %v1902
        %1920 = vmatmul.f32.gmra.mxu0 %v1899
        %v1921 = vpop.f32.mrf.mxu0
        %v1922 = vadd.f32 0.0, %v1921
        %1923 = vdwg.mxu0
        %v1924 = vadd.f32 %v1869, %v1922
        %v1925 = vld [vmem:[%s15] sm:$0xff]
        %v1927 = vsel %vm1268, %v1925, 0
        %v1930 = vsel %vm1272, %v1924, 0
        %1932 = vmatpush.msra.mxu0 0.0
        %1933 = vmatpush.msra.mxu0 0.0
        %1934 = vmatpush.msra.mxu0 0.0
        %1935 = vmatpush.msra.mxu0 0.0
        %1936 = vmatpush.msra.mxu0 0.0
        %1937 = vmatpush.msra.mxu0 0.0
        %1938 = vmatpush.msra.mxu0 0.0
        %1939 = vmatpush.msra.mxu0 0.0
        %1940 = vmatpush.msra.mxu0 0.0
        %1941 = vmatpush.msra.mxu0 0.0
        %1942 = vmatpush.msra.mxu0 0.0
        %1943 = vmatpush.msra.mxu0 0.0
        %1944 = vmatpush.msra.mxu0 0.0
        %1945 = vmatpush.msra.mxu0 0.0
        %1946 = vmatpush.msra.mxu0 0.0
        %1947 = vmatpush.msra.mxu0 %v1930
        %1948 = vmatmul.f32.gmra.mxu0 %v1927
        %v1949 = vpop.f32.mrf.mxu0
        %v1950 = vadd.f32 0.0, %v1949
        %1951 = vdwg.mxu0
        %v1952 = vld [vmem:[%s16] sm:$0xf]
        %s1953 = sld [smem:[#allocation2 + $0x5]]
        %v1954 = vld [vmem:[%s11] sm:$0xff]
        %v1956 = vsel %vm1012, %v1954, 0
        %1958 = vmatpush.msra.mxu0 0.0
        %1959 = vmatpush.msra.mxu0 0.0
        %1960 = vmatpush.msra.mxu0 0.0
        %1961 = vmatpush.msra.mxu0 0.0
        %1962 = vmatpush.msra.mxu0 0.0
        %1963 = vmatpush.msra.mxu0 0.0
        %1964 = vmatpush.msra.mxu0 0.0
        %1965 = vmatpush.msra.mxu0 0.0
        %1966 = vmatpush.msra.mxu0 0.0
        %1967 = vmatpush.msra.mxu0 0.0
        %1968 = vmatpush.msra.mxu0 0.0
        %1969 = vmatpush.msra.mxu0 0.0
        %1970 = vmatpush.msra.mxu0 0.0
        %1971 = vmatpush.msra.mxu0 0.0
        %1972 = vmatpush.msra.mxu0 0.0
        %1973 = vmatpush.msra.mxu0 %v1009
        %1974 = vmatmul.f32.gmra.mxu0 %v1956
        %v1975 = vpop.f32.mrf.mxu0
        %v1976 = vadd.f32 0.0, %v1975
        %1977 = vdwg.mxu0
        %v1978 = vld [vmem:[%s12] sm:$0xff]
        %s1979 = scalar_lea.vmem %s11, 8
        %v1980 = vld [vmem:[%s1979] sm:$0xff]
        %v1982 = vsel %vm1012, %v1980, 0
        %1984 = vmatpush.msra.mxu0 0.0
        %1985 = vmatpush.msra.mxu0 0.0
        %1986 = vmatpush.msra.mxu0 0.0
        %1987 = vmatpush.msra.mxu0 0.0
        %1988 = vmatpush.msra.mxu0 0.0
        %1989 = vmatpush.msra.mxu0 0.0
        %1990 = vmatpush.msra.mxu0 0.0
        %1991 = vmatpush.msra.mxu0 0.0
        %1992 = vmatpush.msra.mxu0 0.0
        %1993 = vmatpush.msra.mxu0 0.0
        %1994 = vmatpush.msra.mxu0 0.0
        %1995 = vmatpush.msra.mxu0 0.0
        %1996 = vmatpush.msra.mxu0 0.0
        %1997 = vmatpush.msra.mxu0 0.0
        %1998 = vmatpush.msra.mxu0 0.0
        %1999 = vmatpush.msra.mxu0 %v1009
        %2000 = vmatmul.f32.gmra.mxu0 %v1982
        %v2001 = vpop.f32.mrf.mxu0
        %v2002 = vadd.f32 0.0, %v2001
        %2003 = vdwg.mxu0
        %s2004 = scalar_lea.vmem %s12, 8
        %v2005 = vld [vmem:[%s2004] sm:$0xff]
        %v2007 = vsel %vm1012, %v2002, 0
        %2009 = vmatpush.msra.mxu0 0.0
        %2010 = vmatpush.msra.mxu0 0.0
        %2011 = vmatpush.msra.mxu0 0.0
        %2012 = vmatpush.msra.mxu0 0.0
        %2013 = vmatpush.msra.mxu0 0.0
        %2014 = vmatpush.msra.mxu0 0.0
        %2015 = vmatpush.msra.mxu0 0.0
        %2016 = vmatpush.msra.mxu0 0.0
        %2017 = vmatpush.msra.mxu0 0.0
        %2018 = vmatpush.msra.mxu0 0.0
        %2019 = vmatpush.msra.mxu0 0.0
        %2020 = vmatpush.msra.mxu0 0.0
        %2021 = vmatpush.msra.mxu0 0.0
        %2022 = vmatpush.msra.mxu0 0.0
        %2023 = vmatpush.msra.mxu0 0.0
        %2024 = vmatpush.msra.mxu0 %v2005
        %2025 = vmatmul.f32.gmra.mxu0 %v2007
        %v2026 = vpop.f32.mrf.mxu0
        %v2027 = vadd.f32 0.0, %v2026
        %2028 = vdwg.mxu0
        %v2030 = vsel %vm1012, %v1976, 0
        %2032 = vmatpush.msra.mxu0 0.0
        %2033 = vmatpush.msra.mxu0 0.0
        %2034 = vmatpush.msra.mxu0 0.0
        %2035 = vmatpush.msra.mxu0 0.0
        %2036 = vmatpush.msra.mxu0 0.0
        %2037 = vmatpush.msra.mxu0 0.0
        %2038 = vmatpush.msra.mxu0 0.0
        %2039 = vmatpush.msra.mxu0 0.0
        %2040 = vmatpush.msra.mxu0 0.0
        %2041 = vmatpush.msra.mxu0 0.0
        %2042 = vmatpush.msra.mxu0 0.0
        %2043 = vmatpush.msra.mxu0 0.0
        %2044 = vmatpush.msra.mxu0 0.0
        %2045 = vmatpush.msra.mxu0 0.0
        %2046 = vmatpush.msra.mxu0 0.0
        %2047 = vmatpush.msra.mxu0 %v1978
        %2048 = vmatmul.f32.gmra.mxu0 %v2030
        %v2049 = vpop.f32.mrf.mxu0
        %v2050 = vadd.f32 %v2027, %v2049
        %2051 = vdwg.mxu0
        %s2052 = scalar_lea.vmem %s11, 16
        %v2053 = vld [vmem:[%s2052] sm:$0xff]
        %v2055 = vsel %vm1012, %v2053, 0
        %2057 = vmatpush.msra.mxu0 0.0
        %2058 = vmatpush.msra.mxu0 0.0
        %2059 = vmatpush.msra.mxu0 0.0
        %2060 = vmatpush.msra.mxu0 0.0
        %2061 = vmatpush.msra.mxu0 0.0
        %2062 = vmatpush.msra.mxu0 0.0
        %2063 = vmatpush.msra.mxu0 0.0
        %2064 = vmatpush.msra.mxu0 0.0
        %2065 = vmatpush.msra.mxu0 0.0
        %2066 = vmatpush.msra.mxu0 0.0
        %2067 = vmatpush.msra.mxu0 0.0
        %2068 = vmatpush.msra.mxu0 0.0
        %2069 = vmatpush.msra.mxu0 0.0
        %2070 = vmatpush.msra.mxu0 0.0
        %2071 = vmatpush.msra.mxu0 0.0
        %2072 = vmatpush.msra.mxu0 %v1009
        %2073 = vmatmul.f32.gmra.mxu0 %v2055
        %v2074 = vpop.f32.mrf.mxu0
        %v2075 = vadd.f32 0.0, %v2074
        %2076 = vdwg.mxu0
        %s2077 = scalar_lea.vmem %s12, 16
        %v2078 = vld [vmem:[%s2077] sm:$0xff]
        %v2080 = vsel %vm1012, %v2075, 0
        %2082 = vmatpush.msra.mxu0 0.0
        %2083 = vmatpush.msra.mxu0 0.0
        %2084 = vmatpush.msra.mxu0 0.0
        %2085 = vmatpush.msra.mxu0 0.0
        %2086 = vmatpush.msra.mxu0 0.0
        %2087 = vmatpush.msra.mxu0 0.0
        %2088 = vmatpush.msra.mxu0 0.0
        %2089 = vmatpush.msra.mxu0 0.0
        %2090 = vmatpush.msra.mxu0 0.0
        %2091 = vmatpush.msra.mxu0 0.0
        %2092 = vmatpush.msra.mxu0 0.0
        %2093 = vmatpush.msra.mxu0 0.0
        %2094 = vmatpush.msra.mxu0 0.0
        %2095 = vmatpush.msra.mxu0 0.0
        %2096 = vmatpush.msra.mxu0 0.0
        %2097 = vmatpush.msra.mxu0 %v2078
        %2098 = vmatmul.f32.gmra.mxu0 %v2080
        %v2099 = vpop.f32.mrf.mxu0
        %v2100 = vadd.f32 0.0, %v2099
        %2101 = vdwg.mxu0
        %v2102 = vadd.f32 %v2050, %v2100
        %s2103 = scalar_lea.vmem %s11, 24
        %v2104 = vld [vmem:[%s2103] sm:$0xff]
        %v2106 = vsel %vm1012, %v2104, 0
        %2108 = vmatpush.msra.mxu0 0.0
        %2109 = vmatpush.msra.mxu0 0.0
        %2110 = vmatpush.msra.mxu0 0.0
        %2111 = vmatpush.msra.mxu0 0.0
        %2112 = vmatpush.msra.mxu0 0.0
        %2113 = vmatpush.msra.mxu0 0.0
        %2114 = vmatpush.msra.mxu0 0.0
        %2115 = vmatpush.msra.mxu0 0.0
        %2116 = vmatpush.msra.mxu0 0.0
        %2117 = vmatpush.msra.mxu0 0.0
        %2118 = vmatpush.msra.mxu0 0.0
        %2119 = vmatpush.msra.mxu0 0.0
        %2120 = vmatpush.msra.mxu0 0.0
        %2121 = vmatpush.msra.mxu0 0.0
        %2122 = vmatpush.msra.mxu0 0.0
        %2123 = vmatpush.msra.mxu0 %v1009
        %2124 = vmatmul.f32.gmra.mxu0 %v2106
        %v2125 = vpop.f32.mrf.mxu0
        %v2126 = vadd.f32 0.0, %v2125
        %2127 = vdwg.mxu0
        %s2128 = scalar_lea.vmem %s12, 24
        %v2129 = vld [vmem:[%s2128] sm:$0xff]
        %v2131 = vsel %vm1012, %v2126, 0
        %2133 = vmatpush.msra.mxu0 0.0
        %2134 = vmatpush.msra.mxu0 0.0
        %2135 = vmatpush.msra.mxu0 0.0
        %2136 = vmatpush.msra.mxu0 0.0
        %2137 = vmatpush.msra.mxu0 0.0
        %2138 = vmatpush.msra.mxu0 0.0
        %2139 = vmatpush.msra.mxu0 0.0
        %2140 = vmatpush.msra.mxu0 0.0
        %2141 = vmatpush.msra.mxu0 0.0
        %2142 = vmatpush.msra.mxu0 0.0
        %2143 = vmatpush.msra.mxu0 0.0
        %2144 = vmatpush.msra.mxu0 0.0
        %2145 = vmatpush.msra.mxu0 0.0
        %2146 = vmatpush.msra.mxu0 0.0
        %2147 = vmatpush.msra.mxu0 0.0
        %2148 = vmatpush.msra.mxu0 %v2129
        %2149 = vmatmul.f32.gmra.mxu0 %v2131
        %v2150 = vpop.f32.mrf.mxu0
        %v2151 = vadd.f32 0.0, %v2150
        %2152 = vdwg.mxu0
        %v2153 = vadd.f32 %v2102, %v2151
        %s2154 = scalar_lea.vmem %s11, 32
        %v2155 = vld [vmem:[%s2154] sm:$0xff]
        %v2157 = vsel %vm1012, %v2155, 0
        %2159 = vmatpush.msra.mxu0 0.0
        %2160 = vmatpush.msra.mxu0 0.0
        %2161 = vmatpush.msra.mxu0 0.0
        %2162 = vmatpush.msra.mxu0 0.0
        %2163 = vmatpush.msra.mxu0 0.0
        %2164 = vmatpush.msra.mxu0 0.0
        %2165 = vmatpush.msra.mxu0 0.0
        %2166 = vmatpush.msra.mxu0 0.0
        %2167 = vmatpush.msra.mxu0 0.0
        %2168 = vmatpush.msra.mxu0 0.0
        %2169 = vmatpush.msra.mxu0 0.0
        %2170 = vmatpush.msra.mxu0 0.0
        %2171 = vmatpush.msra.mxu0 0.0
        %2172 = vmatpush.msra.mxu0 0.0
        %2173 = vmatpush.msra.mxu0 0.0
        %2174 = vmatpush.msra.mxu0 %v1009
        %2175 = vmatmul.f32.gmra.mxu0 %v2157
        %v2176 = vpop.f32.mrf.mxu0
        %v2177 = vadd.f32 0.0, %v2176
        %2178 = vdwg.mxu0
        %s2179 = scalar_lea.vmem %s12, 32
        %v2180 = vld [vmem:[%s2179] sm:$0xff]
        %v2182 = vsel %vm1012, %v2177, 0
        %2184 = vmatpush.msra.mxu0 0.0
        %2185 = vmatpush.msra.mxu0 0.0
        %2186 = vmatpush.msra.mxu0 0.0
        %2187 = vmatpush.msra.mxu0 0.0
        %2188 = vmatpush.msra.mxu0 0.0
        %2189 = vmatpush.msra.mxu0 0.0
        %2190 = vmatpush.msra.mxu0 0.0
        %2191 = vmatpush.msra.mxu0 0.0
        %2192 = vmatpush.msra.mxu0 0.0
        %2193 = vmatpush.msra.mxu0 0.0
        %2194 = vmatpush.msra.mxu0 0.0
        %2195 = vmatpush.msra.mxu0 0.0
        %2196 = vmatpush.msra.mxu0 0.0
        %2197 = vmatpush.msra.mxu0 0.0
        %2198 = vmatpush.msra.mxu0 0.0
        %2199 = vmatpush.msra.mxu0 %v2180
        %2200 = vmatmul.f32.gmra.mxu0 %v2182
        %v2201 = vpop.f32.mrf.mxu0
        %v2202 = vadd.f32 0.0, %v2201
        %2203 = vdwg.mxu0
        %v2204 = vadd.f32 %v2153, %v2202
        %s2205 = scalar_lea.vmem %s11, 40
        %v2206 = vld [vmem:[%s2205] sm:$0xff]
        %v2208 = vsel %vm1012, %v2206, 0
        %2210 = vmatpush.msra.mxu0 0.0
        %2211 = vmatpush.msra.mxu0 0.0
        %2212 = vmatpush.msra.mxu0 0.0
        %2213 = vmatpush.msra.mxu0 0.0
        %2214 = vmatpush.msra.mxu0 0.0
        %2215 = vmatpush.msra.mxu0 0.0
        %2216 = vmatpush.msra.mxu0 0.0
        %2217 = vmatpush.msra.mxu0 0.0
        %2218 = vmatpush.msra.mxu0 0.0
        %2219 = vmatpush.msra.mxu0 0.0
        %2220 = vmatpush.msra.mxu0 0.0
        %2221 = vmatpush.msra.mxu0 0.0
        %2222 = vmatpush.msra.mxu0 0.0
        %2223 = vmatpush.msra.mxu0 0.0
        %2224 = vmatpush.msra.mxu0 0.0
        %2225 = vmatpush.msra.mxu0 %v1009
        %2226 = vmatmul.f32.gmra.mxu0 %v2208
        %v2227 = vpop.f32.mrf.mxu0
        %v2228 = vadd.f32 0.0, %v2227
        %2229 = vdwg.mxu0
        %s2230 = scalar_lea.vmem %s12, 40
        %v2231 = vld [vmem:[%s2230] sm:$0xff]
        %v2233 = vsel %vm1012, %v2228, 0
        %2235 = vmatpush.msra.mxu0 0.0
        %2236 = vmatpush.msra.mxu0 0.0
        %2237 = vmatpush.msra.mxu0 0.0
        %2238 = vmatpush.msra.mxu0 0.0
        %2239 = vmatpush.msra.mxu0 0.0
        %2240 = vmatpush.msra.mxu0 0.0
        %2241 = vmatpush.msra.mxu0 0.0
        %2242 = vmatpush.msra.mxu0 0.0
        %2243 = vmatpush.msra.mxu0 0.0
        %2244 = vmatpush.msra.mxu0 0.0
        %2245 = vmatpush.msra.mxu0 0.0
        %2246 = vmatpush.msra.mxu0 0.0
        %2247 = vmatpush.msra.mxu0 0.0
        %2248 = vmatpush.msra.mxu0 0.0
        %2249 = vmatpush.msra.mxu0 0.0
        %2250 = vmatpush.msra.mxu0 %v2231
        %2251 = vmatmul.f32.gmra.mxu0 %v2233
        %v2252 = vpop.f32.mrf.mxu0
        %v2253 = vadd.f32 0.0, %v2252
        %2254 = vdwg.mxu0
        %v2255 = vadd.f32 %v2204, %v2253
        %s2256 = scalar_lea.vmem %s11, 48
        %v2257 = vld [vmem:[%s2256] sm:$0xff]
        %v2259 = vsel %vm1012, %v2257, 0
        %2261 = vmatpush.msra.mxu0 0.0
        %2262 = vmatpush.msra.mxu0 0.0
        %2263 = vmatpush.msra.mxu0 0.0
        %2264 = vmatpush.msra.mxu0 0.0
        %2265 = vmatpush.msra.mxu0 0.0
        %2266 = vmatpush.msra.mxu0 0.0
        %2267 = vmatpush.msra.mxu0 0.0
        %2268 = vmatpush.msra.mxu0 0.0
        %2269 = vmatpush.msra.mxu0 0.0
        %2270 = vmatpush.msra.mxu0 0.0
        %2271 = vmatpush.msra.mxu0 0.0
        %2272 = vmatpush.msra.mxu0 0.0
        %2273 = vmatpush.msra.mxu0 0.0
        %2274 = vmatpush.msra.mxu0 0.0
        %2275 = vmatpush.msra.mxu0 0.0
        %2276 = vmatpush.msra.mxu0 %v1009
        %2277 = vmatmul.f32.gmra.mxu0 %v2259
        %v2278 = vpop.f32.mrf.mxu0
        %v2279 = vadd.f32 0.0, %v2278
        %2280 = vdwg.mxu0
        %s2281 = scalar_lea.vmem %s12, 48
        %v2282 = vld [vmem:[%s2281] sm:$0xff]
        %v2284 = vsel %vm1012, %v2279, 0
        %2286 = vmatpush.msra.mxu0 0.0
        %2287 = vmatpush.msra.mxu0 0.0
        %2288 = vmatpush.msra.mxu0 0.0
        %2289 = vmatpush.msra.mxu0 0.0
        %2290 = vmatpush.msra.mxu0 0.0
        %2291 = vmatpush.msra.mxu0 0.0
        %2292 = vmatpush.msra.mxu0 0.0
        %2293 = vmatpush.msra.mxu0 0.0
        %2294 = vmatpush.msra.mxu0 0.0
        %2295 = vmatpush.msra.mxu0 0.0
        %2296 = vmatpush.msra.mxu0 0.0
        %2297 = vmatpush.msra.mxu0 0.0
        %2298 = vmatpush.msra.mxu0 0.0
        %2299 = vmatpush.msra.mxu0 0.0
        %2300 = vmatpush.msra.mxu0 0.0
        %2301 = vmatpush.msra.mxu0 %v2282
        %2302 = vmatmul.f32.gmra.mxu0 %v2284
        %v2303 = vpop.f32.mrf.mxu0
        %v2304 = vadd.f32 0.0, %v2303
        %2305 = vdwg.mxu0
        %v2306 = vadd.f32 %v2255, %v2304
        %v2307 = vstv %s1953
        %v2308 = vadd.f32 %v2306, %v2307
        %v2309 = vmax.f32 %v2308, 0.0
        %v2311 = vsel %vm1268, %v1950, 0
        %v2314 = vsel %vm1272, %v1952, 0
        %2316 = vmatpush.msra.mxu0 0.0
        %2317 = vmatpush.msra.mxu0 0.0
        %2318 = vmatpush.msra.mxu0 0.0
        %2319 = vmatpush.msra.mxu0 0.0
        %2320 = vmatpush.msra.mxu0 0.0
        %2321 = vmatpush.msra.mxu0 0.0
        %2322 = vmatpush.msra.mxu0 0.0
        %2323 = vmatpush.msra.mxu0 0.0
        %2324 = vmatpush.msra.mxu0 0.0
        %2325 = vmatpush.msra.mxu0 0.0
        %2326 = vmatpush.msra.mxu0 0.0
        %2327 = vmatpush.msra.mxu0 0.0
        %2328 = vmatpush.msra.mxu0 0.0
        %2329 = vmatpush.msra.mxu0 0.0
        %2330 = vmatpush.msra.mxu0 0.0
        %2331 = vmatpush.msra.mxu0 %v2314
        %2332 = vmatmul.f32.gmra.mxu0 %v2311
        %v2333 = vpop.f32.mrf.mxu0
        %v2334 = vadd.f32 %v2309, %v2333
        %2335 = vdwg.mxu0
        %v2336 = vld [vmem:[%s17] sm:$0xff]
        %v2337 = vld [vmem:[%s17 + $0x8] sm:$0xff]
        %v2339 = vsel %vm1012, %v2336, 0
        %v2342 = vsel %vm1012, %v2337, 0
        %2344 = vmatpush.msra.mxu0 0.0
        %2345 = vmatpush.msra.mxu0 0.0
        %2346 = vmatpush.msra.mxu0 0.0
        %2347 = vmatpush.msra.mxu0 0.0
        %2348 = vmatpush.msra.mxu0 0.0
        %2349 = vmatpush.msra.mxu0 0.0
        %2350 = vmatpush.msra.mxu0 0.0
        %2351 = vmatpush.msra.mxu0 0.0
        %2352 = vmatpush.msra.mxu0 0.0
        %2353 = vmatpush.msra.mxu0 0.0
        %2354 = vmatpush.msra.mxu0 0.0
        %2355 = vmatpush.msra.mxu0 0.0
        %2356 = vmatpush.msra.mxu0 0.0
        %2357 = vmatpush.msra.mxu0 0.0
        %2358 = vmatpush.msra.mxu0 0.0
        %2359 = vmatpush.msra.mxu0 %v2334
        %2360 = vmatmul.f32.gmra.mxu0 %v2339
        %v2361 = vpop.f32.mrf.mxu0
        %v2362 = vadd.f32 0.0, %v2361
        %2363 = vmatmul.f32.gmra.mxu0 %v2342
        %v2364 = vpop.f32.mrf.mxu0
        %v2365 = vadd.f32 0.0, %v2364
        %2366 = vdwg.mxu0
        %v2367 = vld [vmem:[%s18] sm:$0xff]
        %v2369 = vsel %vm1012, %v2362, 0
        %v2372 = vsel %vm1012, %v2365, 0
        %2374 = vmatpush.msra.mxu0 0.0
        %2375 = vmatpush.msra.mxu0 0.0
        %2376 = vmatpush.msra.mxu0 0.0
        %2377 = vmatpush.msra.mxu0 0.0
        %2378 = vmatpush.msra.mxu0 0.0
        %2379 = vmatpush.msra.mxu0 0.0
        %2380 = vmatpush.msra.mxu0 0.0
        %2381 = vmatpush.msra.mxu0 0.0
        %2382 = vmatpush.msra.mxu0 0.0
        %2383 = vmatpush.msra.mxu0 0.0
        %2384 = vmatpush.msra.mxu0 0.0
        %2385 = vmatpush.msra.mxu0 0.0
        %2386 = vmatpush.msra.mxu0 0.0
        %2387 = vmatpush.msra.mxu0 0.0
        %2388 = vmatpush.msra.mxu0 0.0
        %2389 = vmatpush.msra.mxu0 %v2367
        %2390 = vmatmul.f32.gmra.mxu0 %v2369
        %v2391 = vpop.f32.mrf.mxu0
        %v2392 = vadd.f32 0.0, %v2391
        %2393 = vmatmul.f32.gmra.mxu0 %v2372
        %v2394 = vpop.f32.mrf.mxu0
        %v2395 = vadd.f32 0.0, %v2394
        %2396 = vdwg.mxu0
        %2397 = vst.msk [vmem:[%s677] sm:$0xff] %vm690, %v2392
        %2398 = vst.msk [vmem:[%s677 + $0x8] sm:$0xff] %vm690, %v2395
        %p2399 = scmp.lt.s32.totalorder %s34, 1
        %s2400 = scalar_select %p2399, %s34, 1
        %s2401 = smul.addr %s2400, 2
        %s2402 = smul.addr %s2401, 8
        %s2403 = scalar_lea.vmem %s20, %s2402
        %p2404 = scmp.lt.s32.totalorder %s34, 1
        %s2405 = scalar_select %p2404, %s34, 1
        %s2406 = smul.addr %s2405, 4
        %s2407 = scalar_lea.vmem %s21, %s2406
        // Predicated region
        $region105: #{fpa_module2.2} parent=99 // pred_check
          %p2408 = pneg %p477
        $region106: #{fpa_module2.2} parent=99 // pred_check_branch
          %2410 = sbr.rel (%p2408) target = $region108
        $region107: #{fpa_module2.2} parent=99 // pred_region
          _
        $region108: #{fpa_module2.2} parent=99 // pred_fallthru
          _
        // Predicated region
        $region109: #{fpa_module2.2} parent=99 // pred_check
          %p2411 = pneg %p503
        $region110: #{fpa_module2.2} parent=99 // pred_check_branch
          %2413 = sbr.rel (%p2411) target = $region112
        $region111: #{fpa_module2.2} parent=99 // pred_region
          _
        $region112: #{fpa_module2.2} parent=99 // pred_fallthru
          _
      $region100: #{fpa_module2.2} parent=5 // pred_fallthru
        _
      %p2414 = scmp.le.s32.totalorder 2, %s29
      // Predicated region
      $region113: #{fpa_module2.2} parent=5 // pred_check
        %p2415 = pneg %p2414
      $region114: #{fpa_module2.2} parent=5 // pred_check_branch
        %2417 = sbr.rel (%p2415) target = $region116
      $region115: #{fpa_module2.2} parent=5 // pred_region
        %s2418 = ssub.s32 %s29, 2
        // Predicated region
        $region117: #{fpa_module2.2} parent=115 // pred_check
          %p2419 = pneg %p483
        $region118: #{fpa_module2.2} parent=115 // pred_check_branch
          %2421 = sbr.rel (%p2419) target = $region120
        $region119: #{fpa_module2.2} parent=115 // pred_region
          %p2422 = scmp.lt.s32.totalorder %s35, 1
          %s2423 = scalar_select %p2422, %s35, 1
          %s2424 = smul.addr %s2423, 2
          %s2425 = smul.addr %s2424, 8
          %s2426 = scalar_lea.vmem %s20, %s2425
        $region120: #{fpa_module2.2} parent=115 // pred_fallthru
          _
        // Predicated region
        $region121: #{fpa_module2.2} parent=115 // pred_check
          %p2427 = pneg %p509
        $region122: #{fpa_module2.2} parent=115 // pred_check_branch
          %2429 = sbr.rel (%p2427) target = $region124
        $region123: #{fpa_module2.2} parent=115 // pred_region
          %p2430 = scmp.lt.s32.totalorder %s35, 1
          %s2431 = scalar_select %p2430, %s35, 1
          %s2432 = smul.addr %s2431, 4
          %s2433 = scalar_lea.vmem %s21, %s2432
        $region124: #{fpa_module2.2} parent=115 // pred_fallthru
          _
      $region116: #{fpa_module2.2} parent=5 // pred_fallthru
        _
    $region6: #{fpa_module2.2} parent=1 // loop_footer
      %s33 = sadd.s32 1, %s29
    $region7: #{fpa_module2.2} parent=1 // loop_footer_branch
      %28 = sbr.rel target = $region3
    $region8: #{fpa_module2.2} parent=1 // loop_exit
      _
    %2434 = vsyncpa [#allocation3], 1
    %s2435 = scalar_lea.sflag [#allocation3], 1
    %2436 = vsyncpa %s2435, 1

</llo_original>
